<compile_context>
chip_gen: v6e
topology: v6e:2x2x1
jax: 0.10.0
libtpu: 0.0.40
codegen_flags: <defaults>
</compile_context>

<pallas_src>
import numpy as np
import jax
import jax.numpy as jnp
from jax import lax
from jax.experimental import pallas as pl
from jax.experimental.pallas import tpu as pltpu


# ---------------------------------------------------------------------------
# Fused per-layer Pallas kernel
# ---------------------------------------------------------------------------
def _make_layer_kernel(C, B, N, final_layer):
    """Fused HebbianEncoder layer kernel.

    p_ref      : (K1, M) bf16   im2col patches, K1 = Cin*9 + 1 (ones row = bias), M = B*N
    w_ref      : (C, K1) bf16   conv weights with the bias folded in as the last column
    lw_ref     : (C, N, N) f32  lateral weights (old)
    out_ref    : (C, M)  f32    act + lateral, channel-major        [intermediate layer]
                 (B, C*N) f32   flattened act + lateral, row-major  [final layer]
    lw_new_ref : (C, N, N) f32  updated (clamped) lateral weights, aliased onto lw_ref
    """
    scale = 0.001 / C

    def kernel(p_ref, w_ref, lw_ref, out_ref, lw_new_ref):
        # --- conv (+bias folded) as a single MXU matmul, bf16 operands, f32 acc; ReLU f32.
        act = jnp.maximum(
            jnp.dot(w_ref[...], p_ref[...], preferred_element_type=jnp.float32),
            0.0)                                                     # (C, M) f32

        # --- (C, B, N) view of the activation via static lane slices (layout plumbing).
        act3 = jnp.stack([act[:, b * N:(b + 1) * N] for b in range(B)], axis=1)  # (C,B,N)

        # --- Hebbian Gram: ONE contraction of depth C*B (f32 operands: persistent state).
        #     torch: delta = 1e-3 * mean_c sum_b outer(a[b,c,:], a[b,c,:])
        a_cb = act3.reshape(C * B, N)                                # leading-dim merge only
        gram = lax.dot_general(a_cb, a_cb, (((0,), (0,)), ((), ())),
                               preferred_element_type=jnp.float32)   # (N, N) f32
        delta = scale * gram

        # --- lateral-weight update per channel: clamp in f32, write straight to the
        #     aliased output ref; keep only a bf16 copy live for the mixing matmul.
        w_bf = []
        for c in range(C):
            w_c = jnp.clip(lw_ref[c] + delta, -1.0, 1.0)             # (N, N) f32
            lw_new_ref[c] = w_c
            w_bf.append(w_c.astype(jnp.bfloat16))
        w_bf = jnp.stack(w_bf, axis=0)                               # (C, N, N) bf16

        # --- batched lateral mix: (C,B,N) x (C,N,N) -> (C,B,N), bf16 ops, f32 accumulate.
        lat = lax.dot_general(act3.astype(jnp.bfloat16), w_bf,
                              (((2,), (1,)), ((0,), (0,))),
                              preferred_element_type=jnp.float32)    # (C, B, N) f32

        # --- residual add + ONE full-tile lane-dense store.
        if final_layer:
            res = act3 + lat                                         # (C, B, N)
            # flat (B, C*N): column c*N + j of row b is res[c, b, j] (torch view(B, -1))
            out_ref[...] = jnp.concatenate([res[c] for c in range(C)], axis=1)
        else:
            lat_cm = jnp.concatenate([lat[:, b, :] for b in range(B)], axis=1)  # (C, M)
            out_ref[...] = act + lat_cm

    return kernel


# ---------------------------------------------------------------------------
# JAX glue (layout plumbing only; runs fused under jit)
# ---------------------------------------------------------------------------
def _im2col(x_cbhw):
    """(Cin, B, H, W) -> bf16 patches (Cin*9 + 1, B*OH*OW); last row is ones (bias fold)."""
    Cin, B, H, W = x_cbhw.shape
    OH, OW = (H + 1) // 2, (W + 1) // 2
    M = B * OH * OW
    xp = jnp.pad(x_cbhw, ((0, 0), (0, 0), (1, 1), (1, 1)))
    taps = [xp[:, :, kh:kh + 2 * OH:2, kw:kw + 2 * OW:2]             # each (Cin, B, OH, OW)
            for kh in range(3) for kw in range(3)]
    p = jnp.stack(taps, axis=1).reshape(Cin * 9, M)                  # k = cin*9 + kh*3 + kw
    p = jnp.concatenate([p, jnp.ones((1, M), p.dtype)], axis=0)      # ones row -> bias
    return p.astype(jnp.bfloat16)


def hebbian_encoder_forward(x_cbhw, conv_w, conv_b, lateral_w, *, final_layer=False):
    """One HebbianEncoder.forward, channel-major in.

    Returns (out, lw_new); out is (Cout, B, OH, OW) channel-major for intermediate
    layers, or the flat (B, Cout*OH*OW) result for the final layer.  The passed
    lateral_w buffer is aliased onto the updated weights (torch in-place .data).
    """
    Cin, B, H, W = x_cbhw.shape
    Cout = conv_w.shape[0]
    OH, OW = (H + 1) // 2, (W + 1) // 2
    N = OH * OW
    M = B * N
    K1 = Cin * 9 + 1

    patches = _im2col(x_cbhw)                                        # (K1, M) bf16
    w_mat = jnp.concatenate(
        [conv_w.reshape(Cout, Cin * 9), conv_b[:, None]], axis=1,
    ).astype(jnp.bfloat16)                                           # (Cout, K1) bf16

    out_shape = (B, Cout * N) if final_layer else (Cout, M)

    flops = 2 * Cout * K1 * M + 2 * (Cout * B) * N * N + 2 * Cout * B * N * N
    bytes_accessed = (patches.size * 2 + w_mat.size * 2
                      + 2 * Cout * N * N * 4 + int(np.prod(out_shape)) * 4)

    out, lw_new = pl.pallas_call(
        _make_layer_kernel(Cout, B, N, final_layer),
        out_shape=(jax.ShapeDtypeStruct(out_shape, jnp.float32),
                   jax.ShapeDtypeStruct((Cout, N, N), jnp.float32)),
        grid=(1,),
        in_specs=[pl.BlockSpec((K1, M), lambda i: (0, 0)),
                  pl.BlockSpec((Cout, K1), lambda i: (0, 0)),
                  pl.BlockSpec((Cout, N, N), lambda i: (0, 0, 0))],
        out_specs=(pl.BlockSpec(out_shape, lambda i: (0, 0)),
                   pl.BlockSpec((Cout, N, N), lambda i: (0, 0, 0))),
        input_output_aliases={2: 1},        # lateral_w -> updated lateral_w (in-place .data)
        compiler_params=pltpu.CompilerParams(dimension_semantics=("arbitrary",)),
        cost_estimate=pl.CostEstimate(flops=flops, transcendentals=0,
                                      bytes_accessed=bytes_accessed),
    )(patches, w_mat, lateral_w)

    if final_layer:
        return out, lw_new                                           # already (B, Cout*N)
    return out.reshape(Cout, B, OH, OW), lw_new                      # stay channel-major


@jax.jit
def multi_layer_hebbian_forward(x_nchw, params):
    """MultiLayerHebbian.forward: chain encoders; last layer emits the flat output."""
    x = jnp.transpose(x_nchw, (1, 0, 2, 3))                          # (C, B, H, W) once
    new_lateral = []
    n = len(params)
    for i, p in enumerate(params):
        x, lw = hebbian_encoder_forward(x, p["conv_w"], p["conv_b"], p["lateral_w"],
                                        final_layer=(i == n - 1))
        new_lateral.append(lw)                                       # torch: in-place update
    return x, new_lateral                                            # x is (B, C*OH*OW)


# ---------------------------------------------------------------------------
# Pure-numpy reference (mirrors the PyTorch forward exactly, f32)
# ---------------------------------------------------------------------------
def _ref_conv_relu(x, w, b):
    B, Cin, H, W = x.shape
    Cout = w.shape[0]
    OH, OW = (H + 1) // 2, (W + 1) // 2
    xp = np.pad(x, ((0, 0), (0, 0), (1, 1), (1, 1)))
    out = np.zeros((B, Cout, OH, OW), np.float32)
    for kh in range(3):
        for kw in range(3):
            patch = xp[:, :, kh:kh + 2 * OH:2, kw:kw + 2 * OW:2]
            out += np.einsum("bchw,oc->bohw", patch, w[:, :, kh, kw])
    out += b[None, :, None, None]
    return np.maximum(out, 0.0)


def _ref_encoder(x, w, b, lw):
    act = _ref_conv_relu(x, w, b)
    B, C, H, W = act.shape
    af = act.reshape(B, C, -1)
    heb = np.einsum("bni,bnj->nij", af, af)
    delta = 0.001 * heb.mean(axis=0)
    lw_new = np.clip(lw + delta[None, :, :], -1.0, 1.0)
    lateral = np.einsum("bci,cij->bcj", af, lw_new)
    return act + lateral.reshape(B, C, H, W), lw_new


def _ref_multi_layer(x, params):
    lw_list = []
    for p in params:
        x, lw = _ref_encoder(x, p["conv_w"], p["conv_b"], p["lateral_w"])
        lw_list.append(lw)
    return x.reshape(x.shape[0], -1), lw_list


# ---------------------------------------------------------------------------
if __name__ == "__main__":
    # layer_shapes as in MultiLayerHebbian: (in_c, out_c, output spatial of the conv)
    layer_shapes = [(4, 8, (8, 8)), (8, 16, (4, 4))]
    B, H, W = 2, 16, 16

    key = jax.random.PRNGKey(0)
    params = []
    for (in_c, out_c, spatial) in layer_shapes:
        key, k1, k2, k3 = jax.random.split(key, 4)
        N = spatial[0] * spatial[1]
        params.append(dict(
            conv_w=(0.1 * jax.random.normal(k1, (out_c, in_c, 3, 3))).astype(jnp.float32),
            conv_b=(0.05 * jax.random.normal(k2, (out_c,))).astype(jnp.float32),
            # torch inits lateral_weights to zeros; small random values exercise the
            # lateral-mixing / clamp path more thoroughly.
            lateral_w=(0.1 * jax.random.uniform(k3, (out_c, N, N), minval=-1.0, maxval=1.0)
                       ).astype(jnp.float32),
        ))
    key, kx = jax.random.split(key)
    x = jax.random.normal(kx, (B, layer_shapes[0][0], H, W), jnp.float32)

    # snapshot for the reference before running (lateral_w is aliased inside the kernel)
    params_np = [{k: np.asarray(v) for k, v in p.items()} for p in params]
    x_np = np.asarray(x)

    out, new_lw = multi_layer_hebbian_forward(x, params)
    out, new_lw = jax.block_until_ready((out, new_lw))

    ref_out, ref_lw = _ref_multi_layer(x_np, params_np)
    # tolerance budget: bf16 MXU operands (conv + lateral mix), f32 accumulate/elementwise
    np.testing.assert_allclose(np.asarray(out), ref_out, rtol=2e-2, atol=2e-2)
    for got, want in zip(new_lw, ref_lw):
        np.testing.assert_allclose(np.asarray(got), want, rtol=2e-2, atol=5e-3)

    print("KERNEL_OK")
</pallas_src>

<mosaic_0001>
module attributes {stable_mosaic.version = 11 : i64} {
  func.func @kernel(%arg0: i32, %arg1: memref<37x128xbf16, #tpu.memory_space<vmem>>, %arg2: memref<8x37xbf16, #tpu.memory_space<vmem>>, %arg3: memref<8x64x64xf32, #tpu.memory_space<vmem>>, %arg4: memref<8x128xf32, #tpu.memory_space<vmem>>, %arg5: memref<8x64x64xf32, #tpu.memory_space<vmem>>) attributes {dimension_semantics = [#tpu.dimension_semantics<arbitrary>], iteration_bounds = array<i64: 1>, scalar_prefetch = 0 : i64, scratch_operands = 0 : i64, tpu.core_type = #tpu.core_type<tc>, window_params = [{pipeline_mode = #tpu.pipeline_mode<synchronous>, transform_indices = @transform_0, window_bounds = array<i64: 37, 128>}, {pipeline_mode = #tpu.pipeline_mode<synchronous>, transform_indices = @transform_1, window_bounds = array<i64: 8, 37>}, {pipeline_mode = #tpu.pipeline_mode<synchronous>, transform_indices = @transform_2, window_bounds = array<i64: 8, 64, 64>}, {pipeline_mode = #tpu.pipeline_mode<synchronous>, transform_indices = @transform_3, window_bounds = array<i64: 8, 128>}, {pipeline_mode = #tpu.pipeline_mode<synchronous>, transform_indices = @transform_4, window_bounds = array<i64: 8, 64, 64>}]} {
    %c0 = arith.constant 0 : index
    %c0_0 = arith.constant 0 : index
    %0 = vector.load %arg2[%c0, %c0_0] : memref<8x37xbf16, #tpu.memory_space<vmem>>, vector<8x37xbf16>
    %c0_1 = arith.constant 0 : index
    %c0_2 = arith.constant 0 : index
    %1 = vector.load %arg1[%c0_1, %c0_2] : memref<37x128xbf16, #tpu.memory_space<vmem>>, vector<37x128xbf16>
    %cst = arith.constant dense<0.000000e+00> : vector<8x128xf32>
    %2 = tpu.matmul %0, %1, %cst {dimension_numbers = #tpu.dot_dimension_numbers<[1], [0], [0], [1], [0, 0, 1, 1], [], []>} : vector<8x37xbf16>, vector<37x128xbf16>, vector<8x128xf32> -> vector<8x128xf32>
    %cst_3 = arith.constant 0.000000e+00 : f32
    %3 = vector.broadcast %cst_3 : f32 to vector<8x128xf32>
    %4 = arith.maximumf %2, %3 : vector<8x128xf32>
    %5 = vector.extract_strided_slice %4 {offsets = [0, 0], sizes = [8, 64], strides = [1, 1]} : vector<8x128xf32> to vector<8x64xf32>
    %6 = vector.extract_strided_slice %4 {offsets = [0, 64], sizes = [8, 64], strides = [1, 1]} : vector<8x128xf32> to vector<8x64xf32>
    %7 = vector.shape_cast %5 : vector<8x64xf32> to vector<8x1x64xf32>
    %8 = vector.shape_cast %6 : vector<8x64xf32> to vector<8x1x64xf32>
    %9 = tpu.concatenate %7, %8 in 1 : vector<8x1x64xf32>, vector<8x1x64xf32> -> vector<8x2x64xf32>
    %10 = vector.shape_cast %9 : vector<8x2x64xf32> to vector<16x64xf32>
    %cst_4 = arith.constant dense<0.000000e+00> : vector<64x64xf32>
    %11 = tpu.matmul %10, %10, %cst_4 {dimension_numbers = #tpu.dot_dimension_numbers<[0], [0], [1], [1], [0, 1, 1, 1], [], []>} : vector<16x64xf32>, vector<16x64xf32>, vector<64x64xf32> -> vector<64x64xf32>
    %cst_5 = arith.constant 1.250000e-04 : f32
    %12 = vector.broadcast %cst_5 : f32 to vector<64x64xf32>
    %13 = arith.mulf %12, %11 : vector<64x64xf32>
    %c0_6 = arith.constant 0 : index
    %c0_7 = arith.constant 0 : index
    %c0_8 = arith.constant 0 : index
    %14 = vector.load %arg3[%c0_6, %c0_7, %c0_8] : memref<8x64x64xf32, #tpu.memory_space<vmem>>, vector<1x64x64xf32>
    %15 = vector.shape_cast %14 : vector<1x64x64xf32> to vector<64x64xf32>
    %16 = arith.addf %15, %13 : vector<64x64xf32>
    %cst_9 = arith.constant -1.000000e+00 : f32
    %cst_10 = arith.constant 1.000000e+00 : f32
    %17 = vector.broadcast %cst_9 : f32 to vector<64x64xf32>
    %18 = arith.maximumf %17, %16 : vector<64x64xf32>
    %19 = vector.broadcast %cst_10 : f32 to vector<64x64xf32>
    %20 = arith.minimumf %19, %18 : vector<64x64xf32>
    %c0_11 = arith.constant 0 : index
    %c0_12 = arith.constant 0 : index
    %c0_13 = arith.constant 0 : index
    %21 = vector.load %arg5[%c0_11, %c0_12, %c0_13] : memref<8x64x64xf32, #tpu.memory_space<vmem>>, vector<1x64x64xf32>
    %22 = vector.shape_cast %21 : vector<1x64x64xf32> to vector<64x64xf32>
    %23 = vector.shape_cast %20 : vector<64x64xf32> to vector<1x64x64xf32>
    tpu.vector_store %arg5[%c0_11, %c0_12, %c0_13], %23 {strides = array<i32>} : memref<8x64x64xf32, #tpu.memory_space<vmem>>, vector<1x64x64xf32>,
    %24 = arith.truncf %20 : vector<64x64xf32> to vector<64x64xbf16>
    %c1 = arith.constant 1 : index
    %c0_14 = arith.constant 0 : index
    %c0_15 = arith.constant 0 : index
    %25 = vector.load %arg3[%c1, %c0_14, %c0_15] : memref<8x64x64xf32, #tpu.memory_space<vmem>>, vector<1x64x64xf32>
    %26 = vector.shape_cast %25 : vector<1x64x64xf32> to vector<64x64xf32>
    %27 = arith.addf %26, %13 : vector<64x64xf32>
    %cst_16 = arith.constant -1.000000e+00 : f32
    %cst_17 = arith.constant 1.000000e+00 : f32
    %28 = vector.broadcast %cst_16 : f32 to vector<64x64xf32>
    %29 = arith.maximumf %28, %27 : vector<64x64xf32>
    %30 = vector.broadcast %cst_17 : f32 to vector<64x64xf32>
    %31 = arith.minimumf %30, %29 : vector<64x64xf32>
    %c1_18 = arith.constant 1 : index
    %c0_19 = arith.constant 0 : index
    %c0_20 = arith.constant 0 : index
    %32 = vector.load %arg5[%c1_18, %c0_19, %c0_20] : memref<8x64x64xf32, #tpu.memory_space<vmem>>, vector<1x64x64xf32>
    %33 = vector.shape_cast %32 : vector<1x64x64xf32> to vector<64x64xf32>
    %34 = vector.shape_cast %31 : vector<64x64xf32> to vector<1x64x64xf32>
    tpu.vector_store %arg5[%c1_18, %c0_19, %c0_20], %34 {strides = array<i32>} : memref<8x64x64xf32, #tpu.memory_space<vmem>>, vector<1x64x64xf32>,
    %35 = arith.truncf %31 : vector<64x64xf32> to vector<64x64xbf16>
    %c2 = arith.constant 2 : index
    %c0_21 = arith.constant 0 : index
    %c0_22 = arith.constant 0 : index
    %36 = vector.load %arg3[%c2, %c0_21, %c0_22] : memref<8x64x64xf32, #tpu.memory_space<vmem>>, vector<1x64x64xf32>
    %37 = vector.shape_cast %36 : vector<1x64x64xf32> to vector<64x64xf32>
    %38 = arith.addf %37, %13 : vector<64x64xf32>
    %cst_23 = arith.constant -1.000000e+00 : f32
    %cst_24 = arith.constant 1.000000e+00 : f32
    %39 = vector.broadcast %cst_23 : f32 to vector<64x64xf32>
    %40 = arith.maximumf %39, %38 : vector<64x64xf32>
    %41 = vector.broadcast %cst_24 : f32 to vector<64x64xf32>
    %42 = arith.minimumf %41, %40 : vector<64x64xf32>
    %c2_25 = arith.constant 2 : index
    %c0_26 = arith.constant 0 : index
    %c0_27 = arith.constant 0 : index
    %43 = vector.load %arg5[%c2_25, %c0_26, %c0_27] : memref<8x64x64xf32, #tpu.memory_space<vmem>>, vector<1x64x64xf32>
    %44 = vector.shape_cast %43 : vector<1x64x64xf32> to vector<64x64xf32>
    %45 = vector.shape_cast %42 : vector<64x64xf32> to vector<1x64x64xf32>
    tpu.vector_store %arg5[%c2_25, %c0_26, %c0_27], %45 {strides = array<i32>} : memref<8x64x64xf32, #tpu.memory_space<vmem>>, vector<1x64x64xf32>,
    %46 = arith.truncf %42 : vector<64x64xf32> to vector<64x64xbf16>
    %c3 = arith.constant 3 : index
    %c0_28 = arith.constant 0 : index
    %c0_29 = arith.constant 0 : index
    %47 = vector.load %arg3[%c3, %c0_28, %c0_29] : memref<8x64x64xf32, #tpu.memory_space<vmem>>, vector<1x64x64xf32>
    %48 = vector.shape_cast %47 : vector<1x64x64xf32> to vector<64x64xf32>
    %49 = arith.addf %48, %13 : vector<64x64xf32>
    %cst_30 = arith.constant -1.000000e+00 : f32
    %cst_31 = arith.constant 1.000000e+00 : f32
    %50 = vector.broadcast %cst_30 : f32 to vector<64x64xf32>
    %51 = arith.maximumf %50, %49 : vector<64x64xf32>
    %52 = vector.broadcast %cst_31 : f32 to vector<64x64xf32>
    %53 = arith.minimumf %52, %51 : vector<64x64xf32>
    %c3_32 = arith.constant 3 : index
    %c0_33 = arith.constant 0 : index
    %c0_34 = arith.constant 0 : index
    %54 = vector.load %arg5[%c3_32, %c0_33, %c0_34] : memref<8x64x64xf32, #tpu.memory_space<vmem>>, vector<1x64x64xf32>
    %55 = vector.shape_cast %54 : vector<1x64x64xf32> to vector<64x64xf32>
    %56 = vector.shape_cast %53 : vector<64x64xf32> to vector<1x64x64xf32>
    tpu.vector_store %arg5[%c3_32, %c0_33, %c0_34], %56 {strides = array<i32>} : memref<8x64x64xf32, #tpu.memory_space<vmem>>, vector<1x64x64xf32>,
    %57 = arith.truncf %53 : vector<64x64xf32> to vector<64x64xbf16>
    %c4 = arith.constant 4 : index
    %c0_35 = arith.constant 0 : index
    %c0_36 = arith.constant 0 : index
    %58 = vector.load %arg3[%c4, %c0_35, %c0_36] : memref<8x64x64xf32, #tpu.memory_space<vmem>>, vector<1x64x64xf32>
    %59 = vector.shape_cast %58 : vector<1x64x64xf32> to vector<64x64xf32>
    %60 = arith.addf %59, %13 : vector<64x64xf32>
    %cst_37 = arith.constant -1.000000e+00 : f32
    %cst_38 = arith.constant 1.000000e+00 : f32
    %61 = vector.broadcast %cst_37 : f32 to vector<64x64xf32>
    %62 = arith.maximumf %61, %60 : vector<64x64xf32>
    %63 = vector.broadcast %cst_38 : f32 to vector<64x64xf32>
    %64 = arith.minimumf %63, %62 : vector<64x64xf32>
    %c4_39 = arith.constant 4 : index
    %c0_40 = arith.constant 0 : index
    %c0_41 = arith.constant 0 : index
    %65 = vector.load %arg5[%c4_39, %c0_40, %c0_41] : memref<8x64x64xf32, #tpu.memory_space<vmem>>, vector<1x64x64xf32>
    %66 = vector.shape_cast %65 : vector<1x64x64xf32> to vector<64x64xf32>
    %67 = vector.shape_cast %64 : vector<64x64xf32> to vector<1x64x64xf32>
    tpu.vector_store %arg5[%c4_39, %c0_40, %c0_41], %67 {strides = array<i32>} : memref<8x64x64xf32, #tpu.memory_space<vmem>>, vector<1x64x64xf32>,
    %68 = arith.truncf %64 : vector<64x64xf32> to vector<64x64xbf16>
    %c5 = arith.constant 5 : index
    %c0_42 = arith.constant 0 : index
    %c0_43 = arith.constant 0 : index
    %69 = vector.load %arg3[%c5, %c0_42, %c0_43] : memref<8x64x64xf32, #tpu.memory_space<vmem>>, vector<1x64x64xf32>
    %70 = vector.shape_cast %69 : vector<1x64x64xf32> to vector<64x64xf32>
    %71 = arith.addf %70, %13 : vector<64x64xf32>
    %cst_44 = arith.constant -1.000000e+00 : f32
    %cst_45 = arith.constant 1.000000e+00 : f32
    %72 = vector.broadcast %cst_44 : f32 to vector<64x64xf32>
    %73 = arith.maximumf %72, %71 : vector<64x64xf32>
    %74 = vector.broadcast %cst_45 : f32 to vector<64x64xf32>
    %75 = arith.minimumf %74, %73 : vector<64x64xf32>
    %c5_46 = arith.constant 5 : index
    %c0_47 = arith.constant 0 : index
    %c0_48 = arith.constant 0 : index
    %76 = vector.load %arg5[%c5_46, %c0_47, %c0_48] : memref<8x64x64xf32, #tpu.memory_space<vmem>>, vector<1x64x64xf32>
    %77 = vector.shape_cast %76 : vector<1x64x64xf32> to vector<64x64xf32>
    %78 = vector.shape_cast %75 : vector<64x64xf32> to vector<1x64x64xf32>
    tpu.vector_store %arg5[%c5_46, %c0_47, %c0_48], %78 {strides = array<i32>} : memref<8x64x64xf32, #tpu.memory_space<vmem>>, vector<1x64x64xf32>,
    %79 = arith.truncf %75 : vector<64x64xf32> to vector<64x64xbf16>
    %c6 = arith.constant 6 : index
    %c0_49 = arith.constant 0 : index
    %c0_50 = arith.constant 0 : index
    %80 = vector.load %arg3[%c6, %c0_49, %c0_50] : memref<8x64x64xf32, #tpu.memory_space<vmem>>, vector<1x64x64xf32>
    %81 = vector.shape_cast %80 : vector<1x64x64xf32> to vector<64x64xf32>
    %82 = arith.addf %81, %13 : vector<64x64xf32>
    %cst_51 = arith.constant -1.000000e+00 : f32
    %cst_52 = arith.constant 1.000000e+00 : f32
    %83 = vector.broadcast %cst_51 : f32 to vector<64x64xf32>
    %84 = arith.maximumf %83, %82 : vector<64x64xf32>
    %85 = vector.broadcast %cst_52 : f32 to vector<64x64xf32>
    %86 = arith.minimumf %85, %84 : vector<64x64xf32>
    %c6_53 = arith.constant 6 : index
    %c0_54 = arith.constant 0 : index
    %c0_55 = arith.constant 0 : index
    %87 = vector.load %arg5[%c6_53, %c0_54, %c0_55] : memref<8x64x64xf32, #tpu.memory_space<vmem>>, vector<1x64x64xf32>
    %88 = vector.shape_cast %87 : vector<1x64x64xf32> to vector<64x64xf32>
    %89 = vector.shape_cast %86 : vector<64x64xf32> to vector<1x64x64xf32>
    tpu.vector_store %arg5[%c6_53, %c0_54, %c0_55], %89 {strides = array<i32>} : memref<8x64x64xf32, #tpu.memory_space<vmem>>, vector<1x64x64xf32>,
    %90 = arith.truncf %86 : vector<64x64xf32> to vector<64x64xbf16>
    %c7 = arith.constant 7 : index
    %c0_56 = arith.constant 0 : index
    %c0_57 = arith.constant 0 : index
    %91 = vector.load %arg3[%c7, %c0_56, %c0_57] : memref<8x64x64xf32, #tpu.memory_space<vmem>>, vector<1x64x64xf32>
    %92 = vector.shape_cast %91 : vector<1x64x64xf32> to vector<64x64xf32>
    %93 = arith.addf %92, %13 : vector<64x64xf32>
    %cst_58 = arith.constant -1.000000e+00 : f32
    %cst_59 = arith.constant 1.000000e+00 : f32
    %94 = vector.broadcast %cst_58 : f32 to vector<64x64xf32>
    %95 = arith.maximumf %94, %93 : vector<64x64xf32>
    %96 = vector.broadcast %cst_59 : f32 to vector<64x64xf32>
    %97 = arith.minimumf %96, %95 : vector<64x64xf32>
    %c7_60 = arith.constant 7 : index
    %c0_61 = arith.constant 0 : index
    %c0_62 = arith.constant 0 : index
    %98 = vector.load %arg5[%c7_60, %c0_61, %c0_62] : memref<8x64x64xf32, #tpu.memory_space<vmem>>, vector<1x64x64xf32>
    %99 = vector.shape_cast %98 : vector<1x64x64xf32> to vector<64x64xf32>
    %100 = vector.shape_cast %97 : vector<64x64xf32> to vector<1x64x64xf32>
    tpu.vector_store %arg5[%c7_60, %c0_61, %c0_62], %100 {strides = array<i32>} : memref<8x64x64xf32, #tpu.memory_space<vmem>>, vector<1x64x64xf32>,
    %101 = arith.truncf %97 : vector<64x64xf32> to vector<64x64xbf16>
    %102 = vector.shape_cast %24 : vector<64x64xbf16> to vector<1x64x64xbf16>
    %103 = vector.shape_cast %35 : vector<64x64xbf16> to vector<1x64x64xbf16>
    %104 = vector.shape_cast %46 : vector<64x64xbf16> to vector<1x64x64xbf16>
    %105 = vector.shape_cast %57 : vector<64x64xbf16> to vector<1x64x64xbf16>
    %106 = vector.shape_cast %68 : vector<64x64xbf16> to vector<1x64x64xbf16>
    %107 = vector.shape_cast %79 : vector<64x64xbf16> to vector<1x64x64xbf16>
    %108 = vector.shape_cast %90 : vector<64x64xbf16> to vector<1x64x64xbf16>
    %109 = vector.shape_cast %101 : vector<64x64xbf16> to vector<1x64x64xbf16>
    %110 = tpu.concatenate %102, %103, %104, %105, %106, %107, %108, %109 in 0 : vector<1x64x64xbf16>, vector<1x64x64xbf16>, vector<1x64x64xbf16>, vector<1x64x64xbf16>, vector<1x64x64xbf16>, vector<1x64x64xbf16>, vector<1x64x64xbf16>, vector<1x64x64xbf16> -> vector<8x64x64xbf16>
    %111 = arith.truncf %9 : vector<8x2x64xf32> to vector<8x2x64xbf16>
    %cst_63 = arith.constant dense<0.000000e+00> : vector<8x2x64xf32>
    %112 = tpu.matmul %111, %110, %cst_63 {dimension_numbers = #tpu.dot_dimension_numbers<[2], [1], [1], [2], [0, 0, 0, 1, 1, 2], [0], [0]>} : vector<8x2x64xbf16>, vector<8x64x64xbf16>, vector<8x2x64xf32> -> vector<8x2x64xf32>
    %113 = vector.extract_strided_slice %112 {offsets = [0, 0, 0], sizes = [8, 1, 64], strides = [1, 1, 1]} : vector<8x2x64xf32> to vector<8x1x64xf32>
    %114 = vector.shape_cast %113 : vector<8x1x64xf32> to vector<8x64xf32>
    %115 = vector.extract_strided_slice %112 {offsets = [0, 1, 0], sizes = [8, 1, 64], strides = [1, 1, 1]} : vector<8x2x64xf32> to vector<8x1x64xf32>
    %116 = vector.shape_cast %115 : vector<8x1x64xf32> to vector<8x64xf32>
    %117 = tpu.concatenate %114, %116 in 1 : vector<8x64xf32>, vector<8x64xf32> -> vector<8x128xf32>
    %118 = arith.addf %4, %117 : vector<8x128xf32>
    %c0_64 = arith.constant 0 : index
    %c0_65 = arith.constant 0 : index
    %119 = vector.load %arg4[%c0_64, %c0_65] : memref<8x128xf32, #tpu.memory_space<vmem>>, vector<8x128xf32>
    tpu.vector_store %arg4[%c0_64, %c0_65], %118 {strides = array<i32>} : memref<8x128xf32, #tpu.memory_space<vmem>>, vector<8x128xf32>,
    return
  }
  func.func @transform_0(%arg0: i32) -> (i32, i32) {
    %c0_i32 = arith.constant 0 : i32
    %c0_i32_0 = arith.constant 0 : i32
    %c0_i32_1 = arith.constant 0 : i32
    return %c0_i32, %c0_i32_0 : i32, i32
  }
  func.func @transform_1(%arg0: i32) -> (i32, i32) {
    %c0_i32 = arith.constant 0 : i32
    %c0_i32_0 = arith.constant 0 : i32
    %c0_i32_1 = arith.constant 0 : i32
    return %c0_i32, %c0_i32_0 : i32, i32
  }
  func.func @transform_2(%arg0: i32) -> (i32, i32, i32) {
    %c0_i32 = arith.constant 0 : i32
    %c0_i32_0 = arith.constant 0 : i32
    %c0_i32_1 = arith.constant 0 : i32
    %c0_i32_2 = arith.constant 0 : i32
    return %c0_i32, %c0_i32_0, %c0_i32_1 : i32, i32, i32
  }
  func.func @transform_3(%arg0: i32) -> (i32, i32) {
    %c0_i32 = arith.constant 0 : i32
    %c0_i32_0 = arith.constant 0 : i32
    %c0_i32_1 = arith.constant 0 : i32
    return %c0_i32, %c0_i32_0 : i32, i32
  }
  func.func @transform_4(%arg0: i32) -> (i32, i32, i32) {
    %c0_i32 = arith.constant 0 : i32
    %c0_i32_0 = arith.constant 0 : i32
    %c0_i32_1 = arith.constant 0 : i32
    %c0_i32_2 = arith.constant 0 : i32
    return %c0_i32, %c0_i32_0, %c0_i32_1 : i32, i32, i32
  }
}

module attributes {stable_mosaic.version = 11 : i64} {
  func.func @kernel(%arg0: i32, %arg1: memref<73x32xbf16, #tpu.memory_space<vmem>>, %arg2: memref<16x73xbf16, #tpu.memory_space<vmem>>, %arg3: memref<16x16x16xf32, #tpu.memory_space<vmem>>, %arg4: memref<2x256xf32, #tpu.memory_space<vmem>>, %arg5: memref<16x16x16xf32, #tpu.memory_space<vmem>>) attributes {dimension_semantics = [#tpu.dimension_semantics<arbitrary>], iteration_bounds = array<i64: 1>, scalar_prefetch = 0 : i64, scratch_operands = 0 : i64, tpu.core_type = #tpu.core_type<tc>, window_params = [{pipeline_mode = #tpu.pipeline_mode<synchronous>, transform_indices = @transform_0, window_bounds = array<i64: 73, 32>}, {pipeline_mode = #tpu.pipeline_mode<synchronous>, transform_indices = @transform_1, window_bounds = array<i64: 16, 73>}, {pipeline_mode = #tpu.pipeline_mode<synchronous>, transform_indices = @transform_2, window_bounds = array<i64: 16, 16, 16>}, {pipeline_mode = #tpu.pipeline_mode<synchronous>, transform_indices = @transform_3, window_bounds = array<i64: 2, 256>}, {pipeline_mode = #tpu.pipeline_mode<synchronous>, transform_indices = @transform_4, window_bounds = array<i64: 16, 16, 16>}]} {
    %c0 = arith.constant 0 : index
    %c0_0 = arith.constant 0 : index
    %0 = vector.load %arg2[%c0, %c0_0] : memref<16x73xbf16, #tpu.memory_space<vmem>>, vector<16x73xbf16>
    %c0_1 = arith.constant 0 : index
    %c0_2 = arith.constant 0 : index
    %1 = vector.load %arg1[%c0_1, %c0_2] : memref<73x32xbf16, #tpu.memory_space<vmem>>, vector<73x32xbf16>
    %cst = arith.constant dense<0.000000e+00> : vector<16x32xf32>
    %2 = tpu.matmul %0, %1, %cst {dimension_numbers = #tpu.dot_dimension_numbers<[1], [0], [0], [1], [0, 0, 1, 1], [], []>} : vector<16x73xbf16>, vector<73x32xbf16>, vector<16x32xf32> -> vector<16x32xf32>
    %cst_3 = arith.constant 0.000000e+00 : f32
    %3 = vector.broadcast %cst_3 : f32 to vector<16x32xf32>
    %4 = arith.maximumf %2, %3 : vector<16x32xf32>
    %5 = vector.extract_strided_slice %4 {offsets = [0, 0], sizes = [16, 16], strides = [1, 1]} : vector<16x32xf32> to vector<16x16xf32>
    %6 = vector.extract_strided_slice %4 {offsets = [0, 16], sizes = [16, 16], strides = [1, 1]} : vector<16x32xf32> to vector<16x16xf32>
    %7 = vector.shape_cast %5 : vector<16x16xf32> to vector<16x1x16xf32>
    %8 = vector.shape_cast %6 : vector<16x16xf32> to vector<16x1x16xf32>
    %9 = tpu.concatenate %7, %8 in 1 : vector<16x1x16xf32>, vector<16x1x16xf32> -> vector<16x2x16xf32>
    %10 = vector.shape_cast %9 : vector<16x2x16xf32> to vector<32x16xf32>
    %cst_4 = arith.constant dense<0.000000e+00> : vector<16x16xf32>
    %11 = tpu.matmul %10, %10, %cst_4 {dimension_numbers = #tpu.dot_dimension_numbers<[0], [0], [1], [1], [0, 1, 1, 1], [], []>} : vector<32x16xf32>, vector<32x16xf32>, vector<16x16xf32> -> vector<16x16xf32>
    %cst_5 = arith.constant 6.250000e-05 : f32
    %12 = vector.broadcast %cst_5 : f32 to vector<16x16xf32>
    %13 = arith.mulf %12, %11 : vector<16x16xf32>
    %c0_6 = arith.constant 0 : index
    %c0_7 = arith.constant 0 : index
    %c0_8 = arith.constant 0 : index
    %14 = vector.load %arg3[%c0_6, %c0_7, %c0_8] : memref<16x16x16xf32, #tpu.memory_space<vmem>>, vector<1x16x16xf32>
    %15 = vector.shape_cast %14 : vector<1x16x16xf32> to vector<16x16xf32>
    %16 = arith.addf %15, %13 : vector<16x16xf32>
    %cst_9 = arith.constant -1.000000e+00 : f32
    %cst_10 = arith.constant 1.000000e+00 : f32
    %17 = vector.broadcast %cst_9 : f32 to vector<16x16xf32>
    %18 = arith.maximumf %17, %16 : vector<16x16xf32>
    %19 = vector.broadcast %cst_10 : f32 to vector<16x16xf32>
    %20 = arith.minimumf %19, %18 : vector<16x16xf32>
    %c0_11 = arith.constant 0 : index
    %c0_12 = arith.constant 0 : index
    %c0_13 = arith.constant 0 : index
    %21 = vector.load %arg5[%c0_11, %c0_12, %c0_13] : memref<16x16x16xf32, #tpu.memory_space<vmem>>, vector<1x16x16xf32>
    %22 = vector.shape_cast %21 : vector<1x16x16xf32> to vector<16x16xf32>
    %23 = vector.shape_cast %20 : vector<16x16xf32> to vector<1x16x16xf32>
    tpu.vector_store %arg5[%c0_11, %c0_12, %c0_13], %23 {strides = array<i32>} : memref<16x16x16xf32, #tpu.memory_space<vmem>>, vector<1x16x16xf32>,
    %24 = arith.truncf %20 : vector<16x16xf32> to vector<16x16xbf16>
    %c1 = arith.constant 1 : index
    %c0_14 = arith.constant 0 : index
    %c0_15 = arith.constant 0 : index
    %25 = vector.load %arg3[%c1, %c0_14, %c0_15] : memref<16x16x16xf32, #tpu.memory_space<vmem>>, vector<1x16x16xf32>
    %26 = vector.shape_cast %25 : vector<1x16x16xf32> to vector<16x16xf32>
    %27 = arith.addf %26, %13 : vector<16x16xf32>
    %cst_16 = arith.constant -1.000000e+00 : f32
    %cst_17 = arith.constant 1.000000e+00 : f32
    %28 = vector.broadcast %cst_16 : f32 to vector<16x16xf32>
    %29 = arith.maximumf %28, %27 : vector<16x16xf32>
    %30 = vector.broadcast %cst_17 : f32 to vector<16x16xf32>
    %31 = arith.minimumf %30, %29 : vector<16x16xf32>
    %c1_18 = arith.constant 1 : index
    %c0_19 = arith.constant 0 : index
    %c0_20 = arith.constant 0 : index
    %32 = vector.load %arg5[%c1_18, %c0_19, %c0_20] : memref<16x16x16xf32, #tpu.memory_space<vmem>>, vector<1x16x16xf32>
    %33 = vector.shape_cast %32 : vector<1x16x16xf32> to vector<16x16xf32>
    %34 = vector.shape_cast %31 : vector<16x16xf32> to vector<1x16x16xf32>
    tpu.vector_store %arg5[%c1_18, %c0_19, %c0_20], %34 {strides = array<i32>} : memref<16x16x16xf32, #tpu.memory_space<vmem>>, vector<1x16x16xf32>,
    %35 = arith.truncf %31 : vector<16x16xf32> to vector<16x16xbf16>
    %c2 = arith.constant 2 : index
    %c0_21 = arith.constant 0 : index
    %c0_22 = arith.constant 0 : index
    %36 = vector.load %arg3[%c2, %c0_21, %c0_22] : memref<16x16x16xf32, #tpu.memory_space<vmem>>, vector<1x16x16xf32>
    %37 = vector.shape_cast %36 : vector<1x16x16xf32> to vector<16x16xf32>
    %38 = arith.addf %37, %13 : vector<16x16xf32>
    %cst_23 = arith.constant -1.000000e+00 : f32
    %cst_24 = arith.constant 1.000000e+00 : f32
    %39 = vector.broadcast %cst_23 : f32 to vector<16x16xf32>
    %40 = arith.maximumf %39, %38 : vector<16x16xf32>
    %41 = vector.broadcast %cst_24 : f32 to vector<16x16xf32>
    %42 = arith.minimumf %41, %40 : vector<16x16xf32>
    %c2_25 = arith.constant 2 : index
    %c0_26 = arith.constant 0 : index
    %c0_27 = arith.constant 0 : index
    %43 = vector.load %arg5[%c2_25, %c0_26, %c0_27] : memref<16x16x16xf32, #tpu.memory_space<vmem>>, vector<1x16x16xf32>
    %44 = vector.shape_cast %43 : vector<1x16x16xf32> to vector<16x16xf32>
    %45 = vector.shape_cast %42 : vector<16x16xf32> to vector<1x16x16xf32>
    tpu.vector_store %arg5[%c2_25, %c0_26, %c0_27], %45 {strides = array<i32>} : memref<16x16x16xf32, #tpu.memory_space<vmem>>, vector<1x16x16xf32>,
    %46 = arith.truncf %42 : vector<16x16xf32> to vector<16x16xbf16>
    %c3 = arith.constant 3 : index
    %c0_28 = arith.constant 0 : index
    %c0_29 = arith.constant 0 : index
    %47 = vector.load %arg3[%c3, %c0_28, %c0_29] : memref<16x16x16xf32, #tpu.memory_space<vmem>>, vector<1x16x16xf32>
    %48 = vector.shape_cast %47 : vector<1x16x16xf32> to vector<16x16xf32>
    %49 = arith.addf %48, %13 : vector<16x16xf32>
    %cst_30 = arith.constant -1.000000e+00 : f32
    %cst_31 = arith.constant 1.000000e+00 : f32
    %50 = vector.broadcast %cst_30 : f32 to vector<16x16xf32>
    %51 = arith.maximumf %50, %49 : vector<16x16xf32>
    %52 = vector.broadcast %cst_31 : f32 to vector<16x16xf32>
    %53 = arith.minimumf %52, %51 : vector<16x16xf32>
    %c3_32 = arith.constant 3 : index
    %c0_33 = arith.constant 0 : index
    %c0_34 = arith.constant 0 : index
    %54 = vector.load %arg5[%c3_32, %c0_33, %c0_34] : memref<16x16x16xf32, #tpu.memory_space<vmem>>, vector<1x16x16xf32>
    %55 = vector.shape_cast %54 : vector<1x16x16xf32> to vector<16x16xf32>
    %56 = vector.shape_cast %53 : vector<16x16xf32> to vector<1x16x16xf32>
    tpu.vector_store %arg5[%c3_32, %c0_33, %c0_34], %56 {strides = array<i32>} : memref<16x16x16xf32, #tpu.memory_space<vmem>>, vector<1x16x16xf32>,
    %57 = arith.truncf %53 : vector<16x16xf32> to vector<16x16xbf16>
    %c4 = arith.constant 4 : index
    %c0_35 = arith.constant 0 : index
    %c0_36 = arith.constant 0 : index
    %58 = vector.load %arg3[%c4, %c0_35, %c0_36] : memref<16x16x16xf32, #tpu.memory_space<vmem>>, vector<1x16x16xf32>
    %59 = vector.shape_cast %58 : vector<1x16x16xf32> to vector<16x16xf32>
    %60 = arith.addf %59, %13 : vector<16x16xf32>
    %cst_37 = arith.constant -1.000000e+00 : f32
    %cst_38 = arith.constant 1.000000e+00 : f32
    %61 = vector.broadcast %cst_37 : f32 to vector<16x16xf32>
    %62 = arith.maximumf %61, %60 : vector<16x16xf32>
    %63 = vector.broadcast %cst_38 : f32 to vector<16x16xf32>
    %64 = arith.minimumf %63, %62 : vector<16x16xf32>
    %c4_39 = arith.constant 4 : index
    %c0_40 = arith.constant 0 : index
    %c0_41 = arith.constant 0 : index
    %65 = vector.load %arg5[%c4_39, %c0_40, %c0_41] : memref<16x16x16xf32, #tpu.memory_space<vmem>>, vector<1x16x16xf32>
    %66 = vector.shape_cast %65 : vector<1x16x16xf32> to vector<16x16xf32>
    %67 = vector.shape_cast %64 : vector<16x16xf32> to vector<1x16x16xf32>
    tpu.vector_store %arg5[%c4_39, %c0_40, %c0_41], %67 {strides = array<i32>} : memref<16x16x16xf32, #tpu.memory_space<vmem>>, vector<1x16x16xf32>,
    %68 = arith.truncf %64 : vector<16x16xf32> to vector<16x16xbf16>
    %c5 = arith.constant 5 : index
    %c0_42 = arith.constant 0 : index
    %c0_43 = arith.constant 0 : index
    %69 = vector.load %arg3[%c5, %c0_42, %c0_43] : memref<16x16x16xf32, #tpu.memory_space<vmem>>, vector<1x16x16xf32>
    %70 = vector.shape_cast %69 : vector<1x16x16xf32> to vector<16x16xf32>
    %71 = arith.addf %70, %13 : vector<16x16xf32>
    %cst_44 = arith.constant -1.000000e+00 : f32
    %cst_45 = arith.constant 1.000000e+00 : f32
    %72 = vector.broadcast %cst_44 : f32 to vector<16x16xf32>
    %73 = arith.maximumf %72, %71 : vector<16x16xf32>
    %74 = vector.broadcast %cst_45 : f32 to vector<16x16xf32>
    %75 = arith.minimumf %74, %73 : vector<16x16xf32>
    %c5_46 = arith.constant 5 : index
    %c0_47 = arith.constant 0 : index
    %c0_48 = arith.constant 0 : index
    %76 = vector.load %arg5[%c5_46, %c0_47, %c0_48] : memref<16x16x16xf32, #tpu.memory_space<vmem>>, vector<1x16x16xf32>
    %77 = vector.shape_cast %76 : vector<1x16x16xf32> to vector<16x16xf32>
    %78 = vector.shape_cast %75 : vector<16x16xf32> to vector<1x16x16xf32>
    tpu.vector_store %arg5[%c5_46, %c0_47, %c0_48], %78 {strides = array<i32>} : memref<16x16x16xf32, #tpu.memory_space<vmem>>, vector<1x16x16xf32>,
    %79 = arith.truncf %75 : vector<16x16xf32> to vector<16x16xbf16>
    %c6 = arith.constant 6 : index
    %c0_49 = arith.constant 0 : index
    %c0_50 = arith.constant 0 : index
    %80 = vector.load %arg3[%c6, %c0_49, %c0_50] : memref<16x16x16xf32, #tpu.memory_space<vmem>>, vector<1x16x16xf32>
    %81 = vector.shape_cast %80 : vector<1x16x16xf32> to vector<16x16xf32>
    %82 = arith.addf %81, %13 : vector<16x16xf32>
    %cst_51 = arith.constant -1.000000e+00 : f32
    %cst_52 = arith.constant 1.000000e+00 : f32
    %83 = vector.broadcast %cst_51 : f32 to vector<16x16xf32>
    %84 = arith.maximumf %83, %82 : vector<16x16xf32>
    %85 = vector.broadcast %cst_52 : f32 to vector<16x16xf32>
    %86 = arith.minimumf %85, %84 : vector<16x16xf32>
    %c6_53 = arith.constant 6 : index
    %c0_54 = arith.constant 0 : index
    %c0_55 = arith.constant 0 : index
    %87 = vector.load %arg5[%c6_53, %c0_54, %c0_55] : memref<16x16x16xf32, #tpu.memory_space<vmem>>, vector<1x16x16xf32>
    %88 = vector.shape_cast %87 : vector<1x16x16xf32> to vector<16x16xf32>
    %89 = vector.shape_cast %86 : vector<16x16xf32> to vector<1x16x16xf32>
    tpu.vector_store %arg5[%c6_53, %c0_54, %c0_55], %89 {strides = array<i32>} : memref<16x16x16xf32, #tpu.memory_space<vmem>>, vector<1x16x16xf32>,
    %90 = arith.truncf %86 : vector<16x16xf32> to vector<16x16xbf16>
    %c7 = arith.constant 7 : index
    %c0_56 = arith.constant 0 : index
    %c0_57 = arith.constant 0 : index
    %91 = vector.load %arg3[%c7, %c0_56, %c0_57] : memref<16x16x16xf32, #tpu.memory_space<vmem>>, vector<1x16x16xf32>
    %92 = vector.shape_cast %91 : vector<1x16x16xf32> to vector<16x16xf32>
    %93 = arith.addf %92, %13 : vector<16x16xf32>
    %cst_58 = arith.constant -1.000000e+00 : f32
    %cst_59 = arith.constant 1.000000e+00 : f32
    %94 = vector.broadcast %cst_58 : f32 to vector<16x16xf32>
    %95 = arith.maximumf %94, %93 : vector<16x16xf32>
    %96 = vector.broadcast %cst_59 : f32 to vector<16x16xf32>
    %97 = arith.minimumf %96, %95 : vector<16x16xf32>
    %c7_60 = arith.constant 7 : index
    %c0_61 = arith.constant 0 : index
    %c0_62 = arith.constant 0 : index
    %98 = vector.load %arg5[%c7_60, %c0_61, %c0_62] : memref<16x16x16xf32, #tpu.memory_space<vmem>>, vector<1x16x16xf32>
    %99 = vector.shape_cast %98 : vector<1x16x16xf32> to vector<16x16xf32>
    %100 = vector.shape_cast %97 : vector<16x16xf32> to vector<1x16x16xf32>
    tpu.vector_store %arg5[%c7_60, %c0_61, %c0_62], %100 {strides = array<i32>} : memref<16x16x16xf32, #tpu.memory_space<vmem>>, vector<1x16x16xf32>,
    %101 = arith.truncf %97 : vector<16x16xf32> to vector<16x16xbf16>
    %c8 = arith.constant 8 : index
    %c0_63 = arith.constant 0 : index
    %c0_64 = arith.constant 0 : index
    %102 = vector.load %arg3[%c8, %c0_63, %c0_64] : memref<16x16x16xf32, #tpu.memory_space<vmem>>, vector<1x16x16xf32>
    %103 = vector.shape_cast %102 : vector<1x16x16xf32> to vector<16x16xf32>
    %104 = arith.addf %103, %13 : vector<16x16xf32>
    %cst_65 = arith.constant -1.000000e+00 : f32
    %cst_66 = arith.constant 1.000000e+00 : f32
    %105 = vector.broadcast %cst_65 : f32 to vector<16x16xf32>
    %106 = arith.maximumf %105, %104 : vector<16x16xf32>
    %107 = vector.broadcast %cst_66 : f32 to vector<16x16xf32>
    %108 = arith.minimumf %107, %106 : vector<16x16xf32>
    %c8_67 = arith.constant 8 : index
    %c0_68 = arith.constant 0 : index
    %c0_69 = arith.constant 0 : index
    %109 = vector.load %arg5[%c8_67, %c0_68, %c0_69] : memref<16x16x16xf32, #tpu.memory_space<vmem>>, vector<1x16x16xf32>
    %110 = vector.shape_cast %109 : vector<1x16x16xf32> to vector<16x16xf32>
    %111 = vector.shape_cast %108 : vector<16x16xf32> to vector<1x16x16xf32>
    tpu.vector_store %arg5[%c8_67, %c0_68, %c0_69], %111 {strides = array<i32>} : memref<16x16x16xf32, #tpu.memory_space<vmem>>, vector<1x16x16xf32>,
    %112 = arith.truncf %108 : vector<16x16xf32> to vector<16x16xbf16>
    %c9 = arith.constant 9 : index
    %c0_70 = arith.constant 0 : index
    %c0_71 = arith.constant 0 : index
    %113 = vector.load %arg3[%c9, %c0_70, %c0_71] : memref<16x16x16xf32, #tpu.memory_space<vmem>>, vector<1x16x16xf32>
    %114 = vector.shape_cast %113 : vector<1x16x16xf32> to vector<16x16xf32>
    %115 = arith.addf %114, %13 : vector<16x16xf32>
    %cst_72 = arith.constant -1.000000e+00 : f32
    %cst_73 = arith.constant 1.000000e+00 : f32
    %116 = vector.broadcast %cst_72 : f32 to vector<16x16xf32>
    %117 = arith.maximumf %116, %115 : vector<16x16xf32>
    %118 = vector.broadcast %cst_73 : f32 to vector<16x16xf32>
    %119 = arith.minimumf %118, %117 : vector<16x16xf32>
    %c9_74 = arith.constant 9 : index
    %c0_75 = arith.constant 0 : index
    %c0_76 = arith.constant 0 : index
    %120 = vector.load %arg5[%c9_74, %c0_75, %c0_76] : memref<16x16x16xf32, #tpu.memory_space<vmem>>, vector<1x16x16xf32>
    %121 = vector.shape_cast %120 : vector<1x16x16xf32> to vector<16x16xf32>
    %122 = vector.shape_cast %119 : vector<16x16xf32> to vector<1x16x16xf32>
    tpu.vector_store %arg5[%c9_74, %c0_75, %c0_76], %122 {strides = array<i32>} : memref<16x16x16xf32, #tpu.memory_space<vmem>>, vector<1x16x16xf32>,
    %123 = arith.truncf %119 : vector<16x16xf32> to vector<16x16xbf16>
    %c10 = arith.constant 10 : index
    %c0_77 = arith.constant 0 : index
    %c0_78 = arith.constant 0 : index
    %124 = vector.load %arg3[%c10, %c0_77, %c0_78] : memref<16x16x16xf32, #tpu.memory_space<vmem>>, vector<1x16x16xf32>
    %125 = vector.shape_cast %124 : vector<1x16x16xf32> to vector<16x16xf32>
    %126 = arith.addf %125, %13 : vector<16x16xf32>
    %cst_79 = arith.constant -1.000000e+00 : f32
    %cst_80 = arith.constant 1.000000e+00 : f32
    %127 = vector.broadcast %cst_79 : f32 to vector<16x16xf32>
    %128 = arith.maximumf %127, %126 : vector<16x16xf32>
    %129 = vector.broadcast %cst_80 : f32 to vector<16x16xf32>
    %130 = arith.minimumf %129, %128 : vector<16x16xf32>
    %c10_81 = arith.constant 10 : index
    %c0_82 = arith.constant 0 : index
    %c0_83 = arith.constant 0 : index
    %131 = vector.load %arg5[%c10_81, %c0_82, %c0_83] : memref<16x16x16xf32, #tpu.memory_space<vmem>>, vector<1x16x16xf32>
    %132 = vector.shape_cast %131 : vector<1x16x16xf32> to vector<16x16xf32>
    %133 = vector.shape_cast %130 : vector<16x16xf32> to vector<1x16x16xf32>
    tpu.vector_store %arg5[%c10_81, %c0_82, %c0_83], %133 {strides = array<i32>} : memref<16x16x16xf32, #tpu.memory_space<vmem>>, vector<1x16x16xf32>,
    %134 = arith.truncf %130 : vector<16x16xf32> to vector<16x16xbf16>
    %c11 = arith.constant 11 : index
    %c0_84 = arith.constant 0 : index
    %c0_85 = arith.constant 0 : index
    %135 = vector.load %arg3[%c11, %c0_84, %c0_85] : memref<16x16x16xf32, #tpu.memory_space<vmem>>, vector<1x16x16xf32>
    %136 = vector.shape_cast %135 : vector<1x16x16xf32> to vector<16x16xf32>
    %137 = arith.addf %136, %13 : vector<16x16xf32>
    %cst_86 = arith.constant -1.000000e+00 : f32
    %cst_87 = arith.constant 1.000000e+00 : f32
    %138 = vector.broadcast %cst_86 : f32 to vector<16x16xf32>
    %139 = arith.maximumf %138, %137 : vector<16x16xf32>
    %140 = vector.broadcast %cst_87 : f32 to vector<16x16xf32>
    %141 = arith.minimumf %140, %139 : vector<16x16xf32>
    %c11_88 = arith.constant 11 : index
    %c0_89 = arith.constant 0 : index
    %c0_90 = arith.constant 0 : index
    %142 = vector.load %arg5[%c11_88, %c0_89, %c0_90] : memref<16x16x16xf32, #tpu.memory_space<vmem>>, vector<1x16x16xf32>
    %143 = vector.shape_cast %142 : vector<1x16x16xf32> to vector<16x16xf32>
    %144 = vector.shape_cast %141 : vector<16x16xf32> to vector<1x16x16xf32>
    tpu.vector_store %arg5[%c11_88, %c0_89, %c0_90], %144 {strides = array<i32>} : memref<16x16x16xf32, #tpu.memory_space<vmem>>, vector<1x16x16xf32>,
    %145 = arith.truncf %141 : vector<16x16xf32> to vector<16x16xbf16>
    %c12 = arith.constant 12 : index
    %c0_91 = arith.constant 0 : index
    %c0_92 = arith.constant 0 : index
    %146 = vector.load %arg3[%c12, %c0_91, %c0_92] : memref<16x16x16xf32, #tpu.memory_space<vmem>>, vector<1x16x16xf32>
    %147 = vector.shape_cast %146 : vector<1x16x16xf32> to vector<16x16xf32>
    %148 = arith.addf %147, %13 : vector<16x16xf32>
    %cst_93 = arith.constant -1.000000e+00 : f32
    %cst_94 = arith.constant 1.000000e+00 : f32
    %149 = vector.broadcast %cst_93 : f32 to vector<16x16xf32>
    %150 = arith.maximumf %149, %148 : vector<16x16xf32>
    %151 = vector.broadcast %cst_94 : f32 to vector<16x16xf32>
    %152 = arith.minimumf %151, %150 : vector<16x16xf32>
    %c12_95 = arith.constant 12 : index
    %c0_96 = arith.constant 0 : index
    %c0_97 = arith.constant 0 : index
    %153 = vector.load %arg5[%c12_95, %c0_96, %c0_97] : memref<16x16x16xf32, #tpu.memory_space<vmem>>, vector<1x16x16xf32>
    %154 = vector.shape_cast %153 : vector<1x16x16xf32> to vector<16x16xf32>
    %155 = vector.shape_cast %152 : vector<16x16xf32> to vector<1x16x16xf32>
    tpu.vector_store %arg5[%c12_95, %c0_96, %c0_97], %155 {strides = array<i32>} : memref<16x16x16xf32, #tpu.memory_space<vmem>>, vector<1x16x16xf32>,
    %156 = arith.truncf %152 : vector<16x16xf32> to vector<16x16xbf16>
    %c13 = arith.constant 13 : index
    %c0_98 = arith.constant 0 : index
    %c0_99 = arith.constant 0 : index
    %157 = vector.load %arg3[%c13, %c0_98, %c0_99] : memref<16x16x16xf32, #tpu.memory_space<vmem>>, vector<1x16x16xf32>
    %158 = vector.shape_cast %157 : vector<1x16x16xf32> to vector<16x16xf32>
    %159 = arith.addf %158, %13 : vector<16x16xf32>
    %cst_100 = arith.constant -1.000000e+00 : f32
    %cst_101 = arith.constant 1.000000e+00 : f32
    %160 = vector.broadcast %cst_100 : f32 to vector<16x16xf32>
    %161 = arith.maximumf %160, %159 : vector<16x16xf32>
    %162 = vector.broadcast %cst_101 : f32 to vector<16x16xf32>
    %163 = arith.minimumf %162, %161 : vector<16x16xf32>
    %c13_102 = arith.constant 13 : index
    %c0_103 = arith.constant 0 : index
    %c0_104 = arith.constant 0 : index
    %164 = vector.load %arg5[%c13_102, %c0_103, %c0_104] : memref<16x16x16xf32, #tpu.memory_space<vmem>>, vector<1x16x16xf32>
    %165 = vector.shape_cast %164 : vector<1x16x16xf32> to vector<16x16xf32>
    %166 = vector.shape_cast %163 : vector<16x16xf32> to vector<1x16x16xf32>
    tpu.vector_store %arg5[%c13_102, %c0_103, %c0_104], %166 {strides = array<i32>} : memref<16x16x16xf32, #tpu.memory_space<vmem>>, vector<1x16x16xf32>,
    %167 = arith.truncf %163 : vector<16x16xf32> to vector<16x16xbf16>
    %c14 = arith.constant 14 : index
    %c0_105 = arith.constant 0 : index
    %c0_106 = arith.constant 0 : index
    %168 = vector.load %arg3[%c14, %c0_105, %c0_106] : memref<16x16x16xf32, #tpu.memory_space<vmem>>, vector<1x16x16xf32>
    %169 = vector.shape_cast %168 : vector<1x16x16xf32> to vector<16x16xf32>
    %170 = arith.addf %169, %13 : vector<16x16xf32>
    %cst_107 = arith.constant -1.000000e+00 : f32
    %cst_108 = arith.constant 1.000000e+00 : f32
    %171 = vector.broadcast %cst_107 : f32 to vector<16x16xf32>
    %172 = arith.maximumf %171, %170 : vector<16x16xf32>
    %173 = vector.broadcast %cst_108 : f32 to vector<16x16xf32>
    %174 = arith.minimumf %173, %172 : vector<16x16xf32>
    %c14_109 = arith.constant 14 : index
    %c0_110 = arith.constant 0 : index
    %c0_111 = arith.constant 0 : index
    %175 = vector.load %arg5[%c14_109, %c0_110, %c0_111] : memref<16x16x16xf32, #tpu.memory_space<vmem>>, vector<1x16x16xf32>
    %176 = vector.shape_cast %175 : vector<1x16x16xf32> to vector<16x16xf32>
    %177 = vector.shape_cast %174 : vector<16x16xf32> to vector<1x16x16xf32>
    tpu.vector_store %arg5[%c14_109, %c0_110, %c0_111], %177 {strides = array<i32>} : memref<16x16x16xf32, #tpu.memory_space<vmem>>, vector<1x16x16xf32>,
    %178 = arith.truncf %174 : vector<16x16xf32> to vector<16x16xbf16>
    %c15 = arith.constant 15 : index
    %c0_112 = arith.constant 0 : index
    %c0_113 = arith.constant 0 : index
    %179 = vector.load %arg3[%c15, %c0_112, %c0_113] : memref<16x16x16xf32, #tpu.memory_space<vmem>>, vector<1x16x16xf32>
    %180 = vector.shape_cast %179 : vector<1x16x16xf32> to vector<16x16xf32>
    %181 = arith.addf %180, %13 : vector<16x16xf32>
    %cst_114 = arith.constant -1.000000e+00 : f32
    %cst_115 = arith.constant 1.000000e+00 : f32
    %182 = vector.broadcast %cst_114 : f32 to vector<16x16xf32>
    %183 = arith.maximumf %182, %181 : vector<16x16xf32>
    %184 = vector.broadcast %cst_115 : f32 to vector<16x16xf32>
    %185 = arith.minimumf %184, %183 : vector<16x16xf32>
    %c15_116 = arith.constant 15 : index
    %c0_117 = arith.constant 0 : index
    %c0_118 = arith.constant 0 : index
    %186 = vector.load %arg5[%c15_116, %c0_117, %c0_118] : memref<16x16x16xf32, #tpu.memory_space<vmem>>, vector<1x16x16xf32>
    %187 = vector.shape_cast %186 : vector<1x16x16xf32> to vector<16x16xf32>
    %188 = vector.shape_cast %185 : vector<16x16xf32> to vector<1x16x16xf32>
    tpu.vector_store %arg5[%c15_116, %c0_117, %c0_118], %188 {strides = array<i32>} : memref<16x16x16xf32, #tpu.memory_space<vmem>>, vector<1x16x16xf32>,
    %189 = arith.truncf %185 : vector<16x16xf32> to vector<16x16xbf16>
    %190 = vector.shape_cast %24 : vector<16x16xbf16> to vector<1x16x16xbf16>
    %191 = vector.shape_cast %35 : vector<16x16xbf16> to vector<1x16x16xbf16>
    %192 = vector.shape_cast %46 : vector<16x16xbf16> to vector<1x16x16xbf16>
    %193 = vector.shape_cast %57 : vector<16x16xbf16> to vector<1x16x16xbf16>
    %194 = vector.shape_cast %68 : vector<16x16xbf16> to vector<1x16x16xbf16>
    %195 = vector.shape_cast %79 : vector<16x16xbf16> to vector<1x16x16xbf16>
    %196 = vector.shape_cast %90 : vector<16x16xbf16> to vector<1x16x16xbf16>
    %197 = vector.shape_cast %101 : vector<16x16xbf16> to vector<1x16x16xbf16>
    %198 = vector.shape_cast %112 : vector<16x16xbf16> to vector<1x16x16xbf16>
    %199 = vector.shape_cast %123 : vector<16x16xbf16> to vector<1x16x16xbf16>
    %200 = vector.shape_cast %134 : vector<16x16xbf16> to vector<1x16x16xbf16>
    %201 = vector.shape_cast %145 : vector<16x16xbf16> to vector<1x16x16xbf16>
    %202 = vector.shape_cast %156 : vector<16x16xbf16> to vector<1x16x16xbf16>
    %203 = vector.shape_cast %167 : vector<16x16xbf16> to vector<1x16x16xbf16>
    %204 = vector.shape_cast %178 : vector<16x16xbf16> to vector<1x16x16xbf16>
    %205 = vector.shape_cast %189 : vector<16x16xbf16> to vector<1x16x16xbf16>
    %206 = tpu.concatenate %190, %191, %192, %193, %194, %195, %196, %197, %198, %199, %200, %201, %202, %203, %204, %205 in 0 : vector<1x16x16xbf16>, vector<1x16x16xbf16>, vector<1x16x16xbf16>, vector<1x16x16xbf16>, vector<1x16x16xbf16>, vector<1x16x16xbf16>, vector<1x16x16xbf16>, vector<1x16x16xbf16>, vector<1x16x16xbf16>, vector<1x16x16xbf16>, vector<1x16x16xbf16>, vector<1x16x16xbf16>, vector<1x16x16xbf16>, vector<1x16x16xbf16>, vector<1x16x16xbf16>, vector<1x16x16xbf16> -> vector<16x16x16xbf16>
    %207 = arith.truncf %9 : vector<16x2x16xf32> to vector<16x2x16xbf16>
    %cst_119 = arith.constant dense<0.000000e+00> : vector<16x2x16xf32>
    %208 = tpu.matmul %207, %206, %cst_119 {dimension_numbers = #tpu.dot_dimension_numbers<[2], [1], [1], [2], [0, 0, 0, 1, 1, 2], [0], [0]>} : vector<16x2x16xbf16>, vector<16x16x16xbf16>, vector<16x2x16xf32> -> vector<16x2x16xf32>
    %209 = arith.addf %9, %208 : vector<16x2x16xf32>
    %210 = vector.extract_strided_slice %209 {offsets = [0, 0, 0], sizes = [1, 2, 16], strides = [1, 1, 1]} : vector<16x2x16xf32> to vector<1x2x16xf32>
    %211 = vector.shape_cast %210 : vector<1x2x16xf32> to vector<2x16xf32>
    %212 = vector.extract_strided_slice %209 {offsets = [1, 0, 0], sizes = [1, 2, 16], strides = [1, 1, 1]} : vector<16x2x16xf32> to vector<1x2x16xf32>
    %213 = vector.shape_cast %212 : vector<1x2x16xf32> to vector<2x16xf32>
    %214 = vector.extract_strided_slice %209 {offsets = [2, 0, 0], sizes = [1, 2, 16], strides = [1, 1, 1]} : vector<16x2x16xf32> to vector<1x2x16xf32>
    %215 = vector.shape_cast %214 : vector<1x2x16xf32> to vector<2x16xf32>
    %216 = vector.extract_strided_slice %209 {offsets = [3, 0, 0], sizes = [1, 2, 16], strides = [1, 1, 1]} : vector<16x2x16xf32> to vector<1x2x16xf32>
    %217 = vector.shape_cast %216 : vector<1x2x16xf32> to vector<2x16xf32>
    %218 = vector.extract_strided_slice %209 {offsets = [4, 0, 0], sizes = [1, 2, 16], strides = [1, 1, 1]} : vector<16x2x16xf32> to vector<1x2x16xf32>
    %219 = vector.shape_cast %218 : vector<1x2x16xf32> to vector<2x16xf32>
    %220 = vector.extract_strided_slice %209 {offsets = [5, 0, 0], sizes = [1, 2, 16], strides = [1, 1, 1]} : vector<16x2x16xf32> to vector<1x2x16xf32>
    %221 = vector.shape_cast %220 : vector<1x2x16xf32> to vector<2x16xf32>
    %222 = vector.extract_strided_slice %209 {offsets = [6, 0, 0], sizes = [1, 2, 16], strides = [1, 1, 1]} : vector<16x2x16xf32> to vector<1x2x16xf32>
    %223 = vector.shape_cast %222 : vector<1x2x16xf32> to vector<2x16xf32>
    %224 = vector.extract_strided_slice %209 {offsets = [7, 0, 0], sizes = [1, 2, 16], strides = [1, 1, 1]} : vector<16x2x16xf32> to vector<1x2x16xf32>
    %225 = vector.shape_cast %224 : vector<1x2x16xf32> to vector<2x16xf32>
    %226 = vector.extract_strided_slice %209 {offsets = [8, 0, 0], sizes = [1, 2, 16], strides = [1, 1, 1]} : vector<16x2x16xf32> to vector<1x2x16xf32>
    %227 = vector.shape_cast %226 : vector<1x2x16xf32> to vector<2x16xf32>
    %228 = vector.extract_strided_slice %209 {offsets = [9, 0, 0], sizes = [1, 2, 16], strides = [1, 1, 1]} : vector<16x2x16xf32> to vector<1x2x16xf32>
    %229 = vector.shape_cast %228 : vector<1x2x16xf32> to vector<2x16xf32>
    %230 = vector.extract_strided_slice %209 {offsets = [10, 0, 0], sizes = [1, 2, 16], strides = [1, 1, 1]} : vector<16x2x16xf32> to vector<1x2x16xf32>
    %231 = vector.shape_cast %230 : vector<1x2x16xf32> to vector<2x16xf32>
    %232 = vector.extract_strided_slice %209 {offsets = [11, 0, 0], sizes = [1, 2, 16], strides = [1, 1, 1]} : vector<16x2x16xf32> to vector<1x2x16xf32>
    %233 = vector.shape_cast %232 : vector<1x2x16xf32> to vector<2x16xf32>
    %234 = vector.extract_strided_slice %209 {offsets = [12, 0, 0], sizes = [1, 2, 16], strides = [1, 1, 1]} : vector<16x2x16xf32> to vector<1x2x16xf32>
    %235 = vector.shape_cast %234 : vector<1x2x16xf32> to vector<2x16xf32>
    %236 = vector.extract_strided_slice %209 {offsets = [13, 0, 0], sizes = [1, 2, 16], strides = [1, 1, 1]} : vector<16x2x16xf32> to vector<1x2x16xf32>
    %237 = vector.shape_cast %236 : vector<1x2x16xf32> to vector<2x16xf32>
    %238 = vector.extract_strided_slice %209 {offsets = [14, 0, 0], sizes = [1, 2, 16], strides = [1, 1, 1]} : vector<16x2x16xf32> to vector<1x2x16xf32>
    %239 = vector.shape_cast %238 : vector<1x2x16xf32> to vector<2x16xf32>
    %240 = vector.extract_strided_slice %209 {offsets = [15, 0, 0], sizes = [1, 2, 16], strides = [1, 1, 1]} : vector<16x2x16xf32> to vector<1x2x16xf32>
    %241 = vector.shape_cast %240 : vector<1x2x16xf32> to vector<2x16xf32>
    %242 = tpu.concatenate %211, %213, %215, %217, %219, %221, %223, %225, %227, %229, %231, %233, %235, %237, %239, %241 in 1 : vector<2x16xf32>, vector<2x16xf32>, vector<2x16xf32>, vector<2x16xf32>, vector<2x16xf32>, vector<2x16xf32>, vector<2x16xf32>, vector<2x16xf32>, vector<2x16xf32>, vector<2x16xf32>, vector<2x16xf32>, vector<2x16xf32>, vector<2x16xf32>, vector<2x16xf32>, vector<2x16xf32>, vector<2x16xf32> -> vector<2x256xf32>
    %c0_120 = arith.constant 0 : index
    %c0_121 = arith.constant 0 : index
    %243 = vector.load %arg4[%c0_120, %c0_121] : memref<2x256xf32, #tpu.memory_space<vmem>>, vector<2x256xf32>
    tpu.vector_store %arg4[%c0_120, %c0_121], %242 {strides = array<i32>} : memref<2x256xf32, #tpu.memory_space<vmem>>, vector<2x256xf32>,
    return
  }
  func.func @transform_0(%arg0: i32) -> (i32, i32) {
    %c0_i32 = arith.constant 0 : i32
    %c0_i32_0 = arith.constant 0 : i32
    %c0_i32_1 = arith.constant 0 : i32
    return %c0_i32, %c0_i32_0 : i32, i32
  }
  func.func @transform_1(%arg0: i32) -> (i32, i32) {
    %c0_i32 = arith.constant 0 : i32
    %c0_i32_0 = arith.constant 0 : i32
    %c0_i32_1 = arith.constant 0 : i32
    return %c0_i32, %c0_i32_0 : i32, i32
  }
  func.func @transform_2(%arg0: i32) -> (i32, i32, i32) {
    %c0_i32 = arith.constant 0 : i32
    %c0_i32_0 = arith.constant 0 : i32
    %c0_i32_1 = arith.constant 0 : i32
    %c0_i32_2 = arith.constant 0 : i32
    return %c0_i32, %c0_i32_0, %c0_i32_1 : i32, i32, i32
  }
  func.func @transform_3(%arg0: i32) -> (i32, i32) {
    %c0_i32 = arith.constant 0 : i32
    %c0_i32_0 = arith.constant 0 : i32
    %c0_i32_1 = arith.constant 0 : i32
    return %c0_i32, %c0_i32_0 : i32, i32
  }
  func.func @transform_4(%arg0: i32) -> (i32, i32, i32) {
    %c0_i32 = arith.constant 0 : i32
    %c0_i32_0 = arith.constant 0 : i32
    %c0_i32_1 = arith.constant 0 : i32
    %c0_i32_2 = arith.constant 0 : i32
    return %c0_i32, %c0_i32_0, %c0_i32_1 : i32, i32, i32
  }
}

</mosaic_0001>

<llo_original>
// kernel: multi_layer_hebbian_forward.2
$region0: #{multi_layer_hebbian_forward.2}
  #allocation0 [shape = 'u32[]', space=smem, size = 0x4, offset = 0x4, fixed_abs, tag = 'smem constant byte address 0x4 - core index']
  #allocation1 [shape = 'u32[144,128]{1,0:T(1,128)}', space=vmem, size = 0x12000, scoped, tag = 'internal scratch']
  %s0 = inlined_call_operand.vmem [shape: bf16[37,128], index: 0, kind: input, shape index: {}]
  %s1 = inlined_call_operand.vmem [shape: bf16[8,37], index: 1, kind: input, shape index: {}]
  %s2 = inlined_call_operand.vmem [shape: f32[8,64,64], index: 2, kind: input, shape index: {}, may-alias: {2,4}]
  %s3 = inlined_call_operand.vmem [shape: f32[8,128], index: 3, kind: output, shape index: {0}]
  %s4 = inlined_call_operand.vmem [shape: f32[8,64,64], index: 4, kind: output, shape index: {1}, may-alias: {2,4}]
  %5 = xla_tuple %s3, %s4
  %s6 = sld [smem:[#allocation0]]
  $region30: #{multi_layer_hebbian_forward.2} parent=0
    _
  %s8 = ssub.s32 1, %s6
  %s9 = scalar_select 0, %s8, %s6
  // Predicated region
  $region2: #{multi_layer_hebbian_forward.2} parent=0 // pred_check
    _
  $region3: #{multi_layer_hebbian_forward.2} parent=0 // pred_check_branch
    %11 = sbr.rel (0) target = $region5
  $region4: #{multi_layer_hebbian_forward.2} parent=0 // pred_region
    _
  $region5: #{multi_layer_hebbian_forward.2} parent=0 // pred_fallthru
    _
  // Predicated region
  $region6: #{multi_layer_hebbian_forward.2} parent=0 // pred_check
    _
  $region7: #{multi_layer_hebbian_forward.2} parent=0 // pred_check_branch
    %13 = sbr.rel (0) target = $region9
  $region8: #{multi_layer_hebbian_forward.2} parent=0 // pred_region
    _
  $region9: #{multi_layer_hebbian_forward.2} parent=0 // pred_fallthru
    _
  // Predicated region
  $region10: #{multi_layer_hebbian_forward.2} parent=0 // pred_check
    _
  $region11: #{multi_layer_hebbian_forward.2} parent=0 // pred_check_branch
    %15 = sbr.rel (0) target = $region13
  $region12: #{multi_layer_hebbian_forward.2} parent=0 // pred_region
    _
  $region13: #{multi_layer_hebbian_forward.2} parent=0 // pred_fallthru
    _
  %v17 = vld [vmem:[%s1] sm:$0xf]
  %v18 = vld [vmem:[%s0] sm:$0xf]
  %v19 = vld [vmem:[%s0 + $0x4] sm:$0xf]
  %v20 = vld [vmem:[%s0 + $0x8] sm:$0xf]
  %v21 = vld [vmem:[%s0 + $0xc] sm:$0xf]
  %v22 = vld [vmem:[%s0 + $0x10] sm:$0x7]
  %v28 = vunpack.c.l.b16 %v18
  %v29 = vunpack.c.l.b16 %v19
  %v30 = vunpack.c.l.b16 %v20
  %v31 = vunpack.c.l.b16 %v21
  %v32 = vunpack.c.l.b16 %v22
  %v33 = vpack.c.b16 %v29, %v28
  %v34 = vpack.c.b16 %v31, %v30
  %v35 = vpack.c.b16 %v32, %v32
  %vm38 = vcmask 302080
  %v40 = vsel %vm38, %v17, 0
  %vm42 = vcmask 1041408
  %vm43 = vcmask 1042432
  %v44 = vsel %vm42, 4294967295, 65535
  %v45 = vsel %vm43, %v44, 0
  %v47 = vand.u32 %v35, %v45
  %49 = vmatprep.subr.bf16.mxu0 0
  %50 = vmatpush1.bf16.msra.mxu0 0
  %51 = vmatprep.subr.bf16.mxu0 0
  %52 = vmatpush1.bf16.msra.mxu0 0
  %53 = vmatprep.subr.bf16.mxu0 0
  %54 = vmatpush1.bf16.msra.mxu0 0
  %55 = vmatprep.subr.bf16.mxu0 0
  %56 = vmatpush1.bf16.msra.mxu0 0
  %57 = vmatprep.subr.bf16.mxu0 0
  %58 = vmatpush1.bf16.msra.mxu0 0
  %59 = vmatprep.subr.bf16.mxu0 0
  %60 = vmatpush1.bf16.msra.mxu0 %v47
  %61 = vmatprep.subr.bf16.mxu0 0
  %62 = vmatpush1.bf16.msra.mxu0 %v34
  %63 = vmatprep.subr.bf16.mxu0 0
  %64 = vmatpush1.bf16.msra.mxu0 %v33
  %65 = vmatprep.subr.bf16.mxu0 0
  %66 = vmatpush2.bf16.msra.mxu0 0
  %67 = vmatprep.subr.bf16.mxu0 0
  %68 = vmatpush2.bf16.msra.mxu0 0
  %69 = vmatprep.subr.bf16.mxu0 0
  %70 = vmatpush2.bf16.msra.mxu0 0
  %71 = vmatprep.subr.bf16.mxu0 0
  %72 = vmatpush2.bf16.msra.mxu0 0
  %73 = vmatprep.subr.bf16.mxu0 0
  %74 = vmatpush2.bf16.msra.mxu0 0
  %75 = vmatprep.subr.bf16.mxu0 0
  %76 = vmatpush2.bf16.msra.mxu0 0
  %77 = vmatprep.subr.bf16.mxu0 0
  %78 = vmatpush2.bf16.msra.mxu0 0
  %79 = vmatprep.subr.bf16.mxu0 0
  %80 = vmatpush2.bf16.msra.mxu0 0
  %81 = vmatprep.mubr.bf16.mxu0 0
  %82 = vmatmul.mubr.bf16.gmra.mxu0 %v40
  %v83 = vpop.f32.mrf.mxu0
  %v84 = vadd.f32 0.0, %v83
  %v85 = vpop.f32.mrf.mxu0
  %v86 = vpop.f32.mrf.mxu0
  %v87 = vpop.f32.mrf.mxu0
  %88 = vdwg.mxu0
  %v89 = vmax.f32 %v84, 0.0
  %v91 = vcombine.high %v89, %v89
  %v93 = vunpack.c.l.s4 1966171168
  %v94 = vunpack.c.0.s8 %v93
  %v95 = vlaneseq
  %v96 = vshrl.u32 %v95, 7
  %v97 = vsub.s32 %v94, %v96
  %v98 = vrot.slane %v89, %v97
  %v100 = vunpack.c.l.s4 1966171168
  %v101 = vunpack.c.0.s8 %v100
  %v102 = vlaneseq
  %v103 = vshrl.u32 %v102, 7
  %v104 = vsub.s32 %v101, %v103
  %v105 = vrot.slane %v91, %v104
  %v106 = vcombine.high %v98, %v98
  %v107 = vcombine.high %v105, %v105
  %v109 = vunpack.c.l.s4 1966171168
  %v110 = vunpack.c.0.s8 %v109
  %v111 = vlaneseq
  %v112 = vshrl.u32 %v111, 7
  %v113 = vsub.s32 %v110, %v112
  %v114 = vrot.slane %v98, %v113
  %v116 = vunpack.c.l.s4 1966171168
  %v117 = vunpack.c.0.s8 %v116
  %v118 = vlaneseq
  %v119 = vshrl.u32 %v118, 7
  %v120 = vsub.s32 %v117, %v119
  %v121 = vrot.slane %v105, %v120
  %v123 = vunpack.c.l.s4 1966171168
  %v124 = vunpack.c.0.s8 %v123
  %v125 = vlaneseq
  %v126 = vshrl.u32 %v125, 7
  %v127 = vsub.s32 %v124, %v126
  %v128 = vrot.slane %v106, %v127
  %v130 = vunpack.c.l.s4 1966171168
  %v131 = vunpack.c.0.s8 %v130
  %v132 = vlaneseq
  %v133 = vshrl.u32 %v132, 7
  %v134 = vsub.s32 %v131, %v133
  %v135 = vrot.slane %v107, %v134
  %v136 = vcombine.high %v114, %v114
  %v137 = vcombine.high %v121, %v121
  %v138 = vcombine.high %v128, %v128
  %v139 = vcombine.high %v135, %v135
  %v148 = vlaneseq
  %v149 = vshrl.u32 %v148, 7
  %v150 = vsub.s32 0, %v149
  %v151 = vrot.slane %v114, %v150
  %v152 = vlaneseq
  %v153 = vshrl.u32 %v152, 7
  %v154 = vsub.s32 0, %v153
  %v155 = vrot.slane %v128, %v154
  %v156 = vlaneseq
  %v157 = vshrl.u32 %v156, 7
  %v158 = vsub.s32 0, %v157
  %v159 = vrot.slane %v136, %v158
  %v160 = vlaneseq
  %v161 = vshrl.u32 %v160, 7
  %v162 = vsub.s32 0, %v161
  %v163 = vrot.slane %v138, %v162
  %v164 = vlaneseq
  %v165 = vshrl.u32 %v164, 7
  %v166 = vsub.s32 0, %v165
  %v167 = vrot.slane %v121, %v166
  %v168 = vlaneseq
  %v169 = vshrl.u32 %v168, 7
  %v170 = vsub.s32 0, %v169
  %v171 = vrot.slane %v135, %v170
  %v172 = vlaneseq
  %v173 = vshrl.u32 %v172, 7
  %v174 = vsub.s32 0, %v173
  %v175 = vrot.slane %v137, %v174
  %v176 = vlaneseq
  %v177 = vshrl.u32 %v176, 7
  %v178 = vsub.s32 0, %v177
  %v179 = vrot.slane %v139, %v178
  %180 = vrot.lane.b32.xlu0 %v151, 64
  %v181 = vpop.permute.xlu0 %180
  %182 = vrot.lane.b32.xlu0 %v155, 64
  %v183 = vpop.permute.xlu0 %182
  %184 = vrot.lane.b32.xlu0 %v159, 64
  %v185 = vpop.permute.xlu0 %184
  %186 = vrot.lane.b32.xlu0 %v163, 64
  %v187 = vpop.permute.xlu0 %186
  %188 = vrot.lane.b32.xlu0 %v167, 64
  %v189 = vpop.permute.xlu0 %188
  %190 = vrot.lane.b32.xlu0 %v171, 64
  %v191 = vpop.permute.xlu0 %190
  %192 = vrot.lane.b32.xlu0 %v175, 64
  %v193 = vpop.permute.xlu0 %192
  %194 = vrot.lane.b32.xlu0 %v179, 64
  %v195 = vpop.permute.xlu0 %194
  %vm204 = vcmask 1040384
  %v205 = vsel %vm204, %v114, %v181
  %v206 = vsel %vm204, %v128, %v183
  %v207 = vsel %vm204, %v136, %v185
  %v208 = vsel %vm204, %v138, %v187
  %v209 = vsel %vm204, %v121, %v189
  %v210 = vsel %vm204, %v135, %v191
  %v211 = vsel %vm204, %v137, %v193
  %v212 = vsel %vm204, %v139, %v195
  %v221 = vcombine.low %v205, %v206
  %v222 = vcombine.low %v207, %v208
  %v224 = vunpack.c.l.s4 1983009808
  %v225 = vunpack.c.0.s8 %v224
  %v226 = vlaneseq
  %v227 = vshrl.u32 %v226, 7
  %v228 = vsub.s32 %v225, %v227
  %v229 = vrot.slane %v221, %v228
  %v231 = vunpack.c.l.s4 1983009808
  %v232 = vunpack.c.0.s8 %v231
  %v233 = vlaneseq
  %v234 = vshrl.u32 %v233, 7
  %v235 = vsub.s32 %v232, %v234
  %v236 = vrot.slane %v222, %v235
  %v237 = vcombine.low %v229, %v236
  %v238 = vcombine.low %v209, %v210
  %v239 = vcombine.low %v211, %v212
  %v241 = vunpack.c.l.s4 1983009808
  %v242 = vunpack.c.0.s8 %v241
  %v243 = vlaneseq
  %v244 = vshrl.u32 %v243, 7
  %v245 = vsub.s32 %v242, %v244
  %v246 = vrot.slane %v238, %v245
  %v248 = vunpack.c.l.s4 1983009808
  %v249 = vunpack.c.0.s8 %v248
  %v250 = vlaneseq
  %v251 = vshrl.u32 %v250, 7
  %v252 = vsub.s32 %v249, %v251
  %v253 = vrot.slane %v239, %v252
  %v254 = vcombine.low %v246, %v253
  %257 = vxpose.xlu0.b32.start [1/16] %v237, 128
  %258 = vxpose.xlu0.b32.cont [2/16] %v254, 128
  %259 = vxpose.xlu0.b32.cont [3/16] 0.0, 128
  %260 = vxpose.xlu0.b32.cont [4/16] 0.0, 128
  %261 = vxpose.xlu0.b32.cont [5/16] 0.0, 128
  %262 = vxpose.xlu0.b32.cont [6/16] 0.0, 128
  %263 = vxpose.xlu0.b32.cont [7/16] 0.0, 128
  %264 = vxpose.xlu0.b32.cont [8/16] 0.0, 128
  %265 = vxpose.xlu0.b32.cont [9/16] 0.0, 128
  %266 = vxpose.xlu0.b32.cont [10/16] 0.0, 128
  %267 = vxpose.xlu0.b32.cont [11/16] 0.0, 128
  %268 = vxpose.xlu0.b32.cont [12/16] 0.0, 128
  %269 = vxpose.xlu0.b32.cont [13/16] 0.0, 128
  %270 = vxpose.xlu0.b32.cont [14/16] 0.0, 128
  %271 = vxpose.xlu0.b32.cont [15/16] 0.0, 128
  %272 = vxpose.xlu0.b32.end [16/16] 0.0, 128
  %v273 = vpop.trf.xlu0
  %v274 = vpop.trf.xlu0
  %v275 = vpop.trf.xlu0
  %v276 = vpop.trf.xlu0
  %v277 = vpop.trf.xlu0
  %v278 = vpop.trf.xlu0
  %v279 = vpop.trf.xlu0
  %v280 = vpop.trf.xlu0
  %v281 = vpop.trf.xlu0
  %v282 = vpop.trf.xlu0
  %v283 = vpop.trf.xlu0
  %v284 = vpop.trf.xlu0
  %v285 = vpop.trf.xlu0
  %v286 = vpop.trf.xlu0
  %v287 = vpop.trf.xlu0
  %v288 = vpop.trf.xlu0
  %vm289 = vcmask 130048
  %v291 = vsel %vm289, %v273, 0
  %v294 = vsel %vm289, %v274, 0
  %v297 = vsel %vm289, %v275, 0
  %v300 = vsel %vm289, %v276, 0
  %v303 = vsel %vm289, %v277, 0
  %v306 = vsel %vm289, %v278, 0
  %v309 = vsel %vm289, %v279, 0
  %v312 = vsel %vm289, %v280, 0
  %314 = vmatprep.subr.mxu0 0.0
  %315 = vmatpush1.msra.mxu0 0.0
  %316 = vmatprep.subr.mxu0 0.0
  %317 = vmatpush1.msra.mxu0 0.0
  %318 = vmatprep.subr.mxu0 0.0
  %319 = vmatpush1.msra.mxu0 0.0
  %320 = vmatprep.subr.mxu0 0.0
  %321 = vmatpush1.msra.mxu0 0.0
  %322 = vmatprep.subr.mxu0 0.0
  %323 = vmatpush1.msra.mxu0 0.0
  %324 = vmatprep.subr.mxu0 0.0
  %325 = vmatpush1.msra.mxu0 0.0
  %326 = vmatprep.subr.mxu0 0.0
  %327 = vmatpush1.msra.mxu0 0.0
  %328 = vmatprep.subr.mxu0 0.0
  %329 = vmatpush1.msra.mxu0 0.0
  %330 = vmatprep.subr.mxu0 0.0
  %331 = vmatpush1.msra.mxu0 0.0
  %332 = vmatprep.subr.mxu0 0.0
  %333 = vmatpush1.msra.mxu0 0.0
  %334 = vmatprep.subr.mxu0 0.0
  %335 = vmatpush1.msra.mxu0 0.0
  %336 = vmatprep.subr.mxu0 0.0
  %337 = vmatpush1.msra.mxu0 0.0
  %338 = vmatprep.subr.mxu0 0.0
  %339 = vmatpush1.msra.mxu0 0.0
  %340 = vmatprep.subr.mxu0 0.0
  %341 = vmatpush1.msra.mxu0 0.0
  %342 = vmatprep.subr.mxu0 0.0
  %343 = vmatpush1.msra.mxu0 %v254
  %344 = vmatprep.subr.mxu0 0.0
  %345 = vmatpush1.msra.mxu0 %v237
  %346 = vmatprep.subr.mxu0 0.0
  %347 = vmatpush2.msra.mxu0 0.0
  %348 = vmatprep.subr.mxu0 0.0
  %349 = vmatpush2.msra.mxu0 0.0
  %350 = vmatprep.subr.mxu0 0.0
  %351 = vmatpush2.msra.mxu0 0.0
  %352 = vmatprep.subr.mxu0 0.0
  %353 = vmatpush2.msra.mxu0 0.0
  %354 = vmatprep.subr.mxu0 0.0
  %355 = vmatpush2.msra.mxu0 0.0
  %356 = vmatprep.subr.mxu0 0.0
  %357 = vmatpush2.msra.mxu0 0.0
  %358 = vmatprep.subr.mxu0 0.0
  %359 = vmatpush2.msra.mxu0 0.0
  %360 = vmatprep.subr.mxu0 0.0
  %361 = vmatpush2.msra.mxu0 0.0
  %362 = vmatprep.subr.mxu0 0.0
  %363 = vmatpush2.msra.mxu0 0.0
  %364 = vmatprep.subr.mxu0 0.0
  %365 = vmatpush2.msra.mxu0 0.0
  %366 = vmatprep.subr.mxu0 0.0
  %367 = vmatpush2.msra.mxu0 0.0
  %368 = vmatprep.subr.mxu0 0.0
  %369 = vmatpush2.msra.mxu0 0.0
  %370 = vmatprep.subr.mxu0 0.0
  %371 = vmatpush2.msra.mxu0 0.0
  %372 = vmatprep.subr.mxu0 0.0
  %373 = vmatpush2.msra.mxu0 0.0
  %374 = vmatprep.subr.mxu0 0.0
  %375 = vmatpush2.msra.mxu0 0.0
  %376 = vmatprep.subr.mxu0 0.0
  %377 = vmatpush2.msra.mxu0 0.0
  %378 = vmatprep.mubr.f32.mxu0 0.0
  %379 = vmatmul.mubr.f32.gmra.mxu0 %v291
  %v380 = vpop.f32.mrf.mxu0
  %v381 = vadd.f32 0.0, %v380
  %v382 = vpop.f32.mrf.mxu0
  %383 = vmatprep.mubr.f32.mxu0 0.0
  %384 = vmatmul.mubr.f32.gmra.mxu0 %v294
  %v385 = vpop.f32.mrf.mxu0
  %v386 = vadd.f32 0.0, %v385
  %v387 = vpop.f32.mrf.mxu0
  %388 = vmatprep.mubr.f32.mxu0 0.0
  %389 = vmatmul.mubr.f32.gmra.mxu0 %v297
  %v390 = vpop.f32.mrf.mxu0
  %v391 = vadd.f32 0.0, %v390
  %v392 = vpop.f32.mrf.mxu0
  %393 = vmatprep.mubr.f32.mxu0 0.0
  %394 = vmatmul.mubr.f32.gmra.mxu0 %v300
  %v395 = vpop.f32.mrf.mxu0
  %v396 = vadd.f32 0.0, %v395
  %v397 = vpop.f32.mrf.mxu0
  %398 = vmatprep.mubr.f32.mxu0 0.0
  %399 = vmatmul.mubr.f32.gmra.mxu0 %v303
  %v400 = vpop.f32.mrf.mxu0
  %v401 = vadd.f32 0.0, %v400
  %v402 = vpop.f32.mrf.mxu0
  %403 = vmatprep.mubr.f32.mxu0 0.0
  %404 = vmatmul.mubr.f32.gmra.mxu0 %v306
  %v405 = vpop.f32.mrf.mxu0
  %v406 = vadd.f32 0.0, %v405
  %v407 = vpop.f32.mrf.mxu0
  %408 = vmatprep.mubr.f32.mxu0 0.0
  %409 = vmatmul.mubr.f32.gmra.mxu0 %v309
  %v410 = vpop.f32.mrf.mxu0
  %v411 = vadd.f32 0.0, %v410
  %v412 = vpop.f32.mrf.mxu0
  %413 = vmatprep.mubr.f32.mxu0 0.0
  %414 = vmatmul.mubr.f32.gmra.mxu0 %v312
  %v415 = vpop.f32.mrf.mxu0
  %v416 = vadd.f32 0.0, %v415
  %v417 = vpop.f32.mrf.mxu0
  %418 = vdwg.mxu0
  %v419 = vmul.f32 %v381, 0.000125
  %v420 = vmul.f32 %v386, 0.000125
  %v421 = vmul.f32 %v391, 0.000125
  %v422 = vmul.f32 %v396, 0.000125
  %v423 = vmul.f32 %v401, 0.000125
  %v424 = vmul.f32 %v406, 0.000125
  %v425 = vmul.f32 %v411, 0.000125
  %v426 = vmul.f32 %v416, 0.000125
  %v427 = vld [vmem:[%s2] sm:$0xff]
  %v428 = vld [vmem:[%s2 + $0x8] sm:$0xff]
  %v429 = vld [vmem:[%s2 + $0x10] sm:$0xff]
  %v430 = vld [vmem:[%s2 + $0x18] sm:$0xff]
  %v431 = vld [vmem:[%s2 + $0x20] sm:$0xff]
  %v432 = vld [vmem:[%s2 + $0x28] sm:$0xff]
  %v433 = vld [vmem:[%s2 + $0x30] sm:$0xff]
  %v434 = vld [vmem:[%s2 + $0x38] sm:$0xff]
  %v435 = vadd.f32 %v427, %v419
  %v436 = vadd.f32 %v428, %v420
  %v437 = vadd.f32 %v429, %v421
  %v438 = vadd.f32 %v430, %v422
  %v439 = vadd.f32 %v431, %v423
  %v440 = vadd.f32 %v432, %v424
  %v441 = vadd.f32 %v433, %v425
  %v442 = vadd.f32 %v434, %v426
  %v443 = vmax.f32 %v435, -1.0
  %v444 = vmax.f32 %v436, -1.0
  %v445 = vmax.f32 %v437, -1.0
  %v446 = vmax.f32 %v438, -1.0
  %v447 = vmax.f32 %v439, -1.0
  %v448 = vmax.f32 %v440, -1.0
  %v449 = vmax.f32 %v441, -1.0
  %v450 = vmax.f32 %v442, -1.0
  %v451 = vmin.f32 %v443, 1.0
  %v452 = vmin.f32 %v444, 1.0
  %v453 = vmin.f32 %v445, 1.0
  %v454 = vmin.f32 %v446, 1.0
  %v455 = vmin.f32 %v447, 1.0
  %v456 = vmin.f32 %v448, 1.0
  %v457 = vmin.f32 %v449, 1.0
  %v458 = vmin.f32 %v450, 1.0
  %vm459 = vcmask 523264
  %460 = vst.msk [vmem:[%s4] sm:$0xff] %vm459, %v451
  %461 = vst.msk [vmem:[%s4 + $0x8] sm:$0xff] %vm459, %v452
  %462 = vst.msk [vmem:[%s4 + $0x10] sm:$0xff] %vm459, %v453
  %463 = vst.msk [vmem:[%s4 + $0x18] sm:$0xff] %vm459, %v454
  %464 = vst.msk [vmem:[%s4 + $0x20] sm:$0xff] %vm459, %v455
  %465 = vst.msk [vmem:[%s4 + $0x28] sm:$0xff] %vm459, %v456
  %466 = vst.msk [vmem:[%s4 + $0x30] sm:$0xff] %vm459, %v457
  %467 = vst.msk [vmem:[%s4 + $0x38] sm:$0xff] %vm459, %v458
  %v468 = vpack.c.bf16 %v452, %v451
  %v469 = vpack.c.bf16 %v454, %v453
  %v470 = vpack.c.bf16 %v456, %v455
  %v471 = vpack.c.bf16 %v458, %v457
  %s472 = scalar_lea.vmem %s2, 64
  %v473 = vld [vmem:[%s472] sm:$0xff]
  %v474 = vld [vmem:[%s472 + $0x8] sm:$0xff]
  %v475 = vld [vmem:[%s472 + $0x10] sm:$0xff]
  %v476 = vld [vmem:[%s472 + $0x18] sm:$0xff]
  %v477 = vld [vmem:[%s472 + $0x20] sm:$0xff]
  %v478 = vld [vmem:[%s472 + $0x28] sm:$0xff]
  %v479 = vld [vmem:[%s472 + $0x30] sm:$0xff]
  %v480 = vld [vmem:[%s472 + $0x38] sm:$0xff]
  %v481 = vadd.f32 %v473, %v419
  %v482 = vadd.f32 %v474, %v420
  %v483 = vadd.f32 %v475, %v421
  %v484 = vadd.f32 %v476, %v422
  %v485 = vadd.f32 %v477, %v423
  %v486 = vadd.f32 %v478, %v424
  %v487 = vadd.f32 %v479, %v425
  %v488 = vadd.f32 %v480, %v426
  %v489 = vmax.f32 %v481, -1.0
  %v490 = vmax.f32 %v482, -1.0
  %v491 = vmax.f32 %v483, -1.0
  %v492 = vmax.f32 %v484, -1.0
  %v493 = vmax.f32 %v485, -1.0
  %v494 = vmax.f32 %v486, -1.0
  %v495 = vmax.f32 %v487, -1.0
  %v496 = vmax.f32 %v488, -1.0
  %v497 = vmin.f32 %v489, 1.0
  %v498 = vmin.f32 %v490, 1.0
  %v499 = vmin.f32 %v491, 1.0
  %v500 = vmin.f32 %v492, 1.0
  %v501 = vmin.f32 %v493, 1.0
  %v502 = vmin.f32 %v494, 1.0
  %v503 = vmin.f32 %v495, 1.0
  %v504 = vmin.f32 %v496, 1.0
  %s505 = scalar_lea.vmem %s4, 64
  %506 = vst.msk [vmem:[%s505] sm:$0xff] %vm459, %v497
  %507 = vst.msk [vmem:[%s505 + $0x8] sm:$0xff] %vm459, %v498
  %508 = vst.msk [vmem:[%s505 + $0x10] sm:$0xff] %vm459, %v499
  %509 = vst.msk [vmem:[%s505 + $0x18] sm:$0xff] %vm459, %v500
  %510 = vst.msk [vmem:[%s505 + $0x20] sm:$0xff] %vm459, %v501
  %511 = vst.msk [vmem:[%s505 + $0x28] sm:$0xff] %vm459, %v502
  %512 = vst.msk [vmem:[%s505 + $0x30] sm:$0xff] %vm459, %v503
  %513 = vst.msk [vmem:[%s505 + $0x38] sm:$0xff] %vm459, %v504
  %v514 = vpack.c.bf16 %v498, %v497
  %v515 = vpack.c.bf16 %v500, %v499
  %v516 = vpack.c.bf16 %v502, %v501
  %v517 = vpack.c.bf16 %v504, %v503
  %s518 = scalar_lea.vmem %s2, 128
  %v519 = vld [vmem:[%s518] sm:$0xff]
  %v520 = vld [vmem:[%s518 + $0x8] sm:$0xff]
  %v521 = vld [vmem:[%s518 + $0x10] sm:$0xff]
  %v522 = vld [vmem:[%s518 + $0x18] sm:$0xff]
  %v523 = vld [vmem:[%s518 + $0x20] sm:$0xff]
  %v524 = vld [vmem:[%s518 + $0x28] sm:$0xff]
  %v525 = vld [vmem:[%s518 + $0x30] sm:$0xff]
  %v526 = vld [vmem:[%s518 + $0x38] sm:$0xff]
  %v527 = vadd.f32 %v519, %v419
  %v528 = vadd.f32 %v520, %v420
  %v529 = vadd.f32 %v521, %v421
  %v530 = vadd.f32 %v522, %v422
  %v531 = vadd.f32 %v523, %v423
  %v532 = vadd.f32 %v524, %v424
  %v533 = vadd.f32 %v525, %v425
  %v534 = vadd.f32 %v526, %v426
  %v535 = vmax.f32 %v527, -1.0
  %v536 = vmax.f32 %v528, -1.0
  %v537 = vmax.f32 %v529, -1.0
  %v538 = vmax.f32 %v530, -1.0
  %v539 = vmax.f32 %v531, -1.0
  %v540 = vmax.f32 %v532, -1.0
  %v541 = vmax.f32 %v533, -1.0
  %v542 = vmax.f32 %v534, -1.0
  %v543 = vmin.f32 %v535, 1.0
  %v544 = vmin.f32 %v536, 1.0
  %v545 = vmin.f32 %v537, 1.0
  %v546 = vmin.f32 %v538, 1.0
  %v547 = vmin.f32 %v539, 1.0
  %v548 = vmin.f32 %v540, 1.0
  %v549 = vmin.f32 %v541, 1.0
  %v550 = vmin.f32 %v542, 1.0
  %s551 = scalar_lea.vmem %s4, 128
  %552 = vst.msk [vmem:[%s551] sm:$0xff] %vm459, %v543
  %553 = vst.msk [vmem:[%s551 + $0x8] sm:$0xff] %vm459, %v544
  %554 = vst.msk [vmem:[%s551 + $0x10] sm:$0xff] %vm459, %v545
  %555 = vst.msk [vmem:[%s551 + $0x18] sm:$0xff] %vm459, %v546
  %556 = vst.msk [vmem:[%s551 + $0x20] sm:$0xff] %vm459, %v547
  %557 = vst.msk [vmem:[%s551 + $0x28] sm:$0xff] %vm459, %v548
  %558 = vst.msk [vmem:[%s551 + $0x30] sm:$0xff] %vm459, %v549
  %559 = vst.msk [vmem:[%s551 + $0x38] sm:$0xff] %vm459, %v550
  %v560 = vpack.c.bf16 %v544, %v543
  %v561 = vpack.c.bf16 %v546, %v545
  %v562 = vpack.c.bf16 %v548, %v547
  %v563 = vpack.c.bf16 %v550, %v549
  %s564 = scalar_lea.vmem %s2, 192
  %v565 = vld [vmem:[%s564] sm:$0xff]
  %v566 = vld [vmem:[%s564 + $0x8] sm:$0xff]
  %v567 = vld [vmem:[%s564 + $0x10] sm:$0xff]
  %v568 = vld [vmem:[%s564 + $0x18] sm:$0xff]
  %v569 = vld [vmem:[%s564 + $0x20] sm:$0xff]
  %v570 = vld [vmem:[%s564 + $0x28] sm:$0xff]
  %v571 = vld [vmem:[%s564 + $0x30] sm:$0xff]
  %v572 = vld [vmem:[%s564 + $0x38] sm:$0xff]
  %v573 = vadd.f32 %v565, %v419
  %v574 = vadd.f32 %v566, %v420
  %v575 = vadd.f32 %v567, %v421
  %v576 = vadd.f32 %v568, %v422
  %v577 = vadd.f32 %v569, %v423
  %v578 = vadd.f32 %v570, %v424
  %v579 = vadd.f32 %v571, %v425
  %v580 = vadd.f32 %v572, %v426
  %v581 = vmax.f32 %v573, -1.0
  %v582 = vmax.f32 %v574, -1.0
  %v583 = vmax.f32 %v575, -1.0
  %v584 = vmax.f32 %v576, -1.0
  %v585 = vmax.f32 %v577, -1.0
  %v586 = vmax.f32 %v578, -1.0
  %v587 = vmax.f32 %v579, -1.0
  %v588 = vmax.f32 %v580, -1.0
  %v589 = vmin.f32 %v581, 1.0
  %v590 = vmin.f32 %v582, 1.0
  %v591 = vmin.f32 %v583, 1.0
  %v592 = vmin.f32 %v584, 1.0
  %v593 = vmin.f32 %v585, 1.0
  %v594 = vmin.f32 %v586, 1.0
  %v595 = vmin.f32 %v587, 1.0
  %v596 = vmin.f32 %v588, 1.0
  %s597 = scalar_lea.vmem %s4, 192
  %598 = vst.msk [vmem:[%s597] sm:$0xff] %vm459, %v589
  %599 = vst.msk [vmem:[%s597 + $0x8] sm:$0xff] %vm459, %v590
  %600 = vst.msk [vmem:[%s597 + $0x10] sm:$0xff] %vm459, %v591
  %601 = vst.msk [vmem:[%s597 + $0x18] sm:$0xff] %vm459, %v592
  %602 = vst.msk [vmem:[%s597 + $0x20] sm:$0xff] %vm459, %v593
  %603 = vst.msk [vmem:[%s597 + $0x28] sm:$0xff] %vm459, %v594
  %604 = vst.msk [vmem:[%s597 + $0x30] sm:$0xff] %vm459, %v595
  %605 = vst.msk [vmem:[%s597 + $0x38] sm:$0xff] %vm459, %v596
  %v606 = vpack.c.bf16 %v590, %v589
  %v607 = vpack.c.bf16 %v592, %v591
  %v608 = vpack.c.bf16 %v594, %v593
  %v609 = vpack.c.bf16 %v596, %v595
  %s610 = scalar_lea.vmem %s2, 256
  %v611 = vld [vmem:[%s610] sm:$0xff]
  %v612 = vld [vmem:[%s610 + $0x8] sm:$0xff]
  %v613 = vld [vmem:[%s610 + $0x10] sm:$0xff]
  %v614 = vld [vmem:[%s610 + $0x18] sm:$0xff]
  %v615 = vld [vmem:[%s610 + $0x20] sm:$0xff]
  %v616 = vld [vmem:[%s610 + $0x28] sm:$0xff]
  %v617 = vld [vmem:[%s610 + $0x30] sm:$0xff]
  %v618 = vld [vmem:[%s610 + $0x38] sm:$0xff]
  %v619 = vadd.f32 %v611, %v419
  %v620 = vadd.f32 %v612, %v420
  %v621 = vadd.f32 %v613, %v421
  %v622 = vadd.f32 %v614, %v422
  %v623 = vadd.f32 %v615, %v423
  %v624 = vadd.f32 %v616, %v424
  %v625 = vadd.f32 %v617, %v425
  %v626 = vadd.f32 %v618, %v426
  %v627 = vmax.f32 %v619, -1.0
  %v628 = vmax.f32 %v620, -1.0
  %v629 = vmax.f32 %v621, -1.0
  %v630 = vmax.f32 %v622, -1.0
  %v631 = vmax.f32 %v623, -1.0
  %v632 = vmax.f32 %v624, -1.0
  %v633 = vmax.f32 %v625, -1.0
  %v634 = vmax.f32 %v626, -1.0
  %v635 = vmin.f32 %v627, 1.0
  %v636 = vmin.f32 %v628, 1.0
  %v637 = vmin.f32 %v629, 1.0
  %v638 = vmin.f32 %v630, 1.0
  %v639 = vmin.f32 %v631, 1.0
  %v640 = vmin.f32 %v632, 1.0
  %v641 = vmin.f32 %v633, 1.0
  %v642 = vmin.f32 %v634, 1.0
  %s643 = scalar_lea.vmem %s4, 256
  %644 = vst.msk [vmem:[%s643] sm:$0xff] %vm459, %v635
  %645 = vst.msk [vmem:[%s643 + $0x8] sm:$0xff] %vm459, %v636
  %646 = vst.msk [vmem:[%s643 + $0x10] sm:$0xff] %vm459, %v637
  %647 = vst.msk [vmem:[%s643 + $0x18] sm:$0xff] %vm459, %v638
  %648 = vst.msk [vmem:[%s643 + $0x20] sm:$0xff] %vm459, %v639
  %649 = vst.msk [vmem:[%s643 + $0x28] sm:$0xff] %vm459, %v640
  %650 = vst.msk [vmem:[%s643 + $0x30] sm:$0xff] %vm459, %v641
  %651 = vst.msk [vmem:[%s643 + $0x38] sm:$0xff] %vm459, %v642
  %v652 = vpack.c.bf16 %v636, %v635
  %v653 = vpack.c.bf16 %v638, %v637
  %v654 = vpack.c.bf16 %v640, %v639
  %v655 = vpack.c.bf16 %v642, %v641
  %s656 = scalar_lea.vmem %s2, 320
  %v657 = vld [vmem:[%s656] sm:$0xff]
  %v658 = vld [vmem:[%s656 + $0x8] sm:$0xff]
  %v659 = vld [vmem:[%s656 + $0x10] sm:$0xff]
  %v660 = vld [vmem:[%s656 + $0x18] sm:$0xff]
  %v661 = vld [vmem:[%s656 + $0x20] sm:$0xff]
  %v662 = vld [vmem:[%s656 + $0x28] sm:$0xff]
  %v663 = vld [vmem:[%s656 + $0x30] sm:$0xff]
  %v664 = vld [vmem:[%s656 + $0x38] sm:$0xff]
  %v665 = vadd.f32 %v657, %v419
  %v666 = vadd.f32 %v658, %v420
  %v667 = vadd.f32 %v659, %v421
  %v668 = vadd.f32 %v660, %v422
  %v669 = vadd.f32 %v661, %v423
  %v670 = vadd.f32 %v662, %v424
  %v671 = vadd.f32 %v663, %v425
  %v672 = vadd.f32 %v664, %v426
  %v673 = vmax.f32 %v665, -1.0
  %v674 = vmax.f32 %v666, -1.0
  %v675 = vmax.f32 %v667, -1.0
  %v676 = vmax.f32 %v668, -1.0
  %v677 = vmax.f32 %v669, -1.0
  %v678 = vmax.f32 %v670, -1.0
  %v679 = vmax.f32 %v671, -1.0
  %v680 = vmax.f32 %v672, -1.0
  %v681 = vmin.f32 %v673, 1.0
  %v682 = vmin.f32 %v674, 1.0
  %v683 = vmin.f32 %v675, 1.0
  %v684 = vmin.f32 %v676, 1.0
  %v685 = vmin.f32 %v677, 1.0
  %v686 = vmin.f32 %v678, 1.0
  %v687 = vmin.f32 %v679, 1.0
  %v688 = vmin.f32 %v680, 1.0
  %s689 = scalar_lea.vmem %s4, 320
  %690 = vst.msk [vmem:[%s689] sm:$0xff] %vm459, %v681
  %691 = vst.msk [vmem:[%s689 + $0x8] sm:$0xff] %vm459, %v682
  %692 = vst.msk [vmem:[%s689 + $0x10] sm:$0xff] %vm459, %v683
  %693 = vst.msk [vmem:[%s689 + $0x18] sm:$0xff] %vm459, %v684
  %694 = vst.msk [vmem:[%s689 + $0x20] sm:$0xff] %vm459, %v685
  %695 = vst.msk [vmem:[%s689 + $0x28] sm:$0xff] %vm459, %v686
  %696 = vst.msk [vmem:[%s689 + $0x30] sm:$0xff] %vm459, %v687
  %697 = vst.msk [vmem:[%s689 + $0x38] sm:$0xff] %vm459, %v688
  %v698 = vpack.c.bf16 %v682, %v681
  %v699 = vpack.c.bf16 %v684, %v683
  %v700 = vpack.c.bf16 %v686, %v685
  %v701 = vpack.c.bf16 %v688, %v687
  %s702 = scalar_lea.vmem %s2, 384
  %v703 = vld [vmem:[%s702] sm:$0xff]
  %v704 = vld [vmem:[%s702 + $0x8] sm:$0xff]
  %v705 = vld [vmem:[%s702 + $0x10] sm:$0xff]
  %v706 = vld [vmem:[%s702 + $0x18] sm:$0xff]
  %v707 = vld [vmem:[%s702 + $0x20] sm:$0xff]
  %v708 = vld [vmem:[%s702 + $0x28] sm:$0xff]
  %v709 = vld [vmem:[%s702 + $0x30] sm:$0xff]
  %v710 = vld [vmem:[%s702 + $0x38] sm:$0xff]
  %v711 = vadd.f32 %v703, %v419
  %v712 = vadd.f32 %v704, %v420
  %v713 = vadd.f32 %v705, %v421
  %v714 = vadd.f32 %v706, %v422
  %v715 = vadd.f32 %v707, %v423
  %v716 = vadd.f32 %v708, %v424
  %v717 = vadd.f32 %v709, %v425
  %v718 = vadd.f32 %v710, %v426
  %v719 = vmax.f32 %v711, -1.0
  %v720 = vmax.f32 %v712, -1.0
  %v721 = vmax.f32 %v713, -1.0
  %v722 = vmax.f32 %v714, -1.0
  %v723 = vmax.f32 %v715, -1.0
  %v724 = vmax.f32 %v716, -1.0
  %v725 = vmax.f32 %v717, -1.0
  %v726 = vmax.f32 %v718, -1.0
  %v727 = vmin.f32 %v719, 1.0
  %v728 = vmin.f32 %v720, 1.0
  %v729 = vmin.f32 %v721, 1.0
  %v730 = vmin.f32 %v722, 1.0
  %v731 = vmin.f32 %v723, 1.0
  %v732 = vmin.f32 %v724, 1.0
  %v733 = vmin.f32 %v725, 1.0
  %v734 = vmin.f32 %v726, 1.0
  %s735 = scalar_lea.vmem %s4, 384
  %736 = vst.msk [vmem:[%s735] sm:$0xff] %vm459, %v727
  %737 = vst.msk [vmem:[%s735 + $0x8] sm:$0xff] %vm459, %v728
  %738 = vst.msk [vmem:[%s735 + $0x10] sm:$0xff] %vm459, %v729
  %739 = vst.msk [vmem:[%s735 + $0x18] sm:$0xff] %vm459, %v730
  %740 = vst.msk [vmem:[%s735 + $0x20] sm:$0xff] %vm459, %v731
  %741 = vst.msk [vmem:[%s735 + $0x28] sm:$0xff] %vm459, %v732
  %742 = vst.msk [vmem:[%s735 + $0x30] sm:$0xff] %vm459, %v733
  %743 = vst.msk [vmem:[%s735 + $0x38] sm:$0xff] %vm459, %v734
  %v744 = vpack.c.bf16 %v728, %v727
  %v745 = vpack.c.bf16 %v730, %v729
  %v746 = vpack.c.bf16 %v732, %v731
  %v747 = vpack.c.bf16 %v734, %v733
  %s748 = scalar_lea.vmem %s2, 448
  %v749 = vld [vmem:[%s748] sm:$0xff]
  %v750 = vld [vmem:[%s748 + $0x8] sm:$0xff]
  %v751 = vld [vmem:[%s748 + $0x10] sm:$0xff]
  %v752 = vld [vmem:[%s748 + $0x18] sm:$0xff]
  %v753 = vld [vmem:[%s748 + $0x20] sm:$0xff]
  %v754 = vld [vmem:[%s748 + $0x28] sm:$0xff]
  %v755 = vld [vmem:[%s748 + $0x30] sm:$0xff]
  %v756 = vld [vmem:[%s748 + $0x38] sm:$0xff]
  %v757 = vadd.f32 %v749, %v419
  %v758 = vadd.f32 %v750, %v420
  %v759 = vadd.f32 %v751, %v421
  %v760 = vadd.f32 %v752, %v422
  %v761 = vadd.f32 %v753, %v423
  %v762 = vadd.f32 %v754, %v424
  %v763 = vadd.f32 %v755, %v425
  %v764 = vadd.f32 %v756, %v426
  %v765 = vmax.f32 %v757, -1.0
  %v766 = vmax.f32 %v758, -1.0
  %v767 = vmax.f32 %v759, -1.0
  %v768 = vmax.f32 %v760, -1.0
  %v769 = vmax.f32 %v761, -1.0
  %v770 = vmax.f32 %v762, -1.0
  %v771 = vmax.f32 %v763, -1.0
  %v772 = vmax.f32 %v764, -1.0
  %v773 = vmin.f32 %v765, 1.0
  %v774 = vmin.f32 %v766, 1.0
  %v775 = vmin.f32 %v767, 1.0
  %v776 = vmin.f32 %v768, 1.0
  %v777 = vmin.f32 %v769, 1.0
  %v778 = vmin.f32 %v770, 1.0
  %v779 = vmin.f32 %v771, 1.0
  %v780 = vmin.f32 %v772, 1.0
  %s781 = scalar_lea.vmem %s4, 448
  %782 = vst.msk [vmem:[%s781] sm:$0xff] %vm459, %v773
  %783 = vst.msk [vmem:[%s781 + $0x8] sm:$0xff] %vm459, %v774
  %784 = vst.msk [vmem:[%s781 + $0x10] sm:$0xff] %vm459, %v775
  %785 = vst.msk [vmem:[%s781 + $0x18] sm:$0xff] %vm459, %v776
  %786 = vst.msk [vmem:[%s781 + $0x20] sm:$0xff] %vm459, %v777
  %787 = vst.msk [vmem:[%s781 + $0x28] sm:$0xff] %vm459, %v778
  %788 = vst.msk [vmem:[%s781 + $0x30] sm:$0xff] %vm459, %v779
  %789 = vst.msk [vmem:[%s781 + $0x38] sm:$0xff] %vm459, %v780
  %v790 = vpack.c.bf16 %v774, %v773
  %v791 = vpack.c.bf16 %v776, %v775
  %v792 = vpack.c.bf16 %v778, %v777
  %v793 = vpack.c.bf16 %v780, %v779
  %v794 = vpack.c.bf16 %v205, %v205
  %v795 = vpack.c.bf16 %v206, %v206
  %v796 = vpack.c.bf16 %v207, %v207
  %v797 = vpack.c.bf16 %v208, %v208
  %v798 = vpack.c.bf16 %v209, %v209
  %v799 = vpack.c.bf16 %v210, %v210
  %v800 = vpack.c.bf16 %v211, %v211
  %v801 = vpack.c.bf16 %v212, %v212
  %v803 = vsel %vm459, %v794, 0
  %805 = vmatprep.subr.bf16.mxu0 0
  %806 = vmatpush1.bf16.msra.mxu0 0
  %807 = vmatprep.subr.bf16.mxu0 0
  %808 = vmatpush1.bf16.msra.mxu0 0
  %809 = vmatprep.subr.bf16.mxu0 0
  %810 = vmatpush1.bf16.msra.mxu0 0
  %811 = vmatprep.subr.bf16.mxu0 0
  %812 = vmatpush1.bf16.msra.mxu0 0
  %813 = vmatprep.subr.bf16.mxu0 0
  %814 = vmatpush1.bf16.msra.mxu0 %v471
  %815 = vmatprep.subr.bf16.mxu0 0
  %816 = vmatpush1.bf16.msra.mxu0 %v470
  %817 = vmatprep.subr.bf16.mxu0 0
  %818 = vmatpush1.bf16.msra.mxu0 %v469
  %819 = vmatprep.subr.bf16.mxu0 0
  %820 = vmatpush1.bf16.msra.mxu0 %v468
  %821 = vmatprep.subr.bf16.mxu0 0
  %822 = vmatpush2.bf16.msra.mxu0 0
  %823 = vmatprep.subr.bf16.mxu0 0
  %824 = vmatpush2.bf16.msra.mxu0 0
  %825 = vmatprep.subr.bf16.mxu0 0
  %826 = vmatpush2.bf16.msra.mxu0 0
  %827 = vmatprep.subr.bf16.mxu0 0
  %828 = vmatpush2.bf16.msra.mxu0 0
  %829 = vmatprep.subr.bf16.mxu0 0
  %830 = vmatpush2.bf16.msra.mxu0 0
  %831 = vmatprep.subr.bf16.mxu0 0
  %832 = vmatpush2.bf16.msra.mxu0 0
  %833 = vmatprep.subr.bf16.mxu0 0
  %834 = vmatpush2.bf16.msra.mxu0 0
  %835 = vmatprep.subr.bf16.mxu0 0
  %836 = vmatpush2.bf16.msra.mxu0 0
  %837 = vmatprep.mubr.bf16.mxu0 0
  %838 = vmatmul.mubr.bf16.gmra.mxu0 %v803
  %v839 = vpop.f32.mrf.mxu0
  %v840 = vadd.f32 0.0, %v839
  %v841 = vpop.f32.mrf.mxu0
  %v842 = vpop.f32.mrf.mxu0
  %v843 = vpop.f32.mrf.mxu0
  %844 = vdwg.mxu0
  %v846 = vsel %vm459, %v795, 0
  %848 = vmatprep.subr.bf16.mxu0 0
  %849 = vmatpush1.bf16.msra.mxu0 0
  %850 = vmatprep.subr.bf16.mxu0 0
  %851 = vmatpush1.bf16.msra.mxu0 0
  %852 = vmatprep.subr.bf16.mxu0 0
  %853 = vmatpush1.bf16.msra.mxu0 0
  %854 = vmatprep.subr.bf16.mxu0 0
  %855 = vmatpush1.bf16.msra.mxu0 0
  %856 = vmatprep.subr.bf16.mxu0 0
  %857 = vmatpush1.bf16.msra.mxu0 %v517
  %858 = vmatprep.subr.bf16.mxu0 0
  %859 = vmatpush1.bf16.msra.mxu0 %v516
  %860 = vmatprep.subr.bf16.mxu0 0
  %861 = vmatpush1.bf16.msra.mxu0 %v515
  %862 = vmatprep.subr.bf16.mxu0 0
  %863 = vmatpush1.bf16.msra.mxu0 %v514
  %864 = vmatprep.subr.bf16.mxu0 0
  %865 = vmatpush2.bf16.msra.mxu0 0
  %866 = vmatprep.subr.bf16.mxu0 0
  %867 = vmatpush2.bf16.msra.mxu0 0
  %868 = vmatprep.subr.bf16.mxu0 0
  %869 = vmatpush2.bf16.msra.mxu0 0
  %870 = vmatprep.subr.bf16.mxu0 0
  %871 = vmatpush2.bf16.msra.mxu0 0
  %872 = vmatprep.subr.bf16.mxu0 0
  %873 = vmatpush2.bf16.msra.mxu0 0
  %874 = vmatprep.subr.bf16.mxu0 0
  %875 = vmatpush2.bf16.msra.mxu0 0
  %876 = vmatprep.subr.bf16.mxu0 0
  %877 = vmatpush2.bf16.msra.mxu0 0
  %878 = vmatprep.subr.bf16.mxu0 0
  %879 = vmatpush2.bf16.msra.mxu0 0
  %880 = vmatprep.mubr.bf16.mxu0 0
  %881 = vmatmul.mubr.bf16.gmra.mxu0 %v846
  %v882 = vpop.f32.mrf.mxu0
  %v883 = vadd.f32 0.0, %v882
  %v884 = vpop.f32.mrf.mxu0
  %v885 = vpop.f32.mrf.mxu0
  %v886 = vpop.f32.mrf.mxu0
  %887 = vdwg.mxu0
  %v889 = vsel %vm459, %v796, 0
  %891 = vmatprep.subr.bf16.mxu0 0
  %892 = vmatpush1.bf16.msra.mxu0 0
  %893 = vmatprep.subr.bf16.mxu0 0
  %894 = vmatpush1.bf16.msra.mxu0 0
  %895 = vmatprep.subr.bf16.mxu0 0
  %896 = vmatpush1.bf16.msra.mxu0 0
  %897 = vmatprep.subr.bf16.mxu0 0
  %898 = vmatpush1.bf16.msra.mxu0 0
  %899 = vmatprep.subr.bf16.mxu0 0
  %900 = vmatpush1.bf16.msra.mxu0 %v563
  %901 = vmatprep.subr.bf16.mxu0 0
  %902 = vmatpush1.bf16.msra.mxu0 %v562
  %903 = vmatprep.subr.bf16.mxu0 0
  %904 = vmatpush1.bf16.msra.mxu0 %v561
  %905 = vmatprep.subr.bf16.mxu0 0
  %906 = vmatpush1.bf16.msra.mxu0 %v560
  %907 = vmatprep.subr.bf16.mxu0 0
  %908 = vmatpush2.bf16.msra.mxu0 0
  %909 = vmatprep.subr.bf16.mxu0 0
  %910 = vmatpush2.bf16.msra.mxu0 0
  %911 = vmatprep.subr.bf16.mxu0 0
  %912 = vmatpush2.bf16.msra.mxu0 0
  %913 = vmatprep.subr.bf16.mxu0 0
  %914 = vmatpush2.bf16.msra.mxu0 0
  %915 = vmatprep.subr.bf16.mxu0 0
  %916 = vmatpush2.bf16.msra.mxu0 0
  %917 = vmatprep.subr.bf16.mxu0 0
  %918 = vmatpush2.bf16.msra.mxu0 0
  %919 = vmatprep.subr.bf16.mxu0 0
  %920 = vmatpush2.bf16.msra.mxu0 0
  %921 = vmatprep.subr.bf16.mxu0 0
  %922 = vmatpush2.bf16.msra.mxu0 0
  %923 = vmatprep.mubr.bf16.mxu0 0
  %924 = vmatmul.mubr.bf16.gmra.mxu0 %v889
  %v925 = vpop.f32.mrf.mxu0
  %v926 = vadd.f32 0.0, %v925
  %v927 = vpop.f32.mrf.mxu0
  %v928 = vpop.f32.mrf.mxu0
  %v929 = vpop.f32.mrf.mxu0
  %930 = vdwg.mxu0
  %v932 = vsel %vm459, %v797, 0
  %934 = vmatprep.subr.bf16.mxu0 0
  %935 = vmatpush1.bf16.msra.mxu0 0
  %936 = vmatprep.subr.bf16.mxu0 0
  %937 = vmatpush1.bf16.msra.mxu0 0
  %938 = vmatprep.subr.bf16.mxu0 0
  %939 = vmatpush1.bf16.msra.mxu0 0
  %940 = vmatprep.subr.bf16.mxu0 0
  %941 = vmatpush1.bf16.msra.mxu0 0
  %942 = vmatprep.subr.bf16.mxu0 0
  %943 = vmatpush1.bf16.msra.mxu0 %v609
  %944 = vmatprep.subr.bf16.mxu0 0
  %945 = vmatpush1.bf16.msra.mxu0 %v608
  %946 = vmatprep.subr.bf16.mxu0 0
  %947 = vmatpush1.bf16.msra.mxu0 %v607
  %948 = vmatprep.subr.bf16.mxu0 0
  %949 = vmatpush1.bf16.msra.mxu0 %v606
  %950 = vmatprep.subr.bf16.mxu0 0
  %951 = vmatpush2.bf16.msra.mxu0 0
  %952 = vmatprep.subr.bf16.mxu0 0
  %953 = vmatpush2.bf16.msra.mxu0 0
  %954 = vmatprep.subr.bf16.mxu0 0
  %955 = vmatpush2.bf16.msra.mxu0 0
  %956 = vmatprep.subr.bf16.mxu0 0
  %957 = vmatpush2.bf16.msra.mxu0 0
  %958 = vmatprep.subr.bf16.mxu0 0
  %959 = vmatpush2.bf16.msra.mxu0 0
  %960 = vmatprep.subr.bf16.mxu0 0
  %961 = vmatpush2.bf16.msra.mxu0 0
  %962 = vmatprep.subr.bf16.mxu0 0
  %963 = vmatpush2.bf16.msra.mxu0 0
  %964 = vmatprep.subr.bf16.mxu0 0
  %965 = vmatpush2.bf16.msra.mxu0 0
  %966 = vmatprep.mubr.bf16.mxu0 0
  %967 = vmatmul.mubr.bf16.gmra.mxu0 %v932
  %v968 = vpop.f32.mrf.mxu0
  %v969 = vadd.f32 0.0, %v968
  %v970 = vpop.f32.mrf.mxu0
  %v971 = vpop.f32.mrf.mxu0
  %v972 = vpop.f32.mrf.mxu0
  %973 = vdwg.mxu0
  %v975 = vsel %vm459, %v798, 0
  %977 = vmatprep.subr.bf16.mxu0 0
  %978 = vmatpush1.bf16.msra.mxu0 0
  %979 = vmatprep.subr.bf16.mxu0 0
  %980 = vmatpush1.bf16.msra.mxu0 0
  %981 = vmatprep.subr.bf16.mxu0 0
  %982 = vmatpush1.bf16.msra.mxu0 0
  %983 = vmatprep.subr.bf16.mxu0 0
  %984 = vmatpush1.bf16.msra.mxu0 0
  %985 = vmatprep.subr.bf16.mxu0 0
  %986 = vmatpush1.bf16.msra.mxu0 %v655
  %987 = vmatprep.subr.bf16.mxu0 0
  %988 = vmatpush1.bf16.msra.mxu0 %v654
  %989 = vmatprep.subr.bf16.mxu0 0
  %990 = vmatpush1.bf16.msra.mxu0 %v653
  %991 = vmatprep.subr.bf16.mxu0 0
  %992 = vmatpush1.bf16.msra.mxu0 %v652
  %993 = vmatprep.subr.bf16.mxu0 0
  %994 = vmatpush2.bf16.msra.mxu0 0
  %995 = vmatprep.subr.bf16.mxu0 0
  %996 = vmatpush2.bf16.msra.mxu0 0
  %997 = vmatprep.subr.bf16.mxu0 0
  %998 = vmatpush2.bf16.msra.mxu0 0
  %999 = vmatprep.subr.bf16.mxu0 0
  %1000 = vmatpush2.bf16.msra.mxu0 0
  %1001 = vmatprep.subr.bf16.mxu0 0
  %1002 = vmatpush2.bf16.msra.mxu0 0
  %1003 = vmatprep.subr.bf16.mxu0 0
  %1004 = vmatpush2.bf16.msra.mxu0 0
  %1005 = vmatprep.subr.bf16.mxu0 0
  %1006 = vmatpush2.bf16.msra.mxu0 0
  %1007 = vmatprep.subr.bf16.mxu0 0
  %1008 = vmatpush2.bf16.msra.mxu0 0
  %1009 = vmatprep.mubr.bf16.mxu0 0
  %1010 = vmatmul.mubr.bf16.gmra.mxu0 %v975
  %v1011 = vpop.f32.mrf.mxu0
  %v1012 = vadd.f32 0.0, %v1011
  %v1013 = vpop.f32.mrf.mxu0
  %v1014 = vpop.f32.mrf.mxu0
  %v1015 = vpop.f32.mrf.mxu0
  %1016 = vdwg.mxu0
  %v1018 = vsel %vm459, %v799, 0
  %1020 = vmatprep.subr.bf16.mxu0 0
  %1021 = vmatpush1.bf16.msra.mxu0 0
  %1022 = vmatprep.subr.bf16.mxu0 0
  %1023 = vmatpush1.bf16.msra.mxu0 0
  %1024 = vmatprep.subr.bf16.mxu0 0
  %1025 = vmatpush1.bf16.msra.mxu0 0
  %1026 = vmatprep.subr.bf16.mxu0 0
  %1027 = vmatpush1.bf16.msra.mxu0 0
  %1028 = vmatprep.subr.bf16.mxu0 0
  %1029 = vmatpush1.bf16.msra.mxu0 %v701
  %1030 = vmatprep.subr.bf16.mxu0 0
  %1031 = vmatpush1.bf16.msra.mxu0 %v700
  %1032 = vmatprep.subr.bf16.mxu0 0
  %1033 = vmatpush1.bf16.msra.mxu0 %v699
  %1034 = vmatprep.subr.bf16.mxu0 0
  %1035 = vmatpush1.bf16.msra.mxu0 %v698
  %1036 = vmatprep.subr.bf16.mxu0 0
  %1037 = vmatpush2.bf16.msra.mxu0 0
  %1038 = vmatprep.subr.bf16.mxu0 0
  %1039 = vmatpush2.bf16.msra.mxu0 0
  %1040 = vmatprep.subr.bf16.mxu0 0
  %1041 = vmatpush2.bf16.msra.mxu0 0
  %1042 = vmatprep.subr.bf16.mxu0 0
  %1043 = vmatpush2.bf16.msra.mxu0 0
  %1044 = vmatprep.subr.bf16.mxu0 0
  %1045 = vmatpush2.bf16.msra.mxu0 0
  %1046 = vmatprep.subr.bf16.mxu0 0
  %1047 = vmatpush2.bf16.msra.mxu0 0
  %1048 = vmatprep.subr.bf16.mxu0 0
  %1049 = vmatpush2.bf16.msra.mxu0 0
  %1050 = vmatprep.subr.bf16.mxu0 0
  %1051 = vmatpush2.bf16.msra.mxu0 0
  %1052 = vmatprep.mubr.bf16.mxu0 0
  %1053 = vmatmul.mubr.bf16.gmra.mxu0 %v1018
  %v1054 = vpop.f32.mrf.mxu0
  %v1055 = vadd.f32 0.0, %v1054
  %v1056 = vpop.f32.mrf.mxu0
  %v1057 = vpop.f32.mrf.mxu0
  %v1058 = vpop.f32.mrf.mxu0
  %1059 = vdwg.mxu0
  %v1061 = vsel %vm459, %v800, 0
  %1063 = vmatprep.subr.bf16.mxu0 0
  %1064 = vmatpush1.bf16.msra.mxu0 0
  %1065 = vmatprep.subr.bf16.mxu0 0
  %1066 = vmatpush1.bf16.msra.mxu0 0
  %1067 = vmatprep.subr.bf16.mxu0 0
  %1068 = vmatpush1.bf16.msra.mxu0 0
  %1069 = vmatprep.subr.bf16.mxu0 0
  %1070 = vmatpush1.bf16.msra.mxu0 0
  %1071 = vmatprep.subr.bf16.mxu0 0
  %1072 = vmatpush1.bf16.msra.mxu0 %v747
  %1073 = vmatprep.subr.bf16.mxu0 0
  %1074 = vmatpush1.bf16.msra.mxu0 %v746
  %1075 = vmatprep.subr.bf16.mxu0 0
  %1076 = vmatpush1.bf16.msra.mxu0 %v745
  %1077 = vmatprep.subr.bf16.mxu0 0
  %1078 = vmatpush1.bf16.msra.mxu0 %v744
  %1079 = vmatprep.subr.bf16.mxu0 0
  %1080 = vmatpush2.bf16.msra.mxu0 0
  %1081 = vmatprep.subr.bf16.mxu0 0
  %1082 = vmatpush2.bf16.msra.mxu0 0
  %1083 = vmatprep.subr.bf16.mxu0 0
  %1084 = vmatpush2.bf16.msra.mxu0 0
  %1085 = vmatprep.subr.bf16.mxu0 0
  %1086 = vmatpush2.bf16.msra.mxu0 0
  %1087 = vmatprep.subr.bf16.mxu0 0
  %1088 = vmatpush2.bf16.msra.mxu0 0
  %1089 = vmatprep.subr.bf16.mxu0 0
  %1090 = vmatpush2.bf16.msra.mxu0 0
  %1091 = vmatprep.subr.bf16.mxu0 0
  %1092 = vmatpush2.bf16.msra.mxu0 0
  %1093 = vmatprep.subr.bf16.mxu0 0
  %1094 = vmatpush2.bf16.msra.mxu0 0
  %1095 = vmatprep.mubr.bf16.mxu0 0
  %1096 = vmatmul.mubr.bf16.gmra.mxu0 %v1061
  %v1097 = vpop.f32.mrf.mxu0
  %v1098 = vadd.f32 0.0, %v1097
  %v1099 = vpop.f32.mrf.mxu0
  %v1100 = vpop.f32.mrf.mxu0
  %v1101 = vpop.f32.mrf.mxu0
  %1102 = vdwg.mxu0
  %v1104 = vsel %vm459, %v801, 0
  %1106 = vmatprep.subr.bf16.mxu0 0
  %1107 = vmatpush1.bf16.msra.mxu0 0
  %1108 = vmatprep.subr.bf16.mxu0 0
  %1109 = vmatpush1.bf16.msra.mxu0 0
  %1110 = vmatprep.subr.bf16.mxu0 0
  %1111 = vmatpush1.bf16.msra.mxu0 0
  %1112 = vmatprep.subr.bf16.mxu0 0
  %1113 = vmatpush1.bf16.msra.mxu0 0
  %1114 = vmatprep.subr.bf16.mxu0 0
  %1115 = vmatpush1.bf16.msra.mxu0 %v793
  %1116 = vmatprep.subr.bf16.mxu0 0
  %1117 = vmatpush1.bf16.msra.mxu0 %v792
  %1118 = vmatprep.subr.bf16.mxu0 0
  %1119 = vmatpush1.bf16.msra.mxu0 %v791
  %1120 = vmatprep.subr.bf16.mxu0 0
  %1121 = vmatpush1.bf16.msra.mxu0 %v790
  %1122 = vmatprep.subr.bf16.mxu0 0
  %1123 = vmatpush2.bf16.msra.mxu0 0
  %1124 = vmatprep.subr.bf16.mxu0 0
  %1125 = vmatpush2.bf16.msra.mxu0 0
  %1126 = vmatprep.subr.bf16.mxu0 0
  %1127 = vmatpush2.bf16.msra.mxu0 0
  %1128 = vmatprep.subr.bf16.mxu0 0
  %1129 = vmatpush2.bf16.msra.mxu0 0
  %1130 = vmatprep.subr.bf16.mxu0 0
  %1131 = vmatpush2.bf16.msra.mxu0 0
  %1132 = vmatprep.subr.bf16.mxu0 0
  %1133 = vmatpush2.bf16.msra.mxu0 0
  %1134 = vmatprep.subr.bf16.mxu0 0
  %1135 = vmatpush2.bf16.msra.mxu0 0
  %1136 = vmatprep.subr.bf16.mxu0 0
  %1137 = vmatpush2.bf16.msra.mxu0 0
  %1138 = vmatprep.mubr.bf16.mxu0 0
  %1139 = vmatmul.mubr.bf16.gmra.mxu0 %v1104
  %v1140 = vpop.f32.mrf.mxu0
  %v1141 = vadd.f32 0.0, %v1140
  %v1142 = vpop.f32.mrf.mxu0
  %v1143 = vpop.f32.mrf.mxu0
  %v1144 = vpop.f32.mrf.mxu0
  %1145 = vdwg.mxu0
  %v1154 = vrot.slane %v883, 7
  %vm1155 = vcmask 1041409
  %v1156 = vsel %vm1155, %v1154, %v840
  %v1157 = vrot.slane %v926, 6
  %vm1158 = vcmask 1042434
  %v1159 = vsel %vm1158, %v1157, %v1156
  %v1160 = vrot.slane %v969, 5
  %vm1161 = vcmask 1043459
  %v1162 = vsel %vm1161, %v1160, %v1159
  %v1163 = vrot.slane %v1012, 4
  %vm1164 = vcmask 1044484
  %v1165 = vsel %vm1164, %v1163, %v1162
  %v1166 = vrot.slane %v1055, 3
  %vm1167 = vcmask 1045509
  %v1168 = vsel %vm1167, %v1166, %v1165
  %v1169 = vrot.slane %v1098, 2
  %vm1170 = vcmask 1046534
  %v1171 = vsel %vm1170, %v1169, %v1168
  %v1172 = vrot.slane %v1141, 1
  %vm1173 = vcmask 1047559
  %v1174 = vsel %vm1173, %v1172, %v1171
  %v1176 = vrot.slane %v840, 1
  %v1177 = vsel %vm1155, %v883, %v1176
  %v1178 = vrot.slane %v926, 7
  %v1179 = vsel %vm1158, %v1178, %v1177
  %v1180 = vrot.slane %v969, 6
  %v1181 = vsel %vm1161, %v1180, %v1179
  %v1182 = vrot.slane %v1012, 5
  %v1183 = vsel %vm1164, %v1182, %v1181
  %v1184 = vrot.slane %v1055, 4
  %v1185 = vsel %vm1167, %v1184, %v1183
  %v1186 = vrot.slane %v1098, 3
  %v1187 = vsel %vm1170, %v1186, %v1185
  %v1188 = vrot.slane %v1141, 2
  %v1189 = vsel %vm1173, %v1188, %v1187
  %1190 = vrot.lane.b32.xlu0 %v1189, 64
  %v1191 = vpop.permute.xlu0 %1190
  %v1193 = vsel %vm459, %v1174, %v1191
  %v1194 = vadd.f32 %v89, %v1193
  %1195 = vst [vmem:[%s3] sm:$0xff] %v1194
  // Predicated region
  $region14: #{multi_layer_hebbian_forward.2} parent=0 // pred_check
    _
  $region15: #{multi_layer_hebbian_forward.2} parent=0 // pred_check_branch
    %1197 = sbr.rel (0) target = $region17
  $region16: #{multi_layer_hebbian_forward.2} parent=0 // pred_region
    _
  $region17: #{multi_layer_hebbian_forward.2} parent=0 // pred_fallthru
    _
  // Predicated region
  $region18: #{multi_layer_hebbian_forward.2} parent=0 // pred_check
    _
  $region19: #{multi_layer_hebbian_forward.2} parent=0 // pred_check_branch
    %1199 = sbr.rel (0) target = $region21
  $region20: #{multi_layer_hebbian_forward.2} parent=0 // pred_region
    _
  $region21: #{multi_layer_hebbian_forward.2} parent=0 // pred_fallthru
    _
  // Predicated region
  $region22: #{multi_layer_hebbian_forward.2} parent=0 // pred_check
    _
  $region23: #{multi_layer_hebbian_forward.2} parent=0 // pred_check_branch
    %1201 = sbr.rel (0) target = $region25
  $region24: #{multi_layer_hebbian_forward.2} parent=0 // pred_region
    _
  $region25: #{multi_layer_hebbian_forward.2} parent=0 // pred_fallthru
    _
  // Predicated region
  $region26: #{multi_layer_hebbian_forward.2} parent=0 // pred_check
    _
  $region27: #{multi_layer_hebbian_forward.2} parent=0 // pred_check_branch
    %1203 = sbr.rel (0) target = $region29
  $region28: #{multi_layer_hebbian_forward.2} parent=0 // pred_region
    _
  $region29: #{multi_layer_hebbian_forward.2} parent=0 // pred_fallthru
    _

// kernel: multi_layer_hebbian_forward.3
$region0: #{multi_layer_hebbian_forward.3}
  #allocation0 [shape = 'u32[]', space=smem, size = 0x4, offset = 0x4, fixed_abs, tag = 'smem constant byte address 0x4 - core index']
  #allocation1 [shape = 'u32[144,128]{1,0:T(1,128)}', space=vmem, size = 0x12000, scoped, tag = 'internal scratch']
  %s0 = inlined_call_operand.vmem [shape: bf16[73,32], index: 0, kind: input, shape index: {}]
  %s1 = inlined_call_operand.vmem [shape: bf16[16,73], index: 1, kind: input, shape index: {}]
  %s2 = inlined_call_operand.vmem [shape: f32[16,16,16], index: 2, kind: input, shape index: {}, may-alias: {2,4}]
  %s3 = inlined_call_operand.hbm [shape: f32[2,256], index: 3, kind: output, shape index: {0}]
  %s4 = inlined_call_operand.vmem [shape: f32[16,16,16], index: 4, kind: output, shape index: {1}, may-alias: {2,4}]
  %5 = xla_tuple %s3, %s4
  %s6 = sld [smem:[#allocation0]]
  $region30: #{multi_layer_hebbian_forward.3} parent=0
    _
  %s8 = ssub.s32 1, %s6
  %s9 = scalar_select 0, %s8, %s6
  $region1: #{multi_layer_hebbian_forward.3} parent=0
    #allocation2 [shape = 'u8[2048]{0}', space=vmem, size = 0x800, scoped, tag = 'output window, operand 0, single buffered']
    #allocation3 [shape = 's32[1]{0}', space=sflag, size = 0x4, scoped, tag = 'scoped memory for multi_layer_hebbian_forward.3']
    %10 = vsyncpa [#allocation3], 0
    // Predicated region
    $region2: #{multi_layer_hebbian_forward.3} parent=1 // pred_check
      _
    $region3: #{multi_layer_hebbian_forward.3} parent=1 // pred_check_branch
      %12 = sbr.rel (0) target = $region5
    $region4: #{multi_layer_hebbian_forward.3} parent=1 // pred_region
      _
    $region5: #{multi_layer_hebbian_forward.3} parent=1 // pred_fallthru
      _
    // Predicated region
    $region6: #{multi_layer_hebbian_forward.3} parent=1 // pred_check
      _
    $region7: #{multi_layer_hebbian_forward.3} parent=1 // pred_check_branch
      %14 = sbr.rel (0) target = $region9
    $region8: #{multi_layer_hebbian_forward.3} parent=1 // pred_region
      _
    $region9: #{multi_layer_hebbian_forward.3} parent=1 // pred_fallthru
      _
    // Predicated region
    $region10: #{multi_layer_hebbian_forward.3} parent=1 // pred_check
      _
    $region11: #{multi_layer_hebbian_forward.3} parent=1 // pred_check_branch
      %16 = sbr.rel (0) target = $region13
    $region12: #{multi_layer_hebbian_forward.3} parent=1 // pred_region
      _
    $region13: #{multi_layer_hebbian_forward.3} parent=1 // pred_fallthru
      _
    %v18 = vld [vmem:[%s1] sm:$0xf]
    %v19 = vld [vmem:[%s1 + $0x4] sm:$0xf]
    %v20 = vld [vmem:[%s0] sm:$0xf]
    %v21 = vld [vmem:[%s0 + $0x4] sm:$0xf]
    %v22 = vld [vmem:[%s0 + $0x8] sm:$0xf]
    %v23 = vld [vmem:[%s0 + $0xc] sm:$0xf]
    %v24 = vld [vmem:[%s0 + $0x10] sm:$0xf]
    %v25 = vld [vmem:[%s0 + $0x14] sm:$0xf]
    %v26 = vld [vmem:[%s0 + $0x18] sm:$0xf]
    %v27 = vld [vmem:[%s0 + $0x1c] sm:$0xf]
    %v28 = vld [vmem:[%s0 + $0x20] sm:$0xf]
    %v29 = vld [vmem:[%s0 + $0x24] sm:$0x1]
    %v32 = vunpack.c.l.b16 %v18
    %v33 = vunpack.c.l.b16 %v19
    %v34 = vpack.c.b16 %v33, %v32
    %v45 = vunpack.c.l.b16 %v20
    %v46 = vunpack.c.l.b16 %v21
    %v47 = vunpack.c.l.b16 %v22
    %v48 = vunpack.c.l.b16 %v23
    %v49 = vunpack.c.l.b16 %v24
    %v50 = vunpack.c.l.b16 %v25
    %v51 = vunpack.c.l.b16 %v26
    %v52 = vunpack.c.l.b16 %v27
    %v53 = vunpack.c.l.b16 %v28
    %v54 = vunpack.c.l.b16 %v29
    %v55 = vpack.c.b16 %v46, %v45
    %v56 = vpack.c.b16 %v48, %v47
    %v57 = vpack.c.b16 %v50, %v49
    %v58 = vpack.c.b16 %v52, %v51
    %v59 = vpack.c.b16 %v54, %v53
    %vm64 = vcmask 596992
    %v66 = vsel %vm64, %v34, 0
    %vm68 = vcmask 1043456
    %vm69 = vcmask 1044480
    %v70 = vsel %vm68, 4294967295, 65535
    %v71 = vsel %vm69, %v70, 0
    %v73 = vand.u32 %v59, %v71
    %75 = vmatprep.subr.bf16.mxu0 0
    %76 = vmatpush1.bf16.msra.mxu0 0
    %77 = vmatprep.subr.bf16.mxu0 0
    %78 = vmatpush1.bf16.msra.mxu0 0
    %79 = vmatprep.subr.bf16.mxu0 0
    %80 = vmatpush1.bf16.msra.mxu0 0
    %81 = vmatprep.subr.bf16.mxu0 0
    %82 = vmatpush1.bf16.msra.mxu0 %v73
    %83 = vmatprep.subr.bf16.mxu0 0
    %84 = vmatpush1.bf16.msra.mxu0 %v58
    %85 = vmatprep.subr.bf16.mxu0 0
    %86 = vmatpush1.bf16.msra.mxu0 %v57
    %87 = vmatprep.subr.bf16.mxu0 0
    %88 = vmatpush1.bf16.msra.mxu0 %v56
    %89 = vmatprep.subr.bf16.mxu0 0
    %90 = vmatpush1.bf16.msra.mxu0 %v55
    %91 = vmatprep.subr.bf16.mxu0 0
    %92 = vmatpush2.bf16.msra.mxu0 0
    %93 = vmatprep.subr.bf16.mxu0 0
    %94 = vmatpush2.bf16.msra.mxu0 0
    %95 = vmatprep.subr.bf16.mxu0 0
    %96 = vmatpush2.bf16.msra.mxu0 0
    %97 = vmatprep.subr.bf16.mxu0 0
    %98 = vmatpush2.bf16.msra.mxu0 0
    %99 = vmatprep.subr.bf16.mxu0 0
    %100 = vmatpush2.bf16.msra.mxu0 0
    %101 = vmatprep.subr.bf16.mxu0 0
    %102 = vmatpush2.bf16.msra.mxu0 0
    %103 = vmatprep.subr.bf16.mxu0 0
    %104 = vmatpush2.bf16.msra.mxu0 0
    %105 = vmatprep.subr.bf16.mxu0 0
    %106 = vmatpush2.bf16.msra.mxu0 0
    %107 = vmatprep.mubr.bf16.mxu0 0
    %108 = vmatmul.mubr.bf16.gmra.mxu0 %v66
    %v109 = vpop.f32.mrf.mxu0
    %v110 = vadd.f32 0.0, %v109
    %v111 = vpop.f32.mrf.mxu0
    %v112 = vpop.f32.mrf.mxu0
    %v113 = vadd.f32 0.0, %v112
    %v114 = vpop.f32.mrf.mxu0
    %115 = vdwg.mxu0
    %v116 = vmax.f32 %v110, 0.0
    %v117 = vmax.f32 %v113, 0.0
    %v120 = vcombine.high %v116, %v116
    %v122 = vunpack.c.l.s4 1966171168
    %v123 = vunpack.c.0.s8 %v122
    %v124 = vlaneseq
    %v125 = vshrl.u32 %v124, 7
    %v126 = vsub.s32 %v123, %v125
    %v127 = vrot.slane %v116, %v126
    %v129 = vunpack.c.l.s4 1966171168
    %v130 = vunpack.c.0.s8 %v129
    %v131 = vlaneseq
    %v132 = vshrl.u32 %v131, 7
    %v133 = vsub.s32 %v130, %v132
    %v134 = vrot.slane %v120, %v133
    %v135 = vcombine.high %v127, %v127
    %v136 = vcombine.high %v134, %v134
    %v138 = vunpack.c.l.s4 1966171168
    %v139 = vunpack.c.0.s8 %v138
    %v140 = vlaneseq
    %v141 = vshrl.u32 %v140, 7
    %v142 = vsub.s32 %v139, %v141
    %v143 = vrot.slane %v127, %v142
    %v145 = vunpack.c.l.s4 1966171168
    %v146 = vunpack.c.0.s8 %v145
    %v147 = vlaneseq
    %v148 = vshrl.u32 %v147, 7
    %v149 = vsub.s32 %v146, %v148
    %v150 = vrot.slane %v134, %v149
    %v152 = vunpack.c.l.s4 1966171168
    %v153 = vunpack.c.0.s8 %v152
    %v154 = vlaneseq
    %v155 = vshrl.u32 %v154, 7
    %v156 = vsub.s32 %v153, %v155
    %v157 = vrot.slane %v135, %v156
    %v159 = vunpack.c.l.s4 1966171168
    %v160 = vunpack.c.0.s8 %v159
    %v161 = vlaneseq
    %v162 = vshrl.u32 %v161, 7
    %v163 = vsub.s32 %v160, %v162
    %v164 = vrot.slane %v136, %v163
    %v165 = vcombine.high %v143, %v143
    %v166 = vcombine.high %v150, %v150
    %v167 = vcombine.high %v157, %v157
    %v168 = vcombine.high %v164, %v164
    %v169 = vcombine.high %v117, %v117
    %v171 = vunpack.c.l.s4 1966171168
    %v172 = vunpack.c.0.s8 %v171
    %v173 = vlaneseq
    %v174 = vshrl.u32 %v173, 7
    %v175 = vsub.s32 %v172, %v174
    %v176 = vrot.slane %v117, %v175
    %v178 = vunpack.c.l.s4 1966171168
    %v179 = vunpack.c.0.s8 %v178
    %v180 = vlaneseq
    %v181 = vshrl.u32 %v180, 7
    %v182 = vsub.s32 %v179, %v181
    %v183 = vrot.slane %v169, %v182
    %v184 = vcombine.high %v176, %v176
    %v185 = vcombine.high %v183, %v183
    %v187 = vunpack.c.l.s4 1966171168
    %v188 = vunpack.c.0.s8 %v187
    %v189 = vlaneseq
    %v190 = vshrl.u32 %v189, 7
    %v191 = vsub.s32 %v188, %v190
    %v192 = vrot.slane %v176, %v191
    %v194 = vunpack.c.l.s4 1966171168
    %v195 = vunpack.c.0.s8 %v194
    %v196 = vlaneseq
    %v197 = vshrl.u32 %v196, 7
    %v198 = vsub.s32 %v195, %v197
    %v199 = vrot.slane %v183, %v198
    %v201 = vunpack.c.l.s4 1966171168
    %v202 = vunpack.c.0.s8 %v201
    %v203 = vlaneseq
    %v204 = vshrl.u32 %v203, 7
    %v205 = vsub.s32 %v202, %v204
    %v206 = vrot.slane %v184, %v205
    %v208 = vunpack.c.l.s4 1966171168
    %v209 = vunpack.c.0.s8 %v208
    %v210 = vlaneseq
    %v211 = vshrl.u32 %v210, 7
    %v212 = vsub.s32 %v209, %v211
    %v213 = vrot.slane %v185, %v212
    %v214 = vcombine.high %v192, %v192
    %v215 = vcombine.high %v199, %v199
    %v216 = vcombine.high %v206, %v206
    %v217 = vcombine.high %v213, %v213
    %v234 = vlaneseq
    %v235 = vshrl.u32 %v234, 7
    %v236 = vsub.s32 0, %v235
    %v237 = vrot.slane %v143, %v236
    %v238 = vlaneseq
    %v239 = vshrl.u32 %v238, 7
    %v240 = vsub.s32 0, %v239
    %v241 = vrot.slane %v157, %v240
    %v242 = vlaneseq
    %v243 = vshrl.u32 %v242, 7
    %v244 = vsub.s32 0, %v243
    %v245 = vrot.slane %v165, %v244
    %v246 = vlaneseq
    %v247 = vshrl.u32 %v246, 7
    %v248 = vsub.s32 0, %v247
    %v249 = vrot.slane %v167, %v248
    %v250 = vlaneseq
    %v251 = vshrl.u32 %v250, 7
    %v252 = vsub.s32 0, %v251
    %v253 = vrot.slane %v150, %v252
    %v254 = vlaneseq
    %v255 = vshrl.u32 %v254, 7
    %v256 = vsub.s32 0, %v255
    %v257 = vrot.slane %v164, %v256
    %v258 = vlaneseq
    %v259 = vshrl.u32 %v258, 7
    %v260 = vsub.s32 0, %v259
    %v261 = vrot.slane %v166, %v260
    %v262 = vlaneseq
    %v263 = vshrl.u32 %v262, 7
    %v264 = vsub.s32 0, %v263
    %v265 = vrot.slane %v168, %v264
    %v266 = vlaneseq
    %v267 = vshrl.u32 %v266, 7
    %v268 = vsub.s32 0, %v267
    %v269 = vrot.slane %v192, %v268
    %v270 = vlaneseq
    %v271 = vshrl.u32 %v270, 7
    %v272 = vsub.s32 0, %v271
    %v273 = vrot.slane %v206, %v272
    %v274 = vlaneseq
    %v275 = vshrl.u32 %v274, 7
    %v276 = vsub.s32 0, %v275
    %v277 = vrot.slane %v214, %v276
    %v278 = vlaneseq
    %v279 = vshrl.u32 %v278, 7
    %v280 = vsub.s32 0, %v279
    %v281 = vrot.slane %v216, %v280
    %v282 = vlaneseq
    %v283 = vshrl.u32 %v282, 7
    %v284 = vsub.s32 0, %v283
    %v285 = vrot.slane %v199, %v284
    %v286 = vlaneseq
    %v287 = vshrl.u32 %v286, 7
    %v288 = vsub.s32 0, %v287
    %v289 = vrot.slane %v213, %v288
    %v290 = vlaneseq
    %v291 = vshrl.u32 %v290, 7
    %v292 = vsub.s32 0, %v291
    %v293 = vrot.slane %v215, %v292
    %v294 = vlaneseq
    %v295 = vshrl.u32 %v294, 7
    %v296 = vsub.s32 0, %v295
    %v297 = vrot.slane %v217, %v296
    %298 = vrot.lane.b32.xlu0 %v237, 112
    %v299 = vpop.permute.xlu0 %298
    %300 = vrot.lane.b32.xlu0 %v241, 112
    %v301 = vpop.permute.xlu0 %300
    %302 = vrot.lane.b32.xlu0 %v245, 112
    %v303 = vpop.permute.xlu0 %302
    %304 = vrot.lane.b32.xlu0 %v249, 112
    %v305 = vpop.permute.xlu0 %304
    %306 = vrot.lane.b32.xlu0 %v253, 112
    %v307 = vpop.permute.xlu0 %306
    %308 = vrot.lane.b32.xlu0 %v257, 112
    %v309 = vpop.permute.xlu0 %308
    %310 = vrot.lane.b32.xlu0 %v261, 112
    %v311 = vpop.permute.xlu0 %310
    %312 = vrot.lane.b32.xlu0 %v265, 112
    %v313 = vpop.permute.xlu0 %312
    %314 = vrot.lane.b32.xlu0 %v269, 112
    %v315 = vpop.permute.xlu0 %314
    %316 = vrot.lane.b32.xlu0 %v273, 112
    %v317 = vpop.permute.xlu0 %316
    %318 = vrot.lane.b32.xlu0 %v277, 112
    %v319 = vpop.permute.xlu0 %318
    %320 = vrot.lane.b32.xlu0 %v281, 112
    %v321 = vpop.permute.xlu0 %320
    %322 = vrot.lane.b32.xlu0 %v285, 112
    %v323 = vpop.permute.xlu0 %322
    %324 = vrot.lane.b32.xlu0 %v289, 112
    %v325 = vpop.permute.xlu0 %324
    %326 = vrot.lane.b32.xlu0 %v293, 112
    %v327 = vpop.permute.xlu0 %326
    %328 = vrot.lane.b32.xlu0 %v297, 112
    %v329 = vpop.permute.xlu0 %328
    %vm346 = vcmask 1040384
    %v347 = vsel %vm346, %v143, %v299
    %v348 = vsel %vm346, %v157, %v301
    %v349 = vsel %vm346, %v165, %v303
    %v350 = vsel %vm346, %v167, %v305
    %v351 = vsel %vm346, %v150, %v307
    %v352 = vsel %vm346, %v164, %v309
    %v353 = vsel %vm346, %v166, %v311
    %v354 = vsel %vm346, %v168, %v313
    %v355 = vsel %vm346, %v192, %v315
    %v356 = vsel %vm346, %v206, %v317
    %v357 = vsel %vm346, %v214, %v319
    %v358 = vsel %vm346, %v216, %v321
    %v359 = vsel %vm346, %v199, %v323
    %v360 = vsel %vm346, %v213, %v325
    %v361 = vsel %vm346, %v215, %v327
    %v362 = vsel %vm346, %v217, %v329
    %v379 = vcombine.low %v347, %v348
    %v380 = vcombine.low %v349, %v350
    %v382 = vunpack.c.l.s4 1983009808
    %v383 = vunpack.c.0.s8 %v382
    %v384 = vlaneseq
    %v385 = vshrl.u32 %v384, 7
    %v386 = vsub.s32 %v383, %v385
    %v387 = vrot.slane %v379, %v386
    %v389 = vunpack.c.l.s4 1983009808
    %v390 = vunpack.c.0.s8 %v389
    %v391 = vlaneseq
    %v392 = vshrl.u32 %v391, 7
    %v393 = vsub.s32 %v390, %v392
    %v394 = vrot.slane %v380, %v393
    %v395 = vcombine.low %v387, %v394
    %v396 = vcombine.low %v351, %v352
    %v397 = vcombine.low %v353, %v354
    %v399 = vunpack.c.l.s4 1983009808
    %v400 = vunpack.c.0.s8 %v399
    %v401 = vlaneseq
    %v402 = vshrl.u32 %v401, 7
    %v403 = vsub.s32 %v400, %v402
    %v404 = vrot.slane %v396, %v403
    %v406 = vunpack.c.l.s4 1983009808
    %v407 = vunpack.c.0.s8 %v406
    %v408 = vlaneseq
    %v409 = vshrl.u32 %v408, 7
    %v410 = vsub.s32 %v407, %v409
    %v411 = vrot.slane %v397, %v410
    %v412 = vcombine.low %v404, %v411
    %v413 = vcombine.low %v355, %v356
    %v414 = vcombine.low %v357, %v358
    %v416 = vunpack.c.l.s4 1983009808
    %v417 = vunpack.c.0.s8 %v416
    %v418 = vlaneseq
    %v419 = vshrl.u32 %v418, 7
    %v420 = vsub.s32 %v417, %v419
    %v421 = vrot.slane %v413, %v420
    %v423 = vunpack.c.l.s4 1983009808
    %v424 = vunpack.c.0.s8 %v423
    %v425 = vlaneseq
    %v426 = vshrl.u32 %v425, 7
    %v427 = vsub.s32 %v424, %v426
    %v428 = vrot.slane %v414, %v427
    %v429 = vcombine.low %v421, %v428
    %v430 = vcombine.low %v359, %v360
    %v431 = vcombine.low %v361, %v362
    %v433 = vunpack.c.l.s4 1983009808
    %v434 = vunpack.c.0.s8 %v433
    %v435 = vlaneseq
    %v436 = vshrl.u32 %v435, 7
    %v437 = vsub.s32 %v434, %v436
    %v438 = vrot.slane %v430, %v437
    %v440 = vunpack.c.l.s4 1983009808
    %v441 = vunpack.c.0.s8 %v440
    %v442 = vlaneseq
    %v443 = vshrl.u32 %v442, 7
    %v444 = vsub.s32 %v441, %v443
    %v445 = vrot.slane %v431, %v444
    %v446 = vcombine.low %v438, %v445
    %451 = vxpose.xlu0.b32.start [1/16] %v395, 128
    %452 = vxpose.xlu0.b32.cont [2/16] %v412, 128
    %453 = vxpose.xlu0.b32.cont [3/16] %v429, 128
    %454 = vxpose.xlu0.b32.cont [4/16] %v446, 128
    %455 = vxpose.xlu0.b32.cont [5/16] 0.0, 128
    %456 = vxpose.xlu0.b32.cont [6/16] 0.0, 128
    %457 = vxpose.xlu0.b32.cont [7/16] 0.0, 128
    %458 = vxpose.xlu0.b32.cont [8/16] 0.0, 128
    %459 = vxpose.xlu0.b32.cont [9/16] 0.0, 128
    %460 = vxpose.xlu0.b32.cont [10/16] 0.0, 128
    %461 = vxpose.xlu0.b32.cont [11/16] 0.0, 128
    %462 = vxpose.xlu0.b32.cont [12/16] 0.0, 128
    %463 = vxpose.xlu0.b32.cont [13/16] 0.0, 128
    %464 = vxpose.xlu0.b32.cont [14/16] 0.0, 128
    %465 = vxpose.xlu0.b32.cont [15/16] 0.0, 128
    %466 = vxpose.xlu0.b32.end [16/16] 0.0, 128
    %v467 = vpop.trf.xlu0
    %v468 = vpop.trf.xlu0
    %v469 = vpop.trf.xlu0
    %v470 = vpop.trf.xlu0
    %v471 = vpop.trf.xlu0
    %v472 = vpop.trf.xlu0
    %v473 = vpop.trf.xlu0
    %v474 = vpop.trf.xlu0
    %v475 = vpop.trf.xlu0
    %v476 = vpop.trf.xlu0
    %v477 = vpop.trf.xlu0
    %v478 = vpop.trf.xlu0
    %v479 = vpop.trf.xlu0
    %v480 = vpop.trf.xlu0
    %v481 = vpop.trf.xlu0
    %v482 = vpop.trf.xlu0
    %vm483 = vcmask 261120
    %v485 = vsel %vm483, %v467, 0
    %v488 = vsel %vm483, %v468, 0
    %490 = vmatprep.subr.mxu0 0.0
    %491 = vmatpush1.msra.mxu0 0.0
    %492 = vmatprep.subr.mxu0 0.0
    %493 = vmatpush1.msra.mxu0 0.0
    %494 = vmatprep.subr.mxu0 0.0
    %495 = vmatpush1.msra.mxu0 0.0
    %496 = vmatprep.subr.mxu0 0.0
    %497 = vmatpush1.msra.mxu0 0.0
    %498 = vmatprep.subr.mxu0 0.0
    %499 = vmatpush1.msra.mxu0 0.0
    %500 = vmatprep.subr.mxu0 0.0
    %501 = vmatpush1.msra.mxu0 0.0
    %502 = vmatprep.subr.mxu0 0.0
    %503 = vmatpush1.msra.mxu0 0.0
    %504 = vmatprep.subr.mxu0 0.0
    %505 = vmatpush1.msra.mxu0 0.0
    %506 = vmatprep.subr.mxu0 0.0
    %507 = vmatpush1.msra.mxu0 0.0
    %508 = vmatprep.subr.mxu0 0.0
    %509 = vmatpush1.msra.mxu0 0.0
    %510 = vmatprep.subr.mxu0 0.0
    %511 = vmatpush1.msra.mxu0 0.0
    %512 = vmatprep.subr.mxu0 0.0
    %513 = vmatpush1.msra.mxu0 0.0
    %514 = vmatprep.subr.mxu0 0.0
    %515 = vmatpush1.msra.mxu0 %v446
    %516 = vmatprep.subr.mxu0 0.0
    %517 = vmatpush1.msra.mxu0 %v429
    %518 = vmatprep.subr.mxu0 0.0
    %519 = vmatpush1.msra.mxu0 %v412
    %520 = vmatprep.subr.mxu0 0.0
    %521 = vmatpush1.msra.mxu0 %v395
    %522 = vmatprep.subr.mxu0 0.0
    %523 = vmatpush2.msra.mxu0 0.0
    %524 = vmatprep.subr.mxu0 0.0
    %525 = vmatpush2.msra.mxu0 0.0
    %526 = vmatprep.subr.mxu0 0.0
    %527 = vmatpush2.msra.mxu0 0.0
    %528 = vmatprep.subr.mxu0 0.0
    %529 = vmatpush2.msra.mxu0 0.0
    %530 = vmatprep.subr.mxu0 0.0
    %531 = vmatpush2.msra.mxu0 0.0
    %532 = vmatprep.subr.mxu0 0.0
    %533 = vmatpush2.msra.mxu0 0.0
    %534 = vmatprep.subr.mxu0 0.0
    %535 = vmatpush2.msra.mxu0 0.0
    %536 = vmatprep.subr.mxu0 0.0
    %537 = vmatpush2.msra.mxu0 0.0
    %538 = vmatprep.subr.mxu0 0.0
    %539 = vmatpush2.msra.mxu0 0.0
    %540 = vmatprep.subr.mxu0 0.0
    %541 = vmatpush2.msra.mxu0 0.0
    %542 = vmatprep.subr.mxu0 0.0
    %543 = vmatpush2.msra.mxu0 0.0
    %544 = vmatprep.subr.mxu0 0.0
    %545 = vmatpush2.msra.mxu0 0.0
    %546 = vmatprep.subr.mxu0 0.0
    %547 = vmatpush2.msra.mxu0 0.0
    %548 = vmatprep.subr.mxu0 0.0
    %549 = vmatpush2.msra.mxu0 0.0
    %550 = vmatprep.subr.mxu0 0.0
    %551 = vmatpush2.msra.mxu0 0.0
    %552 = vmatprep.subr.mxu0 0.0
    %553 = vmatpush2.msra.mxu0 0.0
    %554 = vmatprep.mubr.f32.mxu0 0.0
    %555 = vmatmul.mubr.f32.gmra.mxu0 %v485
    %v556 = vpop.f32.mrf.mxu0
    %v557 = vadd.f32 0.0, %v556
    %v558 = vpop.f32.mrf.mxu0
    %559 = vmatprep.mubr.f32.mxu0 0.0
    %560 = vmatmul.mubr.f32.gmra.mxu0 %v488
    %v561 = vpop.f32.mrf.mxu0
    %v562 = vadd.f32 0.0, %v561
    %v563 = vpop.f32.mrf.mxu0
    %564 = vdwg.mxu0
    %v565 = vmul.f32 %v557, 6.25e-05
    %v566 = vmul.f32 %v562, 6.25e-05
    %v567 = vld [vmem:[%s2] sm:$0xff]
    %v568 = vld [vmem:[%s2 + $0x8] sm:$0xff]
    %v569 = vadd.f32 %v567, %v565
    %v570 = vadd.f32 %v568, %v566
    %v571 = vmax.f32 %v569, -1.0
    %v572 = vmax.f32 %v570, -1.0
    %v573 = vmin.f32 %v571, 1.0
    %v574 = vmin.f32 %v572, 1.0
    %vm575 = vcmask 130048
    %576 = vst.msk [vmem:[%s4] sm:$0xff] %vm575, %v573
    %577 = vst.msk [vmem:[%s4 + $0x8] sm:$0xff] %vm575, %v574
    %v578 = vpack.c.bf16 %v574, %v573
    %s579 = scalar_lea.vmem %s2, 16
    %v580 = vld [vmem:[%s579] sm:$0xff]
    %v581 = vld [vmem:[%s579 + $0x8] sm:$0xff]
    %v582 = vadd.f32 %v580, %v565
    %v583 = vadd.f32 %v581, %v566
    %v584 = vmax.f32 %v582, -1.0
    %v585 = vmax.f32 %v583, -1.0
    %v586 = vmin.f32 %v584, 1.0
    %v587 = vmin.f32 %v585, 1.0
    %s588 = scalar_lea.vmem %s4, 16
    %589 = vst.msk [vmem:[%s588] sm:$0xff] %vm575, %v586
    %590 = vst.msk [vmem:[%s588 + $0x8] sm:$0xff] %vm575, %v587
    %v591 = vpack.c.bf16 %v587, %v586
    %s592 = scalar_lea.vmem %s2, 32
    %v593 = vld [vmem:[%s592] sm:$0xff]
    %v594 = vld [vmem:[%s592 + $0x8] sm:$0xff]
    %v595 = vadd.f32 %v593, %v565
    %v596 = vadd.f32 %v594, %v566
    %v597 = vmax.f32 %v595, -1.0
    %v598 = vmax.f32 %v596, -1.0
    %v599 = vmin.f32 %v597, 1.0
    %v600 = vmin.f32 %v598, 1.0
    %s601 = scalar_lea.vmem %s4, 32
    %602 = vst.msk [vmem:[%s601] sm:$0xff] %vm575, %v599
    %603 = vst.msk [vmem:[%s601 + $0x8] sm:$0xff] %vm575, %v600
    %v604 = vpack.c.bf16 %v600, %v599
    %s605 = scalar_lea.vmem %s2, 48
    %v606 = vld [vmem:[%s605] sm:$0xff]
    %v607 = vld [vmem:[%s605 + $0x8] sm:$0xff]
    %v608 = vadd.f32 %v606, %v565
    %v609 = vadd.f32 %v607, %v566
    %v610 = vmax.f32 %v608, -1.0
    %v611 = vmax.f32 %v609, -1.0
    %v612 = vmin.f32 %v610, 1.0
    %v613 = vmin.f32 %v611, 1.0
    %s614 = scalar_lea.vmem %s4, 48
    %615 = vst.msk [vmem:[%s614] sm:$0xff] %vm575, %v612
    %616 = vst.msk [vmem:[%s614 + $0x8] sm:$0xff] %vm575, %v613
    %v617 = vpack.c.bf16 %v613, %v612
    %s618 = scalar_lea.vmem %s2, 64
    %v619 = vld [vmem:[%s618] sm:$0xff]
    %v620 = vld [vmem:[%s618 + $0x8] sm:$0xff]
    %v621 = vadd.f32 %v619, %v565
    %v622 = vadd.f32 %v620, %v566
    %v623 = vmax.f32 %v621, -1.0
    %v624 = vmax.f32 %v622, -1.0
    %v625 = vmin.f32 %v623, 1.0
    %v626 = vmin.f32 %v624, 1.0
    %s627 = scalar_lea.vmem %s4, 64
    %628 = vst.msk [vmem:[%s627] sm:$0xff] %vm575, %v625
    %629 = vst.msk [vmem:[%s627 + $0x8] sm:$0xff] %vm575, %v626
    %v630 = vpack.c.bf16 %v626, %v625
    %s631 = scalar_lea.vmem %s2, 80
    %v632 = vld [vmem:[%s631] sm:$0xff]
    %v633 = vld [vmem:[%s631 + $0x8] sm:$0xff]
    %v634 = vadd.f32 %v632, %v565
    %v635 = vadd.f32 %v633, %v566
    %v636 = vmax.f32 %v634, -1.0
    %v637 = vmax.f32 %v635, -1.0
    %v638 = vmin.f32 %v636, 1.0
    %v639 = vmin.f32 %v637, 1.0
    %s640 = scalar_lea.vmem %s4, 80
    %641 = vst.msk [vmem:[%s640] sm:$0xff] %vm575, %v638
    %642 = vst.msk [vmem:[%s640 + $0x8] sm:$0xff] %vm575, %v639
    %v643 = vpack.c.bf16 %v639, %v638
    %s644 = scalar_lea.vmem %s2, 96
    %v645 = vld [vmem:[%s644] sm:$0xff]
    %v646 = vld [vmem:[%s644 + $0x8] sm:$0xff]
    %v647 = vadd.f32 %v645, %v565
    %v648 = vadd.f32 %v646, %v566
    %v649 = vmax.f32 %v647, -1.0
    %v650 = vmax.f32 %v648, -1.0
    %v651 = vmin.f32 %v649, 1.0
    %v652 = vmin.f32 %v650, 1.0
    %s653 = scalar_lea.vmem %s4, 96
    %654 = vst.msk [vmem:[%s653] sm:$0xff] %vm575, %v651
    %655 = vst.msk [vmem:[%s653 + $0x8] sm:$0xff] %vm575, %v652
    %v656 = vpack.c.bf16 %v652, %v651
    %s657 = scalar_lea.vmem %s2, 112
    %v658 = vld [vmem:[%s657] sm:$0xff]
    %v659 = vld [vmem:[%s657 + $0x8] sm:$0xff]
    %v660 = vadd.f32 %v658, %v565
    %v661 = vadd.f32 %v659, %v566
    %v662 = vmax.f32 %v660, -1.0
    %v663 = vmax.f32 %v661, -1.0
    %v664 = vmin.f32 %v662, 1.0
    %v665 = vmin.f32 %v663, 1.0
    %s666 = scalar_lea.vmem %s4, 112
    %667 = vst.msk [vmem:[%s666] sm:$0xff] %vm575, %v664
    %668 = vst.msk [vmem:[%s666 + $0x8] sm:$0xff] %vm575, %v665
    %v669 = vpack.c.bf16 %v665, %v664
    %s670 = scalar_lea.vmem %s2, 128
    %v671 = vld [vmem:[%s670] sm:$0xff]
    %v672 = vld [vmem:[%s670 + $0x8] sm:$0xff]
    %v673 = vadd.f32 %v671, %v565
    %v674 = vadd.f32 %v672, %v566
    %v675 = vmax.f32 %v673, -1.0
    %v676 = vmax.f32 %v674, -1.0
    %v677 = vmin.f32 %v675, 1.0
    %v678 = vmin.f32 %v676, 1.0
    %s679 = scalar_lea.vmem %s4, 128
    %680 = vst.msk [vmem:[%s679] sm:$0xff] %vm575, %v677
    %681 = vst.msk [vmem:[%s679 + $0x8] sm:$0xff] %vm575, %v678
    %v682 = vpack.c.bf16 %v678, %v677
    %s683 = scalar_lea.vmem %s2, 144
    %v684 = vld [vmem:[%s683] sm:$0xff]
    %v685 = vld [vmem:[%s683 + $0x8] sm:$0xff]
    %v686 = vadd.f32 %v684, %v565
    %v687 = vadd.f32 %v685, %v566
    %v688 = vmax.f32 %v686, -1.0
    %v689 = vmax.f32 %v687, -1.0
    %v690 = vmin.f32 %v688, 1.0
    %v691 = vmin.f32 %v689, 1.0
    %s692 = scalar_lea.vmem %s4, 144
    %693 = vst.msk [vmem:[%s692] sm:$0xff] %vm575, %v690
    %694 = vst.msk [vmem:[%s692 + $0x8] sm:$0xff] %vm575, %v691
    %v695 = vpack.c.bf16 %v691, %v690
    %s696 = scalar_lea.vmem %s2, 160
    %v697 = vld [vmem:[%s696] sm:$0xff]
    %v698 = vld [vmem:[%s696 + $0x8] sm:$0xff]
    %v699 = vadd.f32 %v697, %v565
    %v700 = vadd.f32 %v698, %v566
    %v701 = vmax.f32 %v699, -1.0
    %v702 = vmax.f32 %v700, -1.0
    %v703 = vmin.f32 %v701, 1.0
    %v704 = vmin.f32 %v702, 1.0
    %s705 = scalar_lea.vmem %s4, 160
    %706 = vst.msk [vmem:[%s705] sm:$0xff] %vm575, %v703
    %707 = vst.msk [vmem:[%s705 + $0x8] sm:$0xff] %vm575, %v704
    %v708 = vpack.c.bf16 %v704, %v703
    %s709 = scalar_lea.vmem %s2, 176
    %v710 = vld [vmem:[%s709] sm:$0xff]
    %v711 = vld [vmem:[%s709 + $0x8] sm:$0xff]
    %v712 = vadd.f32 %v710, %v565
    %v713 = vadd.f32 %v711, %v566
    %v714 = vmax.f32 %v712, -1.0
    %v715 = vmax.f32 %v713, -1.0
    %v716 = vmin.f32 %v714, 1.0
    %v717 = vmin.f32 %v715, 1.0
    %s718 = scalar_lea.vmem %s4, 176
    %719 = vst.msk [vmem:[%s718] sm:$0xff] %vm575, %v716
    %720 = vst.msk [vmem:[%s718 + $0x8] sm:$0xff] %vm575, %v717
    %v721 = vpack.c.bf16 %v717, %v716
    %s722 = scalar_lea.vmem %s2, 192
    %v723 = vld [vmem:[%s722] sm:$0xff]
    %v724 = vld [vmem:[%s722 + $0x8] sm:$0xff]
    %v725 = vadd.f32 %v723, %v565
    %v726 = vadd.f32 %v724, %v566
    %v727 = vmax.f32 %v725, -1.0
    %v728 = vmax.f32 %v726, -1.0
    %v729 = vmin.f32 %v727, 1.0
    %v730 = vmin.f32 %v728, 1.0
    %s731 = scalar_lea.vmem %s4, 192
    %732 = vst.msk [vmem:[%s731] sm:$0xff] %vm575, %v729
    %733 = vst.msk [vmem:[%s731 + $0x8] sm:$0xff] %vm575, %v730
    %v734 = vpack.c.bf16 %v730, %v729
    %s735 = scalar_lea.vmem %s2, 208
    %v736 = vld [vmem:[%s735] sm:$0xff]
    %v737 = vld [vmem:[%s735 + $0x8] sm:$0xff]
    %v738 = vadd.f32 %v736, %v565
    %v739 = vadd.f32 %v737, %v566
    %v740 = vmax.f32 %v738, -1.0
    %v741 = vmax.f32 %v739, -1.0
    %v742 = vmin.f32 %v740, 1.0
    %v743 = vmin.f32 %v741, 1.0
    %s744 = scalar_lea.vmem %s4, 208
    %745 = vst.msk [vmem:[%s744] sm:$0xff] %vm575, %v742
    %746 = vst.msk [vmem:[%s744 + $0x8] sm:$0xff] %vm575, %v743
    %v747 = vpack.c.bf16 %v743, %v742
    %s748 = scalar_lea.vmem %s2, 224
    %v749 = vld [vmem:[%s748] sm:$0xff]
    %v750 = vld [vmem:[%s748 + $0x8] sm:$0xff]
    %v751 = vadd.f32 %v749, %v565
    %v752 = vadd.f32 %v750, %v566
    %v753 = vmax.f32 %v751, -1.0
    %v754 = vmax.f32 %v752, -1.0
    %v755 = vmin.f32 %v753, 1.0
    %v756 = vmin.f32 %v754, 1.0
    %s757 = scalar_lea.vmem %s4, 224
    %758 = vst.msk [vmem:[%s757] sm:$0xff] %vm575, %v755
    %759 = vst.msk [vmem:[%s757 + $0x8] sm:$0xff] %vm575, %v756
    %v760 = vpack.c.bf16 %v756, %v755
    %s761 = scalar_lea.vmem %s2, 240
    %v762 = vld [vmem:[%s761] sm:$0xff]
    %v763 = vld [vmem:[%s761 + $0x8] sm:$0xff]
    %v764 = vadd.f32 %v762, %v565
    %v765 = vadd.f32 %v763, %v566
    %v766 = vmax.f32 %v764, -1.0
    %v767 = vmax.f32 %v765, -1.0
    %v768 = vmin.f32 %v766, 1.0
    %v769 = vmin.f32 %v767, 1.0
    %s770 = scalar_lea.vmem %s4, 240
    %771 = vst.msk [vmem:[%s770] sm:$0xff] %vm575, %v768
    %772 = vst.msk [vmem:[%s770 + $0x8] sm:$0xff] %vm575, %v769
    %v773 = vpack.c.bf16 %v769, %v768
    %v774 = vpack.c.bf16 %v347, %v347
    %v775 = vpack.c.bf16 %v348, %v348
    %v776 = vpack.c.bf16 %v349, %v349
    %v777 = vpack.c.bf16 %v350, %v350
    %v778 = vpack.c.bf16 %v351, %v351
    %v779 = vpack.c.bf16 %v352, %v352
    %v780 = vpack.c.bf16 %v353, %v353
    %v781 = vpack.c.bf16 %v354, %v354
    %v782 = vpack.c.bf16 %v355, %v355
    %v783 = vpack.c.bf16 %v356, %v356
    %v784 = vpack.c.bf16 %v357, %v357
    %v785 = vpack.c.bf16 %v358, %v358
    %v786 = vpack.c.bf16 %v359, %v359
    %v787 = vpack.c.bf16 %v360, %v360
    %v788 = vpack.c.bf16 %v361, %v361
    %v789 = vpack.c.bf16 %v362, %v362
    %v791 = vsel %vm575, %v774, 0
    %793 = vmatprep.subr.bf16.mxu0 0
    %794 = vmatpush1.bf16.msra.mxu0 0
    %795 = vmatprep.subr.bf16.mxu0 0
    %796 = vmatpush1.bf16.msra.mxu0 0
    %797 = vmatprep.subr.bf16.mxu0 0
    %798 = vmatpush1.bf16.msra.mxu0 0
    %799 = vmatprep.subr.bf16.mxu0 0
    %800 = vmatpush1.bf16.msra.mxu0 0
    %801 = vmatprep.subr.bf16.mxu0 0
    %802 = vmatpush1.bf16.msra.mxu0 0
    %803 = vmatprep.subr.bf16.mxu0 0
    %804 = vmatpush1.bf16.msra.mxu0 0
    %805 = vmatprep.subr.bf16.mxu0 0
    %806 = vmatpush1.bf16.msra.mxu0 0
    %807 = vmatprep.subr.bf16.mxu0 0
    %808 = vmatpush1.bf16.msra.mxu0 %v578
    %809 = vmatprep.subr.bf16.mxu0 0
    %810 = vmatpush2.bf16.msra.mxu0 0
    %811 = vmatprep.subr.bf16.mxu0 0
    %812 = vmatpush2.bf16.msra.mxu0 0
    %813 = vmatprep.subr.bf16.mxu0 0
    %814 = vmatpush2.bf16.msra.mxu0 0
    %815 = vmatprep.subr.bf16.mxu0 0
    %816 = vmatpush2.bf16.msra.mxu0 0
    %817 = vmatprep.subr.bf16.mxu0 0
    %818 = vmatpush2.bf16.msra.mxu0 0
    %819 = vmatprep.subr.bf16.mxu0 0
    %820 = vmatpush2.bf16.msra.mxu0 0
    %821 = vmatprep.subr.bf16.mxu0 0
    %822 = vmatpush2.bf16.msra.mxu0 0
    %823 = vmatprep.subr.bf16.mxu0 0
    %824 = vmatpush2.bf16.msra.mxu0 0
    %825 = vmatprep.mubr.bf16.mxu0 0
    %826 = vmatmul.mubr.bf16.gmra.mxu0 %v791
    %v827 = vpop.f32.mrf.mxu0
    %v828 = vadd.f32 0.0, %v827
    %v829 = vpop.f32.mrf.mxu0
    %v830 = vpop.f32.mrf.mxu0
    %v831 = vpop.f32.mrf.mxu0
    %832 = vdwg.mxu0
    %v834 = vsel %vm575, %v775, 0
    %836 = vmatprep.subr.bf16.mxu0 0
    %837 = vmatpush1.bf16.msra.mxu0 0
    %838 = vmatprep.subr.bf16.mxu0 0
    %839 = vmatpush1.bf16.msra.mxu0 0
    %840 = vmatprep.subr.bf16.mxu0 0
    %841 = vmatpush1.bf16.msra.mxu0 0
    %842 = vmatprep.subr.bf16.mxu0 0
    %843 = vmatpush1.bf16.msra.mxu0 0
    %844 = vmatprep.subr.bf16.mxu0 0
    %845 = vmatpush1.bf16.msra.mxu0 0
    %846 = vmatprep.subr.bf16.mxu0 0
    %847 = vmatpush1.bf16.msra.mxu0 0
    %848 = vmatprep.subr.bf16.mxu0 0
    %849 = vmatpush1.bf16.msra.mxu0 0
    %850 = vmatprep.subr.bf16.mxu0 0
    %851 = vmatpush1.bf16.msra.mxu0 %v591
    %852 = vmatprep.subr.bf16.mxu0 0
    %853 = vmatpush2.bf16.msra.mxu0 0
    %854 = vmatprep.subr.bf16.mxu0 0
    %855 = vmatpush2.bf16.msra.mxu0 0
    %856 = vmatprep.subr.bf16.mxu0 0
    %857 = vmatpush2.bf16.msra.mxu0 0
    %858 = vmatprep.subr.bf16.mxu0 0
    %859 = vmatpush2.bf16.msra.mxu0 0
    %860 = vmatprep.subr.bf16.mxu0 0
    %861 = vmatpush2.bf16.msra.mxu0 0
    %862 = vmatprep.subr.bf16.mxu0 0
    %863 = vmatpush2.bf16.msra.mxu0 0
    %864 = vmatprep.subr.bf16.mxu0 0
    %865 = vmatpush2.bf16.msra.mxu0 0
    %866 = vmatprep.subr.bf16.mxu0 0
    %867 = vmatpush2.bf16.msra.mxu0 0
    %868 = vmatprep.mubr.bf16.mxu0 0
    %869 = vmatmul.mubr.bf16.gmra.mxu0 %v834
    %v870 = vpop.f32.mrf.mxu0
    %v871 = vadd.f32 0.0, %v870
    %v872 = vpop.f32.mrf.mxu0
    %v873 = vpop.f32.mrf.mxu0
    %v874 = vpop.f32.mrf.mxu0
    %875 = vdwg.mxu0
    %v877 = vsel %vm575, %v776, 0
    %879 = vmatprep.subr.bf16.mxu0 0
    %880 = vmatpush1.bf16.msra.mxu0 0
    %881 = vmatprep.subr.bf16.mxu0 0
    %882 = vmatpush1.bf16.msra.mxu0 0
    %883 = vmatprep.subr.bf16.mxu0 0
    %884 = vmatpush1.bf16.msra.mxu0 0
    %885 = vmatprep.subr.bf16.mxu0 0
    %886 = vmatpush1.bf16.msra.mxu0 0
    %887 = vmatprep.subr.bf16.mxu0 0
    %888 = vmatpush1.bf16.msra.mxu0 0
    %889 = vmatprep.subr.bf16.mxu0 0
    %890 = vmatpush1.bf16.msra.mxu0 0
    %891 = vmatprep.subr.bf16.mxu0 0
    %892 = vmatpush1.bf16.msra.mxu0 0
    %893 = vmatprep.subr.bf16.mxu0 0
    %894 = vmatpush1.bf16.msra.mxu0 %v604
    %895 = vmatprep.subr.bf16.mxu0 0
    %896 = vmatpush2.bf16.msra.mxu0 0
    %897 = vmatprep.subr.bf16.mxu0 0
    %898 = vmatpush2.bf16.msra.mxu0 0
    %899 = vmatprep.subr.bf16.mxu0 0
    %900 = vmatpush2.bf16.msra.mxu0 0
    %901 = vmatprep.subr.bf16.mxu0 0
    %902 = vmatpush2.bf16.msra.mxu0 0
    %903 = vmatprep.subr.bf16.mxu0 0
    %904 = vmatpush2.bf16.msra.mxu0 0
    %905 = vmatprep.subr.bf16.mxu0 0
    %906 = vmatpush2.bf16.msra.mxu0 0
    %907 = vmatprep.subr.bf16.mxu0 0
    %908 = vmatpush2.bf16.msra.mxu0 0
    %909 = vmatprep.subr.bf16.mxu0 0
    %910 = vmatpush2.bf16.msra.mxu0 0
    %911 = vmatprep.mubr.bf16.mxu0 0
    %912 = vmatmul.mubr.bf16.gmra.mxu0 %v877
    %v913 = vpop.f32.mrf.mxu0
    %v914 = vadd.f32 0.0, %v913
    %v915 = vpop.f32.mrf.mxu0
    %v916 = vpop.f32.mrf.mxu0
    %v917 = vpop.f32.mrf.mxu0
    %918 = vdwg.mxu0
    %v920 = vsel %vm575, %v777, 0
    %922 = vmatprep.subr.bf16.mxu0 0
    %923 = vmatpush1.bf16.msra.mxu0 0
    %924 = vmatprep.subr.bf16.mxu0 0
    %925 = vmatpush1.bf16.msra.mxu0 0
    %926 = vmatprep.subr.bf16.mxu0 0
    %927 = vmatpush1.bf16.msra.mxu0 0
    %928 = vmatprep.subr.bf16.mxu0 0
    %929 = vmatpush1.bf16.msra.mxu0 0
    %930 = vmatprep.subr.bf16.mxu0 0
    %931 = vmatpush1.bf16.msra.mxu0 0
    %932 = vmatprep.subr.bf16.mxu0 0
    %933 = vmatpush1.bf16.msra.mxu0 0
    %934 = vmatprep.subr.bf16.mxu0 0
    %935 = vmatpush1.bf16.msra.mxu0 0
    %936 = vmatprep.subr.bf16.mxu0 0
    %937 = vmatpush1.bf16.msra.mxu0 %v617
    %938 = vmatprep.subr.bf16.mxu0 0
    %939 = vmatpush2.bf16.msra.mxu0 0
    %940 = vmatprep.subr.bf16.mxu0 0
    %941 = vmatpush2.bf16.msra.mxu0 0
    %942 = vmatprep.subr.bf16.mxu0 0
    %943 = vmatpush2.bf16.msra.mxu0 0
    %944 = vmatprep.subr.bf16.mxu0 0
    %945 = vmatpush2.bf16.msra.mxu0 0
    %946 = vmatprep.subr.bf16.mxu0 0
    %947 = vmatpush2.bf16.msra.mxu0 0
    %948 = vmatprep.subr.bf16.mxu0 0
    %949 = vmatpush2.bf16.msra.mxu0 0
    %950 = vmatprep.subr.bf16.mxu0 0
    %951 = vmatpush2.bf16.msra.mxu0 0
    %952 = vmatprep.subr.bf16.mxu0 0
    %953 = vmatpush2.bf16.msra.mxu0 0
    %954 = vmatprep.mubr.bf16.mxu0 0
    %955 = vmatmul.mubr.bf16.gmra.mxu0 %v920
    %v956 = vpop.f32.mrf.mxu0
    %v957 = vadd.f32 0.0, %v956
    %v958 = vpop.f32.mrf.mxu0
    %v959 = vpop.f32.mrf.mxu0
    %v960 = vpop.f32.mrf.mxu0
    %961 = vdwg.mxu0
    %v963 = vsel %vm575, %v778, 0
    %965 = vmatprep.subr.bf16.mxu0 0
    %966 = vmatpush1.bf16.msra.mxu0 0
    %967 = vmatprep.subr.bf16.mxu0 0
    %968 = vmatpush1.bf16.msra.mxu0 0
    %969 = vmatprep.subr.bf16.mxu0 0
    %970 = vmatpush1.bf16.msra.mxu0 0
    %971 = vmatprep.subr.bf16.mxu0 0
    %972 = vmatpush1.bf16.msra.mxu0 0
    %973 = vmatprep.subr.bf16.mxu0 0
    %974 = vmatpush1.bf16.msra.mxu0 0
    %975 = vmatprep.subr.bf16.mxu0 0
    %976 = vmatpush1.bf16.msra.mxu0 0
    %977 = vmatprep.subr.bf16.mxu0 0
    %978 = vmatpush1.bf16.msra.mxu0 0
    %979 = vmatprep.subr.bf16.mxu0 0
    %980 = vmatpush1.bf16.msra.mxu0 %v630
    %981 = vmatprep.subr.bf16.mxu0 0
    %982 = vmatpush2.bf16.msra.mxu0 0
    %983 = vmatprep.subr.bf16.mxu0 0
    %984 = vmatpush2.bf16.msra.mxu0 0
    %985 = vmatprep.subr.bf16.mxu0 0
    %986 = vmatpush2.bf16.msra.mxu0 0
    %987 = vmatprep.subr.bf16.mxu0 0
    %988 = vmatpush2.bf16.msra.mxu0 0
    %989 = vmatprep.subr.bf16.mxu0 0
    %990 = vmatpush2.bf16.msra.mxu0 0
    %991 = vmatprep.subr.bf16.mxu0 0
    %992 = vmatpush2.bf16.msra.mxu0 0
    %993 = vmatprep.subr.bf16.mxu0 0
    %994 = vmatpush2.bf16.msra.mxu0 0
    %995 = vmatprep.subr.bf16.mxu0 0
    %996 = vmatpush2.bf16.msra.mxu0 0
    %997 = vmatprep.mubr.bf16.mxu0 0
    %998 = vmatmul.mubr.bf16.gmra.mxu0 %v963
    %v999 = vpop.f32.mrf.mxu0
    %v1000 = vadd.f32 0.0, %v999
    %v1001 = vpop.f32.mrf.mxu0
    %v1002 = vpop.f32.mrf.mxu0
    %v1003 = vpop.f32.mrf.mxu0
    %1004 = vdwg.mxu0
    %v1006 = vsel %vm575, %v779, 0
    %1008 = vmatprep.subr.bf16.mxu0 0
    %1009 = vmatpush1.bf16.msra.mxu0 0
    %1010 = vmatprep.subr.bf16.mxu0 0
    %1011 = vmatpush1.bf16.msra.mxu0 0
    %1012 = vmatprep.subr.bf16.mxu0 0
    %1013 = vmatpush1.bf16.msra.mxu0 0
    %1014 = vmatprep.subr.bf16.mxu0 0
    %1015 = vmatpush1.bf16.msra.mxu0 0
    %1016 = vmatprep.subr.bf16.mxu0 0
    %1017 = vmatpush1.bf16.msra.mxu0 0
    %1018 = vmatprep.subr.bf16.mxu0 0
    %1019 = vmatpush1.bf16.msra.mxu0 0
    %1020 = vmatprep.subr.bf16.mxu0 0
    %1021 = vmatpush1.bf16.msra.mxu0 0
    %1022 = vmatprep.subr.bf16.mxu0 0
    %1023 = vmatpush1.bf16.msra.mxu0 %v643
    %1024 = vmatprep.subr.bf16.mxu0 0
    %1025 = vmatpush2.bf16.msra.mxu0 0
    %1026 = vmatprep.subr.bf16.mxu0 0
    %1027 = vmatpush2.bf16.msra.mxu0 0
    %1028 = vmatprep.subr.bf16.mxu0 0
    %1029 = vmatpush2.bf16.msra.mxu0 0
    %1030 = vmatprep.subr.bf16.mxu0 0
    %1031 = vmatpush2.bf16.msra.mxu0 0
    %1032 = vmatprep.subr.bf16.mxu0 0
    %1033 = vmatpush2.bf16.msra.mxu0 0
    %1034 = vmatprep.subr.bf16.mxu0 0
    %1035 = vmatpush2.bf16.msra.mxu0 0
    %1036 = vmatprep.subr.bf16.mxu0 0
    %1037 = vmatpush2.bf16.msra.mxu0 0
    %1038 = vmatprep.subr.bf16.mxu0 0
    %1039 = vmatpush2.bf16.msra.mxu0 0
    %1040 = vmatprep.mubr.bf16.mxu0 0
    %1041 = vmatmul.mubr.bf16.gmra.mxu0 %v1006
    %v1042 = vpop.f32.mrf.mxu0
    %v1043 = vadd.f32 0.0, %v1042
    %v1044 = vpop.f32.mrf.mxu0
    %v1045 = vpop.f32.mrf.mxu0
    %v1046 = vpop.f32.mrf.mxu0
    %1047 = vdwg.mxu0
    %v1049 = vsel %vm575, %v780, 0
    %1051 = vmatprep.subr.bf16.mxu0 0
    %1052 = vmatpush1.bf16.msra.mxu0 0
    %1053 = vmatprep.subr.bf16.mxu0 0
    %1054 = vmatpush1.bf16.msra.mxu0 0
    %1055 = vmatprep.subr.bf16.mxu0 0
    %1056 = vmatpush1.bf16.msra.mxu0 0
    %1057 = vmatprep.subr.bf16.mxu0 0
    %1058 = vmatpush1.bf16.msra.mxu0 0
    %1059 = vmatprep.subr.bf16.mxu0 0
    %1060 = vmatpush1.bf16.msra.mxu0 0
    %1061 = vmatprep.subr.bf16.mxu0 0
    %1062 = vmatpush1.bf16.msra.mxu0 0
    %1063 = vmatprep.subr.bf16.mxu0 0
    %1064 = vmatpush1.bf16.msra.mxu0 0
    %1065 = vmatprep.subr.bf16.mxu0 0
    %1066 = vmatpush1.bf16.msra.mxu0 %v656
    %1067 = vmatprep.subr.bf16.mxu0 0
    %1068 = vmatpush2.bf16.msra.mxu0 0
    %1069 = vmatprep.subr.bf16.mxu0 0
    %1070 = vmatpush2.bf16.msra.mxu0 0
    %1071 = vmatprep.subr.bf16.mxu0 0
    %1072 = vmatpush2.bf16.msra.mxu0 0
    %1073 = vmatprep.subr.bf16.mxu0 0
    %1074 = vmatpush2.bf16.msra.mxu0 0
    %1075 = vmatprep.subr.bf16.mxu0 0
    %1076 = vmatpush2.bf16.msra.mxu0 0
    %1077 = vmatprep.subr.bf16.mxu0 0
    %1078 = vmatpush2.bf16.msra.mxu0 0
    %1079 = vmatprep.subr.bf16.mxu0 0
    %1080 = vmatpush2.bf16.msra.mxu0 0
    %1081 = vmatprep.subr.bf16.mxu0 0
    %1082 = vmatpush2.bf16.msra.mxu0 0
    %1083 = vmatprep.mubr.bf16.mxu0 0
    %1084 = vmatmul.mubr.bf16.gmra.mxu0 %v1049
    %v1085 = vpop.f32.mrf.mxu0
    %v1086 = vadd.f32 0.0, %v1085
    %v1087 = vpop.f32.mrf.mxu0
    %v1088 = vpop.f32.mrf.mxu0
    %v1089 = vpop.f32.mrf.mxu0
    %1090 = vdwg.mxu0
    %v1092 = vsel %vm575, %v781, 0
    %1094 = vmatprep.subr.bf16.mxu0 0
    %1095 = vmatpush1.bf16.msra.mxu0 0
    %1096 = vmatprep.subr.bf16.mxu0 0
    %1097 = vmatpush1.bf16.msra.mxu0 0
    %1098 = vmatprep.subr.bf16.mxu0 0
    %1099 = vmatpush1.bf16.msra.mxu0 0
    %1100 = vmatprep.subr.bf16.mxu0 0
    %1101 = vmatpush1.bf16.msra.mxu0 0
    %1102 = vmatprep.subr.bf16.mxu0 0
    %1103 = vmatpush1.bf16.msra.mxu0 0
    %1104 = vmatprep.subr.bf16.mxu0 0
    %1105 = vmatpush1.bf16.msra.mxu0 0
    %1106 = vmatprep.subr.bf16.mxu0 0
    %1107 = vmatpush1.bf16.msra.mxu0 0
    %1108 = vmatprep.subr.bf16.mxu0 0
    %1109 = vmatpush1.bf16.msra.mxu0 %v669
    %1110 = vmatprep.subr.bf16.mxu0 0
    %1111 = vmatpush2.bf16.msra.mxu0 0
    %1112 = vmatprep.subr.bf16.mxu0 0
    %1113 = vmatpush2.bf16.msra.mxu0 0
    %1114 = vmatprep.subr.bf16.mxu0 0
    %1115 = vmatpush2.bf16.msra.mxu0 0
    %1116 = vmatprep.subr.bf16.mxu0 0
    %1117 = vmatpush2.bf16.msra.mxu0 0
    %1118 = vmatprep.subr.bf16.mxu0 0
    %1119 = vmatpush2.bf16.msra.mxu0 0
    %1120 = vmatprep.subr.bf16.mxu0 0
    %1121 = vmatpush2.bf16.msra.mxu0 0
    %1122 = vmatprep.subr.bf16.mxu0 0
    %1123 = vmatpush2.bf16.msra.mxu0 0
    %1124 = vmatprep.subr.bf16.mxu0 0
    %1125 = vmatpush2.bf16.msra.mxu0 0
    %1126 = vmatprep.mubr.bf16.mxu0 0
    %1127 = vmatmul.mubr.bf16.gmra.mxu0 %v1092
    %v1128 = vpop.f32.mrf.mxu0
    %v1129 = vadd.f32 0.0, %v1128
    %v1130 = vpop.f32.mrf.mxu0
    %v1131 = vpop.f32.mrf.mxu0
    %v1132 = vpop.f32.mrf.mxu0
    %1133 = vdwg.mxu0
    %v1135 = vsel %vm575, %v782, 0
    %1137 = vmatprep.subr.bf16.mxu0 0
    %1138 = vmatpush1.bf16.msra.mxu0 0
    %1139 = vmatprep.subr.bf16.mxu0 0
    %1140 = vmatpush1.bf16.msra.mxu0 0
    %1141 = vmatprep.subr.bf16.mxu0 0
    %1142 = vmatpush1.bf16.msra.mxu0 0
    %1143 = vmatprep.subr.bf16.mxu0 0
    %1144 = vmatpush1.bf16.msra.mxu0 0
    %1145 = vmatprep.subr.bf16.mxu0 0
    %1146 = vmatpush1.bf16.msra.mxu0 0
    %1147 = vmatprep.subr.bf16.mxu0 0
    %1148 = vmatpush1.bf16.msra.mxu0 0
    %1149 = vmatprep.subr.bf16.mxu0 0
    %1150 = vmatpush1.bf16.msra.mxu0 0
    %1151 = vmatprep.subr.bf16.mxu0 0
    %1152 = vmatpush1.bf16.msra.mxu0 %v682
    %1153 = vmatprep.subr.bf16.mxu0 0
    %1154 = vmatpush2.bf16.msra.mxu0 0
    %1155 = vmatprep.subr.bf16.mxu0 0
    %1156 = vmatpush2.bf16.msra.mxu0 0
    %1157 = vmatprep.subr.bf16.mxu0 0
    %1158 = vmatpush2.bf16.msra.mxu0 0
    %1159 = vmatprep.subr.bf16.mxu0 0
    %1160 = vmatpush2.bf16.msra.mxu0 0
    %1161 = vmatprep.subr.bf16.mxu0 0
    %1162 = vmatpush2.bf16.msra.mxu0 0
    %1163 = vmatprep.subr.bf16.mxu0 0
    %1164 = vmatpush2.bf16.msra.mxu0 0
    %1165 = vmatprep.subr.bf16.mxu0 0
    %1166 = vmatpush2.bf16.msra.mxu0 0
    %1167 = vmatprep.subr.bf16.mxu0 0
    %1168 = vmatpush2.bf16.msra.mxu0 0
    %1169 = vmatprep.mubr.bf16.mxu0 0
    %1170 = vmatmul.mubr.bf16.gmra.mxu0 %v1135
    %v1171 = vpop.f32.mrf.mxu0
    %v1172 = vadd.f32 0.0, %v1171
    %v1173 = vpop.f32.mrf.mxu0
    %v1174 = vpop.f32.mrf.mxu0
    %v1175 = vpop.f32.mrf.mxu0
    %1176 = vdwg.mxu0
    %v1178 = vsel %vm575, %v783, 0
    %1180 = vmatprep.subr.bf16.mxu0 0
    %1181 = vmatpush1.bf16.msra.mxu0 0
    %1182 = vmatprep.subr.bf16.mxu0 0
    %1183 = vmatpush1.bf16.msra.mxu0 0
    %1184 = vmatprep.subr.bf16.mxu0 0
    %1185 = vmatpush1.bf16.msra.mxu0 0
    %1186 = vmatprep.subr.bf16.mxu0 0
    %1187 = vmatpush1.bf16.msra.mxu0 0
    %1188 = vmatprep.subr.bf16.mxu0 0
    %1189 = vmatpush1.bf16.msra.mxu0 0
    %1190 = vmatprep.subr.bf16.mxu0 0
    %1191 = vmatpush1.bf16.msra.mxu0 0
    %1192 = vmatprep.subr.bf16.mxu0 0
    %1193 = vmatpush1.bf16.msra.mxu0 0
    %1194 = vmatprep.subr.bf16.mxu0 0
    %1195 = vmatpush1.bf16.msra.mxu0 %v695
    %1196 = vmatprep.subr.bf16.mxu0 0
    %1197 = vmatpush2.bf16.msra.mxu0 0
    %1198 = vmatprep.subr.bf16.mxu0 0
    %1199 = vmatpush2.bf16.msra.mxu0 0
    %1200 = vmatprep.subr.bf16.mxu0 0
    %1201 = vmatpush2.bf16.msra.mxu0 0
    %1202 = vmatprep.subr.bf16.mxu0 0
    %1203 = vmatpush2.bf16.msra.mxu0 0
    %1204 = vmatprep.subr.bf16.mxu0 0
    %1205 = vmatpush2.bf16.msra.mxu0 0
    %1206 = vmatprep.subr.bf16.mxu0 0
    %1207 = vmatpush2.bf16.msra.mxu0 0
    %1208 = vmatprep.subr.bf16.mxu0 0
    %1209 = vmatpush2.bf16.msra.mxu0 0
    %1210 = vmatprep.subr.bf16.mxu0 0
    %1211 = vmatpush2.bf16.msra.mxu0 0
    %1212 = vmatprep.mubr.bf16.mxu0 0
    %1213 = vmatmul.mubr.bf16.gmra.mxu0 %v1178
    %v1214 = vpop.f32.mrf.mxu0
    %v1215 = vadd.f32 0.0, %v1214
    %v1216 = vpop.f32.mrf.mxu0
    %v1217 = vpop.f32.mrf.mxu0
    %v1218 = vpop.f32.mrf.mxu0
    %1219 = vdwg.mxu0
    %v1221 = vsel %vm575, %v784, 0
    %1223 = vmatprep.subr.bf16.mxu0 0
    %1224 = vmatpush1.bf16.msra.mxu0 0
    %1225 = vmatprep.subr.bf16.mxu0 0
    %1226 = vmatpush1.bf16.msra.mxu0 0
    %1227 = vmatprep.subr.bf16.mxu0 0
    %1228 = vmatpush1.bf16.msra.mxu0 0
    %1229 = vmatprep.subr.bf16.mxu0 0
    %1230 = vmatpush1.bf16.msra.mxu0 0
    %1231 = vmatprep.subr.bf16.mxu0 0
    %1232 = vmatpush1.bf16.msra.mxu0 0
    %1233 = vmatprep.subr.bf16.mxu0 0
    %1234 = vmatpush1.bf16.msra.mxu0 0
    %1235 = vmatprep.subr.bf16.mxu0 0
    %1236 = vmatpush1.bf16.msra.mxu0 0
    %1237 = vmatprep.subr.bf16.mxu0 0
    %1238 = vmatpush1.bf16.msra.mxu0 %v708
    %1239 = vmatprep.subr.bf16.mxu0 0
    %1240 = vmatpush2.bf16.msra.mxu0 0
    %1241 = vmatprep.subr.bf16.mxu0 0
    %1242 = vmatpush2.bf16.msra.mxu0 0
    %1243 = vmatprep.subr.bf16.mxu0 0
    %1244 = vmatpush2.bf16.msra.mxu0 0
    %1245 = vmatprep.subr.bf16.mxu0 0
    %1246 = vmatpush2.bf16.msra.mxu0 0
    %1247 = vmatprep.subr.bf16.mxu0 0
    %1248 = vmatpush2.bf16.msra.mxu0 0
    %1249 = vmatprep.subr.bf16.mxu0 0
    %1250 = vmatpush2.bf16.msra.mxu0 0
    %1251 = vmatprep.subr.bf16.mxu0 0
    %1252 = vmatpush2.bf16.msra.mxu0 0
    %1253 = vmatprep.subr.bf16.mxu0 0
    %1254 = vmatpush2.bf16.msra.mxu0 0
    %1255 = vmatprep.mubr.bf16.mxu0 0
    %1256 = vmatmul.mubr.bf16.gmra.mxu0 %v1221
    %v1257 = vpop.f32.mrf.mxu0
    %v1258 = vadd.f32 0.0, %v1257
    %v1259 = vpop.f32.mrf.mxu0
    %v1260 = vpop.f32.mrf.mxu0
    %v1261 = vpop.f32.mrf.mxu0
    %1262 = vdwg.mxu0
    %v1264 = vsel %vm575, %v785, 0
    %1266 = vmatprep.subr.bf16.mxu0 0
    %1267 = vmatpush1.bf16.msra.mxu0 0
    %1268 = vmatprep.subr.bf16.mxu0 0
    %1269 = vmatpush1.bf16.msra.mxu0 0
    %1270 = vmatprep.subr.bf16.mxu0 0
    %1271 = vmatpush1.bf16.msra.mxu0 0
    %1272 = vmatprep.subr.bf16.mxu0 0
    %1273 = vmatpush1.bf16.msra.mxu0 0
    %1274 = vmatprep.subr.bf16.mxu0 0
    %1275 = vmatpush1.bf16.msra.mxu0 0
    %1276 = vmatprep.subr.bf16.mxu0 0
    %1277 = vmatpush1.bf16.msra.mxu0 0
    %1278 = vmatprep.subr.bf16.mxu0 0
    %1279 = vmatpush1.bf16.msra.mxu0 0
    %1280 = vmatprep.subr.bf16.mxu0 0
    %1281 = vmatpush1.bf16.msra.mxu0 %v721
    %1282 = vmatprep.subr.bf16.mxu0 0
    %1283 = vmatpush2.bf16.msra.mxu0 0
    %1284 = vmatprep.subr.bf16.mxu0 0
    %1285 = vmatpush2.bf16.msra.mxu0 0
    %1286 = vmatprep.subr.bf16.mxu0 0
    %1287 = vmatpush2.bf16.msra.mxu0 0
    %1288 = vmatprep.subr.bf16.mxu0 0
    %1289 = vmatpush2.bf16.msra.mxu0 0
    %1290 = vmatprep.subr.bf16.mxu0 0
    %1291 = vmatpush2.bf16.msra.mxu0 0
    %1292 = vmatprep.subr.bf16.mxu0 0
    %1293 = vmatpush2.bf16.msra.mxu0 0
    %1294 = vmatprep.subr.bf16.mxu0 0
    %1295 = vmatpush2.bf16.msra.mxu0 0
    %1296 = vmatprep.subr.bf16.mxu0 0
    %1297 = vmatpush2.bf16.msra.mxu0 0
    %1298 = vmatprep.mubr.bf16.mxu0 0
    %1299 = vmatmul.mubr.bf16.gmra.mxu0 %v1264
    %v1300 = vpop.f32.mrf.mxu0
    %v1301 = vadd.f32 0.0, %v1300
    %v1302 = vpop.f32.mrf.mxu0
    %v1303 = vpop.f32.mrf.mxu0
    %v1304 = vpop.f32.mrf.mxu0
    %1305 = vdwg.mxu0
    %v1307 = vsel %vm575, %v786, 0
    %1309 = vmatprep.subr.bf16.mxu0 0
    %1310 = vmatpush1.bf16.msra.mxu0 0
    %1311 = vmatprep.subr.bf16.mxu0 0
    %1312 = vmatpush1.bf16.msra.mxu0 0
    %1313 = vmatprep.subr.bf16.mxu0 0
    %1314 = vmatpush1.bf16.msra.mxu0 0
    %1315 = vmatprep.subr.bf16.mxu0 0
    %1316 = vmatpush1.bf16.msra.mxu0 0
    %1317 = vmatprep.subr.bf16.mxu0 0
    %1318 = vmatpush1.bf16.msra.mxu0 0
    %1319 = vmatprep.subr.bf16.mxu0 0
    %1320 = vmatpush1.bf16.msra.mxu0 0
    %1321 = vmatprep.subr.bf16.mxu0 0
    %1322 = vmatpush1.bf16.msra.mxu0 0
    %1323 = vmatprep.subr.bf16.mxu0 0
    %1324 = vmatpush1.bf16.msra.mxu0 %v734
    %1325 = vmatprep.subr.bf16.mxu0 0
    %1326 = vmatpush2.bf16.msra.mxu0 0
    %1327 = vmatprep.subr.bf16.mxu0 0
    %1328 = vmatpush2.bf16.msra.mxu0 0
    %1329 = vmatprep.subr.bf16.mxu0 0
    %1330 = vmatpush2.bf16.msra.mxu0 0
    %1331 = vmatprep.subr.bf16.mxu0 0
    %1332 = vmatpush2.bf16.msra.mxu0 0
    %1333 = vmatprep.subr.bf16.mxu0 0
    %1334 = vmatpush2.bf16.msra.mxu0 0
    %1335 = vmatprep.subr.bf16.mxu0 0
    %1336 = vmatpush2.bf16.msra.mxu0 0
    %1337 = vmatprep.subr.bf16.mxu0 0
    %1338 = vmatpush2.bf16.msra.mxu0 0
    %1339 = vmatprep.subr.bf16.mxu0 0
    %1340 = vmatpush2.bf16.msra.mxu0 0
    %1341 = vmatprep.mubr.bf16.mxu0 0
    %1342 = vmatmul.mubr.bf16.gmra.mxu0 %v1307
    %v1343 = vpop.f32.mrf.mxu0
    %v1344 = vadd.f32 0.0, %v1343
    %v1345 = vpop.f32.mrf.mxu0
    %v1346 = vpop.f32.mrf.mxu0
    %v1347 = vpop.f32.mrf.mxu0
    %1348 = vdwg.mxu0
    %v1350 = vsel %vm575, %v787, 0
    %1352 = vmatprep.subr.bf16.mxu0 0
    %1353 = vmatpush1.bf16.msra.mxu0 0
    %1354 = vmatprep.subr.bf16.mxu0 0
    %1355 = vmatpush1.bf16.msra.mxu0 0
    %1356 = vmatprep.subr.bf16.mxu0 0
    %1357 = vmatpush1.bf16.msra.mxu0 0
    %1358 = vmatprep.subr.bf16.mxu0 0
    %1359 = vmatpush1.bf16.msra.mxu0 0
    %1360 = vmatprep.subr.bf16.mxu0 0
    %1361 = vmatpush1.bf16.msra.mxu0 0
    %1362 = vmatprep.subr.bf16.mxu0 0
    %1363 = vmatpush1.bf16.msra.mxu0 0
    %1364 = vmatprep.subr.bf16.mxu0 0
    %1365 = vmatpush1.bf16.msra.mxu0 0
    %1366 = vmatprep.subr.bf16.mxu0 0
    %1367 = vmatpush1.bf16.msra.mxu0 %v747
    %1368 = vmatprep.subr.bf16.mxu0 0
    %1369 = vmatpush2.bf16.msra.mxu0 0
    %1370 = vmatprep.subr.bf16.mxu0 0
    %1371 = vmatpush2.bf16.msra.mxu0 0
    %1372 = vmatprep.subr.bf16.mxu0 0
    %1373 = vmatpush2.bf16.msra.mxu0 0
    %1374 = vmatprep.subr.bf16.mxu0 0
    %1375 = vmatpush2.bf16.msra.mxu0 0
    %1376 = vmatprep.subr.bf16.mxu0 0
    %1377 = vmatpush2.bf16.msra.mxu0 0
    %1378 = vmatprep.subr.bf16.mxu0 0
    %1379 = vmatpush2.bf16.msra.mxu0 0
    %1380 = vmatprep.subr.bf16.mxu0 0
    %1381 = vmatpush2.bf16.msra.mxu0 0
    %1382 = vmatprep.subr.bf16.mxu0 0
    %1383 = vmatpush2.bf16.msra.mxu0 0
    %1384 = vmatprep.mubr.bf16.mxu0 0
    %1385 = vmatmul.mubr.bf16.gmra.mxu0 %v1350
    %v1386 = vpop.f32.mrf.mxu0
    %v1387 = vadd.f32 0.0, %v1386
    %v1388 = vpop.f32.mrf.mxu0
    %v1389 = vpop.f32.mrf.mxu0
    %v1390 = vpop.f32.mrf.mxu0
    %1391 = vdwg.mxu0
    %v1393 = vsel %vm575, %v788, 0
    %1395 = vmatprep.subr.bf16.mxu0 0
    %1396 = vmatpush1.bf16.msra.mxu0 0
    %1397 = vmatprep.subr.bf16.mxu0 0
    %1398 = vmatpush1.bf16.msra.mxu0 0
    %1399 = vmatprep.subr.bf16.mxu0 0
    %1400 = vmatpush1.bf16.msra.mxu0 0
    %1401 = vmatprep.subr.bf16.mxu0 0
    %1402 = vmatpush1.bf16.msra.mxu0 0
    %1403 = vmatprep.subr.bf16.mxu0 0
    %1404 = vmatpush1.bf16.msra.mxu0 0
    %1405 = vmatprep.subr.bf16.mxu0 0
    %1406 = vmatpush1.bf16.msra.mxu0 0
    %1407 = vmatprep.subr.bf16.mxu0 0
    %1408 = vmatpush1.bf16.msra.mxu0 0
    %1409 = vmatprep.subr.bf16.mxu0 0
    %1410 = vmatpush1.bf16.msra.mxu0 %v760
    %1411 = vmatprep.subr.bf16.mxu0 0
    %1412 = vmatpush2.bf16.msra.mxu0 0
    %1413 = vmatprep.subr.bf16.mxu0 0
    %1414 = vmatpush2.bf16.msra.mxu0 0
    %1415 = vmatprep.subr.bf16.mxu0 0
    %1416 = vmatpush2.bf16.msra.mxu0 0
    %1417 = vmatprep.subr.bf16.mxu0 0
    %1418 = vmatpush2.bf16.msra.mxu0 0
    %1419 = vmatprep.subr.bf16.mxu0 0
    %1420 = vmatpush2.bf16.msra.mxu0 0
    %1421 = vmatprep.subr.bf16.mxu0 0
    %1422 = vmatpush2.bf16.msra.mxu0 0
    %1423 = vmatprep.subr.bf16.mxu0 0
    %1424 = vmatpush2.bf16.msra.mxu0 0
    %1425 = vmatprep.subr.bf16.mxu0 0
    %1426 = vmatpush2.bf16.msra.mxu0 0
    %1427 = vmatprep.mubr.bf16.mxu0 0
    %1428 = vmatmul.mubr.bf16.gmra.mxu0 %v1393
    %v1429 = vpop.f32.mrf.mxu0
    %v1430 = vadd.f32 0.0, %v1429
    %v1431 = vpop.f32.mrf.mxu0
    %v1432 = vpop.f32.mrf.mxu0
    %v1433 = vpop.f32.mrf.mxu0
    %1434 = vdwg.mxu0
    %v1436 = vsel %vm575, %v789, 0
    %1438 = vmatprep.subr.bf16.mxu0 0
    %1439 = vmatpush1.bf16.msra.mxu0 0
    %1440 = vmatprep.subr.bf16.mxu0 0
    %1441 = vmatpush1.bf16.msra.mxu0 0
    %1442 = vmatprep.subr.bf16.mxu0 0
    %1443 = vmatpush1.bf16.msra.mxu0 0
    %1444 = vmatprep.subr.bf16.mxu0 0
    %1445 = vmatpush1.bf16.msra.mxu0 0
    %1446 = vmatprep.subr.bf16.mxu0 0
    %1447 = vmatpush1.bf16.msra.mxu0 0
    %1448 = vmatprep.subr.bf16.mxu0 0
    %1449 = vmatpush1.bf16.msra.mxu0 0
    %1450 = vmatprep.subr.bf16.mxu0 0
    %1451 = vmatpush1.bf16.msra.mxu0 0
    %1452 = vmatprep.subr.bf16.mxu0 0
    %1453 = vmatpush1.bf16.msra.mxu0 %v773
    %1454 = vmatprep.subr.bf16.mxu0 0
    %1455 = vmatpush2.bf16.msra.mxu0 0
    %1456 = vmatprep.subr.bf16.mxu0 0
    %1457 = vmatpush2.bf16.msra.mxu0 0
    %1458 = vmatprep.subr.bf16.mxu0 0
    %1459 = vmatpush2.bf16.msra.mxu0 0
    %1460 = vmatprep.subr.bf16.mxu0 0
    %1461 = vmatpush2.bf16.msra.mxu0 0
    %1462 = vmatprep.subr.bf16.mxu0 0
    %1463 = vmatpush2.bf16.msra.mxu0 0
    %1464 = vmatprep.subr.bf16.mxu0 0
    %1465 = vmatpush2.bf16.msra.mxu0 0
    %1466 = vmatprep.subr.bf16.mxu0 0
    %1467 = vmatpush2.bf16.msra.mxu0 0
    %1468 = vmatprep.subr.bf16.mxu0 0
    %1469 = vmatpush2.bf16.msra.mxu0 0
    %1470 = vmatprep.mubr.bf16.mxu0 0
    %1471 = vmatmul.mubr.bf16.gmra.mxu0 %v1436
    %v1472 = vpop.f32.mrf.mxu0
    %v1473 = vadd.f32 0.0, %v1472
    %v1474 = vpop.f32.mrf.mxu0
    %v1475 = vpop.f32.mrf.mxu0
    %v1476 = vpop.f32.mrf.mxu0
    %1477 = vdwg.mxu0
    %v1478 = vadd.f32 %v347, %v828
    %v1479 = vadd.f32 %v348, %v871
    %v1480 = vadd.f32 %v349, %v914
    %v1481 = vadd.f32 %v350, %v957
    %v1482 = vadd.f32 %v351, %v1000
    %v1483 = vadd.f32 %v352, %v1043
    %v1484 = vadd.f32 %v353, %v1086
    %v1485 = vadd.f32 %v354, %v1129
    %v1486 = vadd.f32 %v355, %v1172
    %v1487 = vadd.f32 %v356, %v1215
    %v1488 = vadd.f32 %v357, %v1258
    %v1489 = vadd.f32 %v358, %v1301
    %v1490 = vadd.f32 %v359, %v1344
    %v1491 = vadd.f32 %v360, %v1387
    %v1492 = vadd.f32 %v361, %v1430
    %v1493 = vadd.f32 %v362, %v1473
    %1495 = vrot.lane.b32.xlu0 %v1479, 16
    %v1496 = vpop.permute.xlu0 %1495
    %1499 = vrot.lane.b32.xlu0 %v1480, 32
    %v1500 = vpop.permute.xlu0 %1499
    %1503 = vrot.lane.b32.xlu0 %v1481, 48
    %v1504 = vpop.permute.xlu0 %1503
    %1507 = vrot.lane.b32.xlu0 %v1482, 64
    %v1508 = vpop.permute.xlu0 %1507
    %1511 = vrot.lane.b32.xlu0 %v1483, 80
    %v1512 = vpop.permute.xlu0 %1511
    %1515 = vrot.lane.b32.xlu0 %v1484, 96
    %v1516 = vpop.permute.xlu0 %1515
    %1519 = vrot.lane.b32.xlu0 %v1485, 112
    %v1520 = vpop.permute.xlu0 %1519
    %1523 = vrot.lane.b32.xlu0 %v1487, 16
    %v1524 = vpop.permute.xlu0 %1523
    %1527 = vrot.lane.b32.xlu0 %v1488, 32
    %v1528 = vpop.permute.xlu0 %1527
    %1531 = vrot.lane.b32.xlu0 %v1489, 48
    %v1532 = vpop.permute.xlu0 %1531
    %1535 = vrot.lane.b32.xlu0 %v1490, 64
    %v1536 = vpop.permute.xlu0 %1535
    %1539 = vrot.lane.b32.xlu0 %v1491, 80
    %v1540 = vpop.permute.xlu0 %1539
    %1543 = vrot.lane.b32.xlu0 %v1492, 96
    %v1544 = vpop.permute.xlu0 %1543
    %1547 = vrot.lane.b32.xlu0 %v1493, 112
    %v1548 = vpop.permute.xlu0 %1547
    %v1550 = vsel %vm575, %v1478, %v1496
    %v1551 = vsel %vm483, %v1550, %v1500
    %vm1552 = vcmask 392192
    %v1553 = vsel %vm1552, %v1551, %v1504
    %vm1554 = vcmask 523264
    %v1555 = vsel %vm1554, %v1553, %v1508
    %vm1556 = vcmask 654336
    %v1557 = vsel %vm1556, %v1555, %v1512
    %vm1558 = vcmask 785408
    %v1559 = vsel %vm1558, %v1557, %v1516
    %vm1560 = vcmask 916480
    %v1561 = vsel %vm1560, %v1559, %v1520
    %v1562 = vsel %vm575, %v1486, %v1524
    %v1563 = vsel %vm483, %v1562, %v1528
    %v1564 = vsel %vm1552, %v1563, %v1532
    %v1565 = vsel %vm1554, %v1564, %v1536
    %v1566 = vsel %vm1556, %v1565, %v1540
    %v1567 = vsel %vm1558, %v1566, %v1544
    %v1568 = vsel %vm1560, %v1567, %v1548
    %v1571 = vcombine.low %v1561, %v1568
    %v1573 = vunpack.c.l.s4 1983009808
    %v1574 = vunpack.c.0.s8 %v1573
    %v1575 = vlaneseq
    %v1576 = vshrl.u32 %v1575, 7
    %v1577 = vsub.s32 %v1574, %v1576
    %v1578 = vrot.slane %v1571, %v1577
    %1580 = vst [vmem:[#allocation2] sm:$0xf] %v1578
    // Predicated region
    $region14: #{multi_layer_hebbian_forward.3} parent=1 // pred_check
      _
    $region15: #{multi_layer_hebbian_forward.3} parent=1 // pred_check_branch
      %1582 = sbr.rel (0) target = $region17
    $region16: #{multi_layer_hebbian_forward.3} parent=1 // pred_region
      %s1584 = ssub.s32 64, 64
      %1585 = vsyncadd [#allocation3], %s1584
      %s1587 = sshll.u32 [#allocation2], 4
      %s1588 = int_to_ptr.vmem [resolvable:$true] %s1587
      %1590 = dma.vmem_to_hbm [thread:$0]  %s1588, 64, %s3, [#allocation3]
    $region17: #{multi_layer_hebbian_forward.3} parent=1 // pred_fallthru
      _
    // Predicated region
    $region18: #{multi_layer_hebbian_forward.3} parent=1 // pred_check
      _
    $region19: #{multi_layer_hebbian_forward.3} parent=1 // pred_check_branch
      %1592 = sbr.rel (0) target = $region21
    $region20: #{multi_layer_hebbian_forward.3} parent=1 // pred_region
      _
    $region21: #{multi_layer_hebbian_forward.3} parent=1 // pred_fallthru
      _
    // Predicated region
    $region22: #{multi_layer_hebbian_forward.3} parent=1 // pred_check
      _
    $region23: #{multi_layer_hebbian_forward.3} parent=1 // pred_check_branch
      %1594 = sbr.rel (0) target = $region25
    $region24: #{multi_layer_hebbian_forward.3} parent=1 // pred_region
      %1595 = dma.done [#allocation3], 64
    $region25: #{multi_layer_hebbian_forward.3} parent=1 // pred_fallthru
      _
    // Predicated region
    $region26: #{multi_layer_hebbian_forward.3} parent=1 // pred_check
      _
    $region27: #{multi_layer_hebbian_forward.3} parent=1 // pred_check_branch
      %1597 = sbr.rel (0) target = $region29
    $region28: #{multi_layer_hebbian_forward.3} parent=1 // pred_region
      _
    $region29: #{multi_layer_hebbian_forward.3} parent=1 // pred_fallthru
      _
    %1598 = vsyncpa [#allocation3], 1

</llo_original>
